<compile_context>
chip_gen: v7x
topology: tpu7x:2x2x1
jax: 0.10.0
libtpu: 0.0.40
codegen_flags: <defaults>
</compile_context>

<pallas_src>
import math
import jax
import jax.numpy as jnp
import numpy as np
from jax import lax
from jax.experimental import pallas as pl
from jax.experimental.pallas import tpu as pltpu

B_J0 = 0.1       # initial adaptive baseline (init_hidden fill value)
B_THRESH = 0.5   # B inside mem_update_adp


def _pick_time_chunk(T, b, nhid, nout, budget_bytes=8 << 20):
    """Single full-T chunk if the (double-buffered) resident xw/lsm blocks fit the
    VMEM budget; otherwise the largest divisor of T under the budget-derived cap."""
    per_step = 2 * 4 * b * (nhid + nout)          # double-buffered f32 xw + lsm rows
    cap = max(1, budget_bytes // max(per_step, 1))
    if T <= cap:
        return T
    c = int(min(T, cap))
    while c > 1 and T % c != 0:
        c -= 1
    # Note: a prime T larger than the VMEM cap degrades to c == 1 (per-step grid
    # overhead); pad T on the caller side if that case ever matters.
    return max(c, 1)


def _snn_seq_kernel(
    # inputs
    xw_ref,                                   # (TK, b, nhid)  x*w1x_x + b1x, chunk of T
    h0_ref, h1_ref, h3_ref,                   # initial mem1 / spk1 / mem3
    w1x_h_ref,                                # (nhid, nhid) recurrent part of layer1_x
    w1m_d_ref, w1m_h_ref, b1m_ref,            # layer1_tauM split (dense / recurrent)
    w3x_ref, b3x_ref,                         # layer3_x (nhid, nout)
    w3m_d_ref, w3m_h_ref, b3m_ref,            # layer3_tauM split (dense / recurrent)
    # outputs
    lsm_ref,                                  # (TK, b, nout) per-step log_softmax chunk
    mem1_ref, spk1_ref, mem3_ref,             # resident final state == recurrent carry
):
    c = pl.program_id(0)
    TK = xw_ref.shape[0]

    # Resident output blocks (constant index_map) carry the recurrent state across
    # timestep chunks; initialize them from the provided hidden state once.
    @pl.when(c == 0)
    def _init():
        mem1_ref[...] = h0_ref[...]
        spk1_ref[...] = h1_ref[...]
        mem3_ref[...] = h3_ref[...]

    # Hoist all weight loads out of the timestep loop (tiny, stay in vregs/VMEM).
    w1x_h = w1x_h_ref[...]
    w1m_d = w1m_d_ref[...]
    w1m_h = w1m_h_ref[...]
    b1m = b1m_ref[...]
    w3x = w3x_ref[...]
    b3x = b3x_ref[...]
    w3m_d = w3m_d_ref[...]
    w3m_h = w3m_h_ref[...]
    b3m = b3m_ref[...]

    def step(t, carry):
        mem1, spk1, mem3 = carry

        # Recurrent-only contributions: depend solely on the previous step's carry,
        # so the scheduler can issue them ahead of / under the dependent dots.
        rec1 = jnp.dot(spk1, w1x_h, preferred_element_type=jnp.float32)
        tau1_rec = jnp.dot(mem1, w1m_h, preferred_element_type=jnp.float32)
        tau3_rec = jnp.dot(mem3, w3m_h, preferred_element_type=jnp.float32)

        # dense_x = layer1_x(cat(x, spk1)); the x part (+ bias) is precomputed.
        dense_x = xw_ref[t] + rec1

        # tauM1 = sigmoid(layer1_tauM(cat(dense_x, mem1)))  -- split, no concat.
        tau_m1 = jax.nn.sigmoid(
            jnp.dot(dense_x, w1m_d, preferred_element_type=jnp.float32)
            + tau1_rec + b1m)
        # tauAdp1 of the reference is dead (never used by mem_update_adp) -> omitted.

        # mem_update_adp
        mem_new = mem1 + (dense_x - mem1) * tau_m1
        spike = (mem_new > B_THRESH).astype(jnp.float32)
        mem_new = (1.0 - spike) * mem_new

        # readout neuron
        dense3 = jnp.dot(spike, w3x, preferred_element_type=jnp.float32) + b3x
        tau_m2 = jax.nn.sigmoid(
            jnp.dot(dense3, w3m_d, preferred_element_type=jnp.float32)
            + tau3_rec + b3m)
        mem3_new = mem3 + (dense3 - mem3) * tau_m2

        # Only record mem3; log_softmax is hoisted past the recurrence.
        lsm_ref[t] = mem3_new

        return (mem_new, spike, mem3_new)

    init = (mem1_ref[...], spk1_ref[...], mem3_ref[...])
    unroll = TK if TK <= 32 else 16
    mem1_f, spk1_f, mem3_f = lax.fori_loop(0, TK, step, init, unroll=unroll)

    # Persist recurrent state for the next chunk / final output.
    mem1_ref[...] = mem1_f
    spk1_ref[...] = spk1_f
    mem3_ref[...] = mem3_f

    # Chunk-wide log_softmax: off the serial critical path, one dense block store.
    m3 = lsm_ref[...]                                     # (TK, b, nout)
    z = m3 - jnp.max(m3, axis=-1, keepdims=True)
    lsm_ref[...] = z - jnp.log(jnp.sum(jnp.exp(z), axis=-1, keepdims=True))


def seq_model_forward(x, hidden, params, *, time_chunk=None):
    """x: (batch, din=1, T) float32; hidden: 5-tuple as in init_hidden."""
    b, din, T = x.shape
    assert din == 1, "reference forward does .view(b, 1): din must be 1"
    nhid = params["w1x_h"].shape[0]
    nout = params["w3x"].shape[1]

    h0, h1, h2, h3, _ = hidden

    # Precompute the input projection in the wrapper: lane-dense (T, b, nhid) instead
    # of a (T, b, 1) block; bias b1x is folded in (din == 1 -> broadcast outer product).
    x_seq = jnp.transpose(x, (2, 0, 1)).astype(jnp.float32)         # (T, b, 1)
    xw = x_seq * params["w1x_x"] + params["b1x"]                    # (T, b, nhid)

    if time_chunk is None:
        time_chunk = _pick_time_chunk(T, b, nhid, nout)
    assert T % time_chunk == 0
    n_chunks = T // time_chunk

    in_arrays = [
        xw, h0, h1, h3,
        params["w1x_h"],
        params["w1m_d"], params["w1m_h"], params["b1m"],
        params["w3x"], params["b3x"],
        params["w3m_d"], params["w3m_h"], params["b3m"],
    ]

    def full_spec(a):
        nd = a.ndim
        return pl.BlockSpec(a.shape, lambda c, _nd=nd: (0,) * _nd)

    in_specs = [pl.BlockSpec((time_chunk, b, nhid), lambda c: (c, 0, 0))] + [
        full_spec(a) for a in in_arrays[1:]
    ]

    out_shape = (
        jax.ShapeDtypeStruct((T, b, nout), jnp.float32),  # per-step log_softmax
        jax.ShapeDtypeStruct((b, nhid), jnp.float32),     # final mem_1
        jax.ShapeDtypeStruct((b, nhid), jnp.float32),     # final spk_1
        jax.ShapeDtypeStruct((b, nout), jnp.float32),     # final mem_3
    )
    out_specs = (
        pl.BlockSpec((time_chunk, b, nout), lambda c: (c, 0, 0)),
        pl.BlockSpec((b, nhid), lambda c: (0, 0)),
        pl.BlockSpec((b, nhid), lambda c: (0, 0)),
        pl.BlockSpec((b, nout), lambda c: (0, 0)),
    )

    grid_spec = pltpu.PrefetchScalarGridSpec(
        num_scalar_prefetch=0,
        grid=(n_chunks,),
        in_specs=in_specs,
        out_specs=out_specs,
        scratch_shapes=[],
    )

    # Explicit VMEM budget: double-buffered chunk blocks + weights + state + slack.
    param_bytes = sum(int(np.prod(a.shape)) * 4 for a in in_arrays[1:])
    est = (2 * 4 * time_chunk * b * (nhid + nout)          # xw + lsm chunk blocks (x2)
           + 2 * 4 * b * (2 * nhid + nout)                 # resident state outputs
           + 2 * param_bytes
           + (2 << 20))
    vmem_limit = int(min(max(est, 4 << 20), 32 << 20))

    lsm, fmem1, fspk1, fmem3 = pl.pallas_call(
        _snn_seq_kernel,
        out_shape=out_shape,
        grid_spec=grid_spec,
        compiler_params=pltpu.CompilerParams(
            dimension_semantics=("arbitrary",),            # time recurrence is serial
            vmem_limit_bytes=vmem_limit),
    )(*in_arrays)

    outputs = lsm                                   # (T, b, nout): list-of-T stacked
    # b_1 is never modified by the reference and out == mem_3 -> produced here.
    final_state = (fmem1, fspk1, h2, fmem3, fmem3)
    recon_loss = jnp.zeros((1,), jnp.float32)       # matches torch.zeros(1)
    return outputs, final_state, recon_loss


def init_params(key, ninp, nhid, nout):
    """Deterministic PyTorch-Linear-style init; weights stored as (in, out)."""
    def linear(k, fan_in, fan_out):
        k1, k2 = jax.random.split(k)
        bound = 1.0 / math.sqrt(fan_in)
        w = jax.random.uniform(k1, (fan_in, fan_out), jnp.float32, -bound, bound)
        bias = jax.random.uniform(k2, (1, fan_out), jnp.float32, -bound, bound)
        return w, bias

    keys = jax.random.split(key, 5)
    w1x, b1x = linear(keys[0], ninp + nhid, nhid)
    w1m, b1m = linear(keys[1], 2 * nhid, nhid)
    w1a, b1a = linear(keys[2], 2 * nhid, nhid)   # layer1_tauAdp exists but is dead
    w3x, b3x = linear(keys[3], nhid, nout)
    w3m, b3m = linear(keys[4], 2 * nout, nout)
    return dict(
        w1x_x=w1x[:ninp], w1x_h=w1x[ninp:], b1x=b1x,
        w1m_d=w1m[:nhid], w1m_h=w1m[nhid:], b1m=b1m,
        w1a_d=w1a[:nhid], w1a_h=w1a[nhid:], b1a=b1a,
        w3x=w3x, b3x=b3x,
        w3m_d=w3m[:nout], w3m_h=w3m[nout:], b3m=b3m,
    )


def init_hidden(key, bsz, nhid, nout):
    return (
        jax.random.uniform(key, (bsz, nhid), jnp.float32),   # mem_1 ~ U(0,1)
        jnp.zeros((bsz, nhid), jnp.float32),                 # spk_1
        jnp.full((bsz, nhid), B_J0, jnp.float32),            # b
        jnp.zeros((bsz, nout), jnp.float32),                 # mem_3
        jnp.zeros((bsz, nout), jnp.float32),                 # out
    )


def reference_forward(x, hidden, params):
    """Pure-JAX replica of the PyTorch forward for verification."""
    b, din, T = x.shape
    xs = jnp.transpose(x, (2, 0, 1)).astype(jnp.float32)
    mem1, spk1, bb, mem3, _ = hidden
    w1m = jnp.concatenate([params["w1m_d"], params["w1m_h"]], axis=0)
    w3m = jnp.concatenate([params["w3m_d"], params["w3m_h"]], axis=0)
    outs = []
    for t in range(T):
        xt = xs[t]  # (b, 1); din == 1 so xt @ w1x_x == broadcast multiply
        dense_x = xt * params["w1x_x"] + spk1 @ params["w1x_h"] + params["b1x"]
        tau_m1 = jax.nn.sigmoid(jnp.concatenate([dense_x, mem1], -1) @ w1m + params["b1m"])
        mem_new = mem1 + (dense_x - mem1) * tau_m1
        spike = (mem_new - B_THRESH > 0.0).astype(jnp.float32)
        mem_new = (1.0 - spike) * mem_new
        dense3 = spike @ params["w3x"] + params["b3x"]
        tau_m2 = jax.nn.sigmoid(jnp.concatenate([dense3, mem3], -1) @ w3m + params["b3m"])
        mem3 = mem3 + (dense3 - mem3) * tau_m2
        outs.append(jax.nn.log_softmax(mem3, axis=1))
        mem1, spk1 = mem_new, spike
    return jnp.stack(outs), (mem1, spk1, bb, mem3, mem3)


if __name__ == "__main__":
    ninp, nhid, nout = 1, 32, 16
    batch, T = 2, 8

    root = jax.random.PRNGKey(0)
    k_params, k_hidden, k_x = jax.random.split(root, 3)

    params = init_params(k_params, ninp, nhid, nout)
    hidden = init_hidden(k_hidden, batch, nhid, nout)
    x = jax.random.uniform(k_x, (batch, ninp, T), jnp.float32)   # (b, din, T)

    ref_out, ref_state = reference_forward(x, hidden, params)

    # Default path: single full-T chunk.
    outputs, final_state, recon_loss = jax.block_until_ready(
        seq_model_forward(x, hidden, params))
    np.testing.assert_allclose(np.asarray(outputs), np.asarray(ref_out), rtol=1e-5, atol=1e-5)
    for got, want in zip(final_state, ref_state):
        np.testing.assert_allclose(np.asarray(got), np.asarray(want), rtol=1e-5, atol=1e-5)
    assert recon_loss.shape == (1,)

    # Also exercise the multi-chunk path (resident-state carry across grid steps).
    outputs2, final_state2, _ = jax.block_until_ready(
        seq_model_forward(x, hidden, params, time_chunk=4))
    np.testing.assert_allclose(np.asarray(outputs2), np.asarray(ref_out), rtol=1e-5, atol=1e-5)
    for got, want in zip(final_state2, ref_state):
        np.testing.assert_allclose(np.asarray(got), np.asarray(want), rtol=1e-5, atol=1e-5)

    print("KERNEL_OK")
</pallas_src>

<mosaic_0001>
module attributes {stable_mosaic.version = 11 : i64} {
  func.func @_snn_seq_kernel(%arg0: i32, %arg1: memref<8x2x32xf32, #tpu.memory_space<vmem>>, %arg2: memref<2x32xf32, #tpu.memory_space<vmem>>, %arg3: memref<2x32xf32, #tpu.memory_space<vmem>>, %arg4: memref<2x16xf32, #tpu.memory_space<vmem>>, %arg5: memref<32x32xf32, #tpu.memory_space<vmem>>, %arg6: memref<32x32xf32, #tpu.memory_space<vmem>>, %arg7: memref<32x32xf32, #tpu.memory_space<vmem>>, %arg8: memref<1x32xf32, #tpu.memory_space<vmem>>, %arg9: memref<32x16xf32, #tpu.memory_space<vmem>>, %arg10: memref<1x16xf32, #tpu.memory_space<vmem>>, %arg11: memref<16x16xf32, #tpu.memory_space<vmem>>, %arg12: memref<16x16xf32, #tpu.memory_space<vmem>>, %arg13: memref<1x16xf32, #tpu.memory_space<vmem>>, %arg14: memref<8x2x16xf32, #tpu.memory_space<vmem>>, %arg15: memref<2x32xf32, #tpu.memory_space<vmem>>, %arg16: memref<2x32xf32, #tpu.memory_space<vmem>>, %arg17: memref<2x16xf32, #tpu.memory_space<vmem>>) attributes {dimension_semantics = [#tpu.dimension_semantics<arbitrary>], iteration_bounds = array<i64: 1>, scalar_prefetch = 0 : i64, scratch_operands = 0 : i64, tpu.core_type = #tpu.core_type<tc>, window_params = [{transform_indices = @transform_0, window_bounds = array<i64: 8, 2, 32>}, {pipeline_mode = #tpu.pipeline_mode<synchronous>, transform_indices = @transform_1, window_bounds = array<i64: 2, 32>}, {pipeline_mode = #tpu.pipeline_mode<synchronous>, transform_indices = @transform_2, window_bounds = array<i64: 2, 32>}, {pipeline_mode = #tpu.pipeline_mode<synchronous>, transform_indices = @transform_3, window_bounds = array<i64: 2, 16>}, {pipeline_mode = #tpu.pipeline_mode<synchronous>, transform_indices = @transform_4, window_bounds = array<i64: 32, 32>}, {pipeline_mode = #tpu.pipeline_mode<synchronous>, transform_indices = @transform_5, window_bounds = array<i64: 32, 32>}, {pipeline_mode = #tpu.pipeline_mode<synchronous>, transform_indices = @transform_6, window_bounds = array<i64: 32, 32>}, {pipeline_mode = #tpu.pipeline_mode<synchronous>, transform_indices = @transform_7, window_bounds = array<i64: 1, 32>}, {pipeline_mode = #tpu.pipeline_mode<synchronous>, transform_indices = @transform_8, window_bounds = array<i64: 32, 16>}, {pipeline_mode = #tpu.pipeline_mode<synchronous>, transform_indices = @transform_9, window_bounds = array<i64: 1, 16>}, {pipeline_mode = #tpu.pipeline_mode<synchronous>, transform_indices = @transform_10, window_bounds = array<i64: 16, 16>}, {pipeline_mode = #tpu.pipeline_mode<synchronous>, transform_indices = @transform_11, window_bounds = array<i64: 16, 16>}, {pipeline_mode = #tpu.pipeline_mode<synchronous>, transform_indices = @transform_12, window_bounds = array<i64: 1, 16>}, {transform_indices = @transform_13, window_bounds = array<i64: 8, 2, 16>}, {pipeline_mode = #tpu.pipeline_mode<synchronous>, transform_indices = @transform_14, window_bounds = array<i64: 2, 32>}, {pipeline_mode = #tpu.pipeline_mode<synchronous>, transform_indices = @transform_15, window_bounds = array<i64: 2, 32>}, {pipeline_mode = #tpu.pipeline_mode<synchronous>, transform_indices = @transform_16, window_bounds = array<i64: 2, 16>}]} {
    %c0_i32 = arith.constant 0 : i32
    %0 = arith.cmpi eq, %arg0, %c0_i32 : i32
    %1 = arith.extui %0 : i1 to i32
    %c0_i32_0 = arith.constant 0 : i32
    %2 = arith.cmpi ne, %1, %c0_i32_0 : i32
    scf.if %2 {
      %c0_150 = arith.constant 0 : index
      %c0_151 = arith.constant 0 : index
      %390 = vector.load %arg2[%c0_150, %c0_151] : memref<2x32xf32, #tpu.memory_space<vmem>>, vector<2x32xf32>
      %c0_152 = arith.constant 0 : index
      %c0_153 = arith.constant 0 : index
      %391 = vector.load %arg15[%c0_152, %c0_153] : memref<2x32xf32, #tpu.memory_space<vmem>>, vector<2x32xf32>
      tpu.vector_store %arg15[%c0_152, %c0_153], %390 {strides = array<i32>} : memref<2x32xf32, #tpu.memory_space<vmem>>, vector<2x32xf32>,
      %c0_154 = arith.constant 0 : index
      %c0_155 = arith.constant 0 : index
      %392 = vector.load %arg3[%c0_154, %c0_155] : memref<2x32xf32, #tpu.memory_space<vmem>>, vector<2x32xf32>
      %c0_156 = arith.constant 0 : index
      %c0_157 = arith.constant 0 : index
      %393 = vector.load %arg16[%c0_156, %c0_157] : memref<2x32xf32, #tpu.memory_space<vmem>>, vector<2x32xf32>
      tpu.vector_store %arg16[%c0_156, %c0_157], %392 {strides = array<i32>} : memref<2x32xf32, #tpu.memory_space<vmem>>, vector<2x32xf32>,
      %c0_158 = arith.constant 0 : index
      %c0_159 = arith.constant 0 : index
      %394 = vector.load %arg4[%c0_158, %c0_159] : memref<2x16xf32, #tpu.memory_space<vmem>>, vector<2x16xf32>
      %c0_160 = arith.constant 0 : index
      %c0_161 = arith.constant 0 : index
      %395 = vector.load %arg17[%c0_160, %c0_161] : memref<2x16xf32, #tpu.memory_space<vmem>>, vector<2x16xf32>
      tpu.vector_store %arg17[%c0_160, %c0_161], %394 {strides = array<i32>} : memref<2x16xf32, #tpu.memory_space<vmem>>, vector<2x16xf32>,
    } else {
    }
    %c0 = arith.constant 0 : index
    %c0_1 = arith.constant 0 : index
    %3 = vector.load %arg5[%c0, %c0_1] : memref<32x32xf32, #tpu.memory_space<vmem>>, vector<32x32xf32>
    %c0_2 = arith.constant 0 : index
    %c0_3 = arith.constant 0 : index
    %4 = vector.load %arg6[%c0_2, %c0_3] : memref<32x32xf32, #tpu.memory_space<vmem>>, vector<32x32xf32>
    %c0_4 = arith.constant 0 : index
    %c0_5 = arith.constant 0 : index
    %5 = vector.load %arg7[%c0_4, %c0_5] : memref<32x32xf32, #tpu.memory_space<vmem>>, vector<32x32xf32>
    %c0_6 = arith.constant 0 : index
    %c0_7 = arith.constant 0 : index
    %6 = vector.load %arg8[%c0_6, %c0_7] : memref<1x32xf32, #tpu.memory_space<vmem>>, vector<1x32xf32>
    %c0_8 = arith.constant 0 : index
    %c0_9 = arith.constant 0 : index
    %7 = vector.load %arg9[%c0_8, %c0_9] : memref<32x16xf32, #tpu.memory_space<vmem>>, vector<32x16xf32>
    %c0_10 = arith.constant 0 : index
    %c0_11 = arith.constant 0 : index
    %8 = vector.load %arg10[%c0_10, %c0_11] : memref<1x16xf32, #tpu.memory_space<vmem>>, vector<1x16xf32>
    %c0_12 = arith.constant 0 : index
    %c0_13 = arith.constant 0 : index
    %9 = vector.load %arg11[%c0_12, %c0_13] : memref<16x16xf32, #tpu.memory_space<vmem>>, vector<16x16xf32>
    %c0_14 = arith.constant 0 : index
    %c0_15 = arith.constant 0 : index
    %10 = vector.load %arg12[%c0_14, %c0_15] : memref<16x16xf32, #tpu.memory_space<vmem>>, vector<16x16xf32>
    %c0_16 = arith.constant 0 : index
    %c0_17 = arith.constant 0 : index
    %11 = vector.load %arg13[%c0_16, %c0_17] : memref<1x16xf32, #tpu.memory_space<vmem>>, vector<1x16xf32>
    %c0_18 = arith.constant 0 : index
    %c0_19 = arith.constant 0 : index
    %12 = vector.load %arg15[%c0_18, %c0_19] : memref<2x32xf32, #tpu.memory_space<vmem>>, vector<2x32xf32>
    %c0_20 = arith.constant 0 : index
    %c0_21 = arith.constant 0 : index
    %13 = vector.load %arg16[%c0_20, %c0_21] : memref<2x32xf32, #tpu.memory_space<vmem>>, vector<2x32xf32>
    %c0_22 = arith.constant 0 : index
    %c0_23 = arith.constant 0 : index
    %14 = vector.load %arg17[%c0_22, %c0_23] : memref<2x16xf32, #tpu.memory_space<vmem>>, vector<2x16xf32>
    %c0_i32_24 = arith.constant 0 : i32
    %cst = arith.constant dense<0.000000e+00> : vector<2x32xf32>
    %15 = tpu.matmul %13, %3, %cst {dimension_numbers = #tpu.dot_dimension_numbers<[1], [0], [0], [1], [0, 0, 1, 1], [], []>} : vector<2x32xf32>, vector<32x32xf32>, vector<2x32xf32> -> vector<2x32xf32>
    %cst_25 = arith.constant dense<0.000000e+00> : vector<2x32xf32>
    %16 = tpu.matmul %12, %5, %cst_25 {dimension_numbers = #tpu.dot_dimension_numbers<[1], [0], [0], [1], [0, 0, 1, 1], [], []>} : vector<2x32xf32>, vector<32x32xf32>, vector<2x32xf32> -> vector<2x32xf32>
    %cst_26 = arith.constant dense<0.000000e+00> : vector<2x16xf32>
    %17 = tpu.matmul %14, %10, %cst_26 {dimension_numbers = #tpu.dot_dimension_numbers<[1], [0], [0], [1], [0, 0, 1, 1], [], []>} : vector<2x16xf32>, vector<16x16xf32>, vector<2x16xf32> -> vector<2x16xf32>
    %18 = arith.index_cast %c0_i32_24 : i32 to index
    %c0_27 = arith.constant 0 : index
    %c0_28 = arith.constant 0 : index
    %19 = vector.load %arg1[%18, %c0_27, %c0_28] : memref<8x2x32xf32, #tpu.memory_space<vmem>>, vector<1x2x32xf32>
    %20 = vector.shape_cast %19 : vector<1x2x32xf32> to vector<2x32xf32>
    %21 = arith.addf %20, %15 : vector<2x32xf32>
    %cst_29 = arith.constant dense<0.000000e+00> : vector<2x32xf32>
    %22 = tpu.matmul %21, %4, %cst_29 {dimension_numbers = #tpu.dot_dimension_numbers<[1], [0], [0], [1], [0, 0, 1, 1], [], []>} : vector<2x32xf32>, vector<32x32xf32>, vector<2x32xf32> -> vector<2x32xf32>
    %23 = arith.addf %22, %16 : vector<2x32xf32>
    %24 = vector.broadcast %6 : vector<1x32xf32> to vector<2x32xf32>
    %25 = arith.addf %23, %24 : vector<2x32xf32>
    %26 = arith.negf %25 : vector<2x32xf32>
    %27 = math.exp %26 : vector<2x32xf32>
    %cst_30 = arith.constant 1.000000e+00 : f32
    %28 = vector.broadcast %cst_30 : f32 to vector<2x32xf32>
    %29 = arith.addf %28, %27 : vector<2x32xf32>
    %30 = arith.divf %28, %29 : vector<2x32xf32>
    %31 = arith.subf %21, %12 : vector<2x32xf32>
    %32 = arith.mulf %31, %30 : vector<2x32xf32>
    %33 = arith.addf %12, %32 : vector<2x32xf32>
    %cst_31 = arith.constant 5.000000e-01 : f32
    %34 = vector.broadcast %cst_31 : f32 to vector<2x32xf32>
    %35 = arith.cmpf ogt, %33, %34 : vector<2x32xf32>
    %36 = arith.extui %35 : vector<2x32xi1> to vector<2x32xi32>
    %37 = arith.sitofp %36 : vector<2x32xi32> to vector<2x32xf32>
    %cst_32 = arith.constant 1.000000e+00 : f32
    %38 = vector.broadcast %cst_32 : f32 to vector<2x32xf32>
    %39 = arith.subf %38, %37 : vector<2x32xf32>
    %40 = arith.mulf %39, %33 : vector<2x32xf32>
    %cst_33 = arith.constant dense<0.000000e+00> : vector<2x16xf32>
    %41 = tpu.matmul %37, %7, %cst_33 {dimension_numbers = #tpu.dot_dimension_numbers<[1], [0], [0], [1], [0, 0, 1, 1], [], []>} : vector<2x32xf32>, vector<32x16xf32>, vector<2x16xf32> -> vector<2x16xf32>
    %42 = vector.broadcast %8 : vector<1x16xf32> to vector<2x16xf32>
    %43 = arith.addf %41, %42 : vector<2x16xf32>
    %cst_34 = arith.constant dense<0.000000e+00> : vector<2x16xf32>
    %44 = tpu.matmul %43, %9, %cst_34 {dimension_numbers = #tpu.dot_dimension_numbers<[1], [0], [0], [1], [0, 0, 1, 1], [], []>} : vector<2x16xf32>, vector<16x16xf32>, vector<2x16xf32> -> vector<2x16xf32>
    %45 = arith.addf %44, %17 : vector<2x16xf32>
    %46 = vector.broadcast %11 : vector<1x16xf32> to vector<2x16xf32>
    %47 = arith.addf %45, %46 : vector<2x16xf32>
    %48 = arith.negf %47 : vector<2x16xf32>
    %49 = math.exp %48 : vector<2x16xf32>
    %cst_35 = arith.constant 1.000000e+00 : f32
    %50 = vector.broadcast %cst_35 : f32 to vector<2x16xf32>
    %51 = arith.addf %50, %49 : vector<2x16xf32>
    %52 = arith.divf %50, %51 : vector<2x16xf32>
    %53 = arith.subf %43, %14 : vector<2x16xf32>
    %54 = arith.mulf %53, %52 : vector<2x16xf32>
    %55 = arith.addf %14, %54 : vector<2x16xf32>
    %56 = arith.index_cast %c0_i32_24 : i32 to index
    %c0_36 = arith.constant 0 : index
    %c0_37 = arith.constant 0 : index
    %57 = vector.load %arg14[%56, %c0_36, %c0_37] : memref<8x2x16xf32, #tpu.memory_space<vmem>>, vector<1x2x16xf32>
    %58 = vector.shape_cast %57 : vector<1x2x16xf32> to vector<2x16xf32>
    %59 = vector.shape_cast %55 : vector<2x16xf32> to vector<1x2x16xf32>
    tpu.vector_store %arg14[%56, %c0_36, %c0_37], %59 {strides = array<i32>} : memref<8x2x16xf32, #tpu.memory_space<vmem>>, vector<1x2x16xf32>,
    %c1_i32 = arith.constant 1 : i32
    %cst_38 = arith.constant dense<0.000000e+00> : vector<2x32xf32>
    %60 = tpu.matmul %37, %3, %cst_38 {dimension_numbers = #tpu.dot_dimension_numbers<[1], [0], [0], [1], [0, 0, 1, 1], [], []>} : vector<2x32xf32>, vector<32x32xf32>, vector<2x32xf32> -> vector<2x32xf32>
    %cst_39 = arith.constant dense<0.000000e+00> : vector<2x32xf32>
    %61 = tpu.matmul %40, %5, %cst_39 {dimension_numbers = #tpu.dot_dimension_numbers<[1], [0], [0], [1], [0, 0, 1, 1], [], []>} : vector<2x32xf32>, vector<32x32xf32>, vector<2x32xf32> -> vector<2x32xf32>
    %cst_40 = arith.constant dense<0.000000e+00> : vector<2x16xf32>
    %62 = tpu.matmul %55, %10, %cst_40 {dimension_numbers = #tpu.dot_dimension_numbers<[1], [0], [0], [1], [0, 0, 1, 1], [], []>} : vector<2x16xf32>, vector<16x16xf32>, vector<2x16xf32> -> vector<2x16xf32>
    %63 = arith.index_cast %c1_i32 : i32 to index
    %c0_41 = arith.constant 0 : index
    %c0_42 = arith.constant 0 : index
    %64 = vector.load %arg1[%63, %c0_41, %c0_42] : memref<8x2x32xf32, #tpu.memory_space<vmem>>, vector<1x2x32xf32>
    %65 = vector.shape_cast %64 : vector<1x2x32xf32> to vector<2x32xf32>
    %66 = arith.addf %65, %60 : vector<2x32xf32>
    %cst_43 = arith.constant dense<0.000000e+00> : vector<2x32xf32>
    %67 = tpu.matmul %66, %4, %cst_43 {dimension_numbers = #tpu.dot_dimension_numbers<[1], [0], [0], [1], [0, 0, 1, 1], [], []>} : vector<2x32xf32>, vector<32x32xf32>, vector<2x32xf32> -> vector<2x32xf32>
    %68 = arith.addf %67, %61 : vector<2x32xf32>
    %69 = vector.broadcast %6 : vector<1x32xf32> to vector<2x32xf32>
    %70 = arith.addf %68, %69 : vector<2x32xf32>
    %71 = arith.negf %70 : vector<2x32xf32>
    %72 = math.exp %71 : vector<2x32xf32>
    %cst_44 = arith.constant 1.000000e+00 : f32
    %73 = vector.broadcast %cst_44 : f32 to vector<2x32xf32>
    %74 = arith.addf %73, %72 : vector<2x32xf32>
    %75 = arith.divf %73, %74 : vector<2x32xf32>
    %76 = arith.subf %66, %40 : vector<2x32xf32>
    %77 = arith.mulf %76, %75 : vector<2x32xf32>
    %78 = arith.addf %40, %77 : vector<2x32xf32>
    %cst_45 = arith.constant 5.000000e-01 : f32
    %79 = vector.broadcast %cst_45 : f32 to vector<2x32xf32>
    %80 = arith.cmpf ogt, %78, %79 : vector<2x32xf32>
    %81 = arith.extui %80 : vector<2x32xi1> to vector<2x32xi32>
    %82 = arith.sitofp %81 : vector<2x32xi32> to vector<2x32xf32>
    %cst_46 = arith.constant 1.000000e+00 : f32
    %83 = vector.broadcast %cst_46 : f32 to vector<2x32xf32>
    %84 = arith.subf %83, %82 : vector<2x32xf32>
    %85 = arith.mulf %84, %78 : vector<2x32xf32>
    %cst_47 = arith.constant dense<0.000000e+00> : vector<2x16xf32>
    %86 = tpu.matmul %82, %7, %cst_47 {dimension_numbers = #tpu.dot_dimension_numbers<[1], [0], [0], [1], [0, 0, 1, 1], [], []>} : vector<2x32xf32>, vector<32x16xf32>, vector<2x16xf32> -> vector<2x16xf32>
    %87 = vector.broadcast %8 : vector<1x16xf32> to vector<2x16xf32>
    %88 = arith.addf %86, %87 : vector<2x16xf32>
    %cst_48 = arith.constant dense<0.000000e+00> : vector<2x16xf32>
    %89 = tpu.matmul %88, %9, %cst_48 {dimension_numbers = #tpu.dot_dimension_numbers<[1], [0], [0], [1], [0, 0, 1, 1], [], []>} : vector<2x16xf32>, vector<16x16xf32>, vector<2x16xf32> -> vector<2x16xf32>
    %90 = arith.addf %89, %62 : vector<2x16xf32>
    %91 = vector.broadcast %11 : vector<1x16xf32> to vector<2x16xf32>
    %92 = arith.addf %90, %91 : vector<2x16xf32>
    %93 = arith.negf %92 : vector<2x16xf32>
    %94 = math.exp %93 : vector<2x16xf32>
    %cst_49 = arith.constant 1.000000e+00 : f32
    %95 = vector.broadcast %cst_49 : f32 to vector<2x16xf32>
    %96 = arith.addf %95, %94 : vector<2x16xf32>
    %97 = arith.divf %95, %96 : vector<2x16xf32>
    %98 = arith.subf %88, %55 : vector<2x16xf32>
    %99 = arith.mulf %98, %97 : vector<2x16xf32>
    %100 = arith.addf %55, %99 : vector<2x16xf32>
    %101 = arith.index_cast %c1_i32 : i32 to index
    %c0_50 = arith.constant 0 : index
    %c0_51 = arith.constant 0 : index
    %102 = vector.load %arg14[%101, %c0_50, %c0_51] : memref<8x2x16xf32, #tpu.memory_space<vmem>>, vector<1x2x16xf32>
    %103 = vector.shape_cast %102 : vector<1x2x16xf32> to vector<2x16xf32>
    %104 = vector.shape_cast %100 : vector<2x16xf32> to vector<1x2x16xf32>
    tpu.vector_store %arg14[%101, %c0_50, %c0_51], %104 {strides = array<i32>} : memref<8x2x16xf32, #tpu.memory_space<vmem>>, vector<1x2x16xf32>,
    %c2_i32 = arith.constant 2 : i32
    %cst_52 = arith.constant dense<0.000000e+00> : vector<2x32xf32>
    %105 = tpu.matmul %82, %3, %cst_52 {dimension_numbers = #tpu.dot_dimension_numbers<[1], [0], [0], [1], [0, 0, 1, 1], [], []>} : vector<2x32xf32>, vector<32x32xf32>, vector<2x32xf32> -> vector<2x32xf32>
    %cst_53 = arith.constant dense<0.000000e+00> : vector<2x32xf32>
    %106 = tpu.matmul %85, %5, %cst_53 {dimension_numbers = #tpu.dot_dimension_numbers<[1], [0], [0], [1], [0, 0, 1, 1], [], []>} : vector<2x32xf32>, vector<32x32xf32>, vector<2x32xf32> -> vector<2x32xf32>
    %cst_54 = arith.constant dense<0.000000e+00> : vector<2x16xf32>
    %107 = tpu.matmul %100, %10, %cst_54 {dimension_numbers = #tpu.dot_dimension_numbers<[1], [0], [0], [1], [0, 0, 1, 1], [], []>} : vector<2x16xf32>, vector<16x16xf32>, vector<2x16xf32> -> vector<2x16xf32>
    %108 = arith.index_cast %c2_i32 : i32 to index
    %c0_55 = arith.constant 0 : index
    %c0_56 = arith.constant 0 : index
    %109 = vector.load %arg1[%108, %c0_55, %c0_56] : memref<8x2x32xf32, #tpu.memory_space<vmem>>, vector<1x2x32xf32>
    %110 = vector.shape_cast %109 : vector<1x2x32xf32> to vector<2x32xf32>
    %111 = arith.addf %110, %105 : vector<2x32xf32>
    %cst_57 = arith.constant dense<0.000000e+00> : vector<2x32xf32>
    %112 = tpu.matmul %111, %4, %cst_57 {dimension_numbers = #tpu.dot_dimension_numbers<[1], [0], [0], [1], [0, 0, 1, 1], [], []>} : vector<2x32xf32>, vector<32x32xf32>, vector<2x32xf32> -> vector<2x32xf32>
    %113 = arith.addf %112, %106 : vector<2x32xf32>
    %114 = vector.broadcast %6 : vector<1x32xf32> to vector<2x32xf32>
    %115 = arith.addf %113, %114 : vector<2x32xf32>
    %116 = arith.negf %115 : vector<2x32xf32>
    %117 = math.exp %116 : vector<2x32xf32>
    %cst_58 = arith.constant 1.000000e+00 : f32
    %118 = vector.broadcast %cst_58 : f32 to vector<2x32xf32>
    %119 = arith.addf %118, %117 : vector<2x32xf32>
    %120 = arith.divf %118, %119 : vector<2x32xf32>
    %121 = arith.subf %111, %85 : vector<2x32xf32>
    %122 = arith.mulf %121, %120 : vector<2x32xf32>
    %123 = arith.addf %85, %122 : vector<2x32xf32>
    %cst_59 = arith.constant 5.000000e-01 : f32
    %124 = vector.broadcast %cst_59 : f32 to vector<2x32xf32>
    %125 = arith.cmpf ogt, %123, %124 : vector<2x32xf32>
    %126 = arith.extui %125 : vector<2x32xi1> to vector<2x32xi32>
    %127 = arith.sitofp %126 : vector<2x32xi32> to vector<2x32xf32>
    %cst_60 = arith.constant 1.000000e+00 : f32
    %128 = vector.broadcast %cst_60 : f32 to vector<2x32xf32>
    %129 = arith.subf %128, %127 : vector<2x32xf32>
    %130 = arith.mulf %129, %123 : vector<2x32xf32>
    %cst_61 = arith.constant dense<0.000000e+00> : vector<2x16xf32>
    %131 = tpu.matmul %127, %7, %cst_61 {dimension_numbers = #tpu.dot_dimension_numbers<[1], [0], [0], [1], [0, 0, 1, 1], [], []>} : vector<2x32xf32>, vector<32x16xf32>, vector<2x16xf32> -> vector<2x16xf32>
    %132 = vector.broadcast %8 : vector<1x16xf32> to vector<2x16xf32>
    %133 = arith.addf %131, %132 : vector<2x16xf32>
    %cst_62 = arith.constant dense<0.000000e+00> : vector<2x16xf32>
    %134 = tpu.matmul %133, %9, %cst_62 {dimension_numbers = #tpu.dot_dimension_numbers<[1], [0], [0], [1], [0, 0, 1, 1], [], []>} : vector<2x16xf32>, vector<16x16xf32>, vector<2x16xf32> -> vector<2x16xf32>
    %135 = arith.addf %134, %107 : vector<2x16xf32>
    %136 = vector.broadcast %11 : vector<1x16xf32> to vector<2x16xf32>
    %137 = arith.addf %135, %136 : vector<2x16xf32>
    %138 = arith.negf %137 : vector<2x16xf32>
    %139 = math.exp %138 : vector<2x16xf32>
    %cst_63 = arith.constant 1.000000e+00 : f32
    %140 = vector.broadcast %cst_63 : f32 to vector<2x16xf32>
    %141 = arith.addf %140, %139 : vector<2x16xf32>
    %142 = arith.divf %140, %141 : vector<2x16xf32>
    %143 = arith.subf %133, %100 : vector<2x16xf32>
    %144 = arith.mulf %143, %142 : vector<2x16xf32>
    %145 = arith.addf %100, %144 : vector<2x16xf32>
    %146 = arith.index_cast %c2_i32 : i32 to index
    %c0_64 = arith.constant 0 : index
    %c0_65 = arith.constant 0 : index
    %147 = vector.load %arg14[%146, %c0_64, %c0_65] : memref<8x2x16xf32, #tpu.memory_space<vmem>>, vector<1x2x16xf32>
    %148 = vector.shape_cast %147 : vector<1x2x16xf32> to vector<2x16xf32>
    %149 = vector.shape_cast %145 : vector<2x16xf32> to vector<1x2x16xf32>
    tpu.vector_store %arg14[%146, %c0_64, %c0_65], %149 {strides = array<i32>} : memref<8x2x16xf32, #tpu.memory_space<vmem>>, vector<1x2x16xf32>,
    %c3_i32 = arith.constant 3 : i32
    %cst_66 = arith.constant dense<0.000000e+00> : vector<2x32xf32>
    %150 = tpu.matmul %127, %3, %cst_66 {dimension_numbers = #tpu.dot_dimension_numbers<[1], [0], [0], [1], [0, 0, 1, 1], [], []>} : vector<2x32xf32>, vector<32x32xf32>, vector<2x32xf32> -> vector<2x32xf32>
    %cst_67 = arith.constant dense<0.000000e+00> : vector<2x32xf32>
    %151 = tpu.matmul %130, %5, %cst_67 {dimension_numbers = #tpu.dot_dimension_numbers<[1], [0], [0], [1], [0, 0, 1, 1], [], []>} : vector<2x32xf32>, vector<32x32xf32>, vector<2x32xf32> -> vector<2x32xf32>
    %cst_68 = arith.constant dense<0.000000e+00> : vector<2x16xf32>
    %152 = tpu.matmul %145, %10, %cst_68 {dimension_numbers = #tpu.dot_dimension_numbers<[1], [0], [0], [1], [0, 0, 1, 1], [], []>} : vector<2x16xf32>, vector<16x16xf32>, vector<2x16xf32> -> vector<2x16xf32>
    %153 = arith.index_cast %c3_i32 : i32 to index
    %c0_69 = arith.constant 0 : index
    %c0_70 = arith.constant 0 : index
    %154 = vector.load %arg1[%153, %c0_69, %c0_70] : memref<8x2x32xf32, #tpu.memory_space<vmem>>, vector<1x2x32xf32>
    %155 = vector.shape_cast %154 : vector<1x2x32xf32> to vector<2x32xf32>
    %156 = arith.addf %155, %150 : vector<2x32xf32>
    %cst_71 = arith.constant dense<0.000000e+00> : vector<2x32xf32>
    %157 = tpu.matmul %156, %4, %cst_71 {dimension_numbers = #tpu.dot_dimension_numbers<[1], [0], [0], [1], [0, 0, 1, 1], [], []>} : vector<2x32xf32>, vector<32x32xf32>, vector<2x32xf32> -> vector<2x32xf32>
    %158 = arith.addf %157, %151 : vector<2x32xf32>
    %159 = vector.broadcast %6 : vector<1x32xf32> to vector<2x32xf32>
    %160 = arith.addf %158, %159 : vector<2x32xf32>
    %161 = arith.negf %160 : vector<2x32xf32>
    %162 = math.exp %161 : vector<2x32xf32>
    %cst_72 = arith.constant 1.000000e+00 : f32
    %163 = vector.broadcast %cst_72 : f32 to vector<2x32xf32>
    %164 = arith.addf %163, %162 : vector<2x32xf32>
    %165 = arith.divf %163, %164 : vector<2x32xf32>
    %166 = arith.subf %156, %130 : vector<2x32xf32>
    %167 = arith.mulf %166, %165 : vector<2x32xf32>
    %168 = arith.addf %130, %167 : vector<2x32xf32>
    %cst_73 = arith.constant 5.000000e-01 : f32
    %169 = vector.broadcast %cst_73 : f32 to vector<2x32xf32>
    %170 = arith.cmpf ogt, %168, %169 : vector<2x32xf32>
    %171 = arith.extui %170 : vector<2x32xi1> to vector<2x32xi32>
    %172 = arith.sitofp %171 : vector<2x32xi32> to vector<2x32xf32>
    %cst_74 = arith.constant 1.000000e+00 : f32
    %173 = vector.broadcast %cst_74 : f32 to vector<2x32xf32>
    %174 = arith.subf %173, %172 : vector<2x32xf32>
    %175 = arith.mulf %174, %168 : vector<2x32xf32>
    %cst_75 = arith.constant dense<0.000000e+00> : vector<2x16xf32>
    %176 = tpu.matmul %172, %7, %cst_75 {dimension_numbers = #tpu.dot_dimension_numbers<[1], [0], [0], [1], [0, 0, 1, 1], [], []>} : vector<2x32xf32>, vector<32x16xf32>, vector<2x16xf32> -> vector<2x16xf32>
    %177 = vector.broadcast %8 : vector<1x16xf32> to vector<2x16xf32>
    %178 = arith.addf %176, %177 : vector<2x16xf32>
    %cst_76 = arith.constant dense<0.000000e+00> : vector<2x16xf32>
    %179 = tpu.matmul %178, %9, %cst_76 {dimension_numbers = #tpu.dot_dimension_numbers<[1], [0], [0], [1], [0, 0, 1, 1], [], []>} : vector<2x16xf32>, vector<16x16xf32>, vector<2x16xf32> -> vector<2x16xf32>
    %180 = arith.addf %179, %152 : vector<2x16xf32>
    %181 = vector.broadcast %11 : vector<1x16xf32> to vector<2x16xf32>
    %182 = arith.addf %180, %181 : vector<2x16xf32>
    %183 = arith.negf %182 : vector<2x16xf32>
    %184 = math.exp %183 : vector<2x16xf32>
    %cst_77 = arith.constant 1.000000e+00 : f32
    %185 = vector.broadcast %cst_77 : f32 to vector<2x16xf32>
    %186 = arith.addf %185, %184 : vector<2x16xf32>
    %187 = arith.divf %185, %186 : vector<2x16xf32>
    %188 = arith.subf %178, %145 : vector<2x16xf32>
    %189 = arith.mulf %188, %187 : vector<2x16xf32>
    %190 = arith.addf %145, %189 : vector<2x16xf32>
    %191 = arith.index_cast %c3_i32 : i32 to index
    %c0_78 = arith.constant 0 : index
    %c0_79 = arith.constant 0 : index
    %192 = vector.load %arg14[%191, %c0_78, %c0_79] : memref<8x2x16xf32, #tpu.memory_space<vmem>>, vector<1x2x16xf32>
    %193 = vector.shape_cast %192 : vector<1x2x16xf32> to vector<2x16xf32>
    %194 = vector.shape_cast %190 : vector<2x16xf32> to vector<1x2x16xf32>
    tpu.vector_store %arg14[%191, %c0_78, %c0_79], %194 {strides = array<i32>} : memref<8x2x16xf32, #tpu.memory_space<vmem>>, vector<1x2x16xf32>,
    %c4_i32 = arith.constant 4 : i32
    %cst_80 = arith.constant dense<0.000000e+00> : vector<2x32xf32>
    %195 = tpu.matmul %172, %3, %cst_80 {dimension_numbers = #tpu.dot_dimension_numbers<[1], [0], [0], [1], [0, 0, 1, 1], [], []>} : vector<2x32xf32>, vector<32x32xf32>, vector<2x32xf32> -> vector<2x32xf32>
    %cst_81 = arith.constant dense<0.000000e+00> : vector<2x32xf32>
    %196 = tpu.matmul %175, %5, %cst_81 {dimension_numbers = #tpu.dot_dimension_numbers<[1], [0], [0], [1], [0, 0, 1, 1], [], []>} : vector<2x32xf32>, vector<32x32xf32>, vector<2x32xf32> -> vector<2x32xf32>
    %cst_82 = arith.constant dense<0.000000e+00> : vector<2x16xf32>
    %197 = tpu.matmul %190, %10, %cst_82 {dimension_numbers = #tpu.dot_dimension_numbers<[1], [0], [0], [1], [0, 0, 1, 1], [], []>} : vector<2x16xf32>, vector<16x16xf32>, vector<2x16xf32> -> vector<2x16xf32>
    %198 = arith.index_cast %c4_i32 : i32 to index
    %c0_83 = arith.constant 0 : index
    %c0_84 = arith.constant 0 : index
    %199 = vector.load %arg1[%198, %c0_83, %c0_84] : memref<8x2x32xf32, #tpu.memory_space<vmem>>, vector<1x2x32xf32>
    %200 = vector.shape_cast %199 : vector<1x2x32xf32> to vector<2x32xf32>
    %201 = arith.addf %200, %195 : vector<2x32xf32>
    %cst_85 = arith.constant dense<0.000000e+00> : vector<2x32xf32>
    %202 = tpu.matmul %201, %4, %cst_85 {dimension_numbers = #tpu.dot_dimension_numbers<[1], [0], [0], [1], [0, 0, 1, 1], [], []>} : vector<2x32xf32>, vector<32x32xf32>, vector<2x32xf32> -> vector<2x32xf32>
    %203 = arith.addf %202, %196 : vector<2x32xf32>
    %204 = vector.broadcast %6 : vector<1x32xf32> to vector<2x32xf32>
    %205 = arith.addf %203, %204 : vector<2x32xf32>
    %206 = arith.negf %205 : vector<2x32xf32>
    %207 = math.exp %206 : vector<2x32xf32>
    %cst_86 = arith.constant 1.000000e+00 : f32
    %208 = vector.broadcast %cst_86 : f32 to vector<2x32xf32>
    %209 = arith.addf %208, %207 : vector<2x32xf32>
    %210 = arith.divf %208, %209 : vector<2x32xf32>
    %211 = arith.subf %201, %175 : vector<2x32xf32>
    %212 = arith.mulf %211, %210 : vector<2x32xf32>
    %213 = arith.addf %175, %212 : vector<2x32xf32>
    %cst_87 = arith.constant 5.000000e-01 : f32
    %214 = vector.broadcast %cst_87 : f32 to vector<2x32xf32>
    %215 = arith.cmpf ogt, %213, %214 : vector<2x32xf32>
    %216 = arith.extui %215 : vector<2x32xi1> to vector<2x32xi32>
    %217 = arith.sitofp %216 : vector<2x32xi32> to vector<2x32xf32>
    %cst_88 = arith.constant 1.000000e+00 : f32
    %218 = vector.broadcast %cst_88 : f32 to vector<2x32xf32>
    %219 = arith.subf %218, %217 : vector<2x32xf32>
    %220 = arith.mulf %219, %213 : vector<2x32xf32>
    %cst_89 = arith.constant dense<0.000000e+00> : vector<2x16xf32>
    %221 = tpu.matmul %217, %7, %cst_89 {dimension_numbers = #tpu.dot_dimension_numbers<[1], [0], [0], [1], [0, 0, 1, 1], [], []>} : vector<2x32xf32>, vector<32x16xf32>, vector<2x16xf32> -> vector<2x16xf32>
    %222 = vector.broadcast %8 : vector<1x16xf32> to vector<2x16xf32>
    %223 = arith.addf %221, %222 : vector<2x16xf32>
    %cst_90 = arith.constant dense<0.000000e+00> : vector<2x16xf32>
    %224 = tpu.matmul %223, %9, %cst_90 {dimension_numbers = #tpu.dot_dimension_numbers<[1], [0], [0], [1], [0, 0, 1, 1], [], []>} : vector<2x16xf32>, vector<16x16xf32>, vector<2x16xf32> -> vector<2x16xf32>
    %225 = arith.addf %224, %197 : vector<2x16xf32>
    %226 = vector.broadcast %11 : vector<1x16xf32> to vector<2x16xf32>
    %227 = arith.addf %225, %226 : vector<2x16xf32>
    %228 = arith.negf %227 : vector<2x16xf32>
    %229 = math.exp %228 : vector<2x16xf32>
    %cst_91 = arith.constant 1.000000e+00 : f32
    %230 = vector.broadcast %cst_91 : f32 to vector<2x16xf32>
    %231 = arith.addf %230, %229 : vector<2x16xf32>
    %232 = arith.divf %230, %231 : vector<2x16xf32>
    %233 = arith.subf %223, %190 : vector<2x16xf32>
    %234 = arith.mulf %233, %232 : vector<2x16xf32>
    %235 = arith.addf %190, %234 : vector<2x16xf32>
    %236 = arith.index_cast %c4_i32 : i32 to index
    %c0_92 = arith.constant 0 : index
    %c0_93 = arith.constant 0 : index
    %237 = vector.load %arg14[%236, %c0_92, %c0_93] : memref<8x2x16xf32, #tpu.memory_space<vmem>>, vector<1x2x16xf32>
    %238 = vector.shape_cast %237 : vector<1x2x16xf32> to vector<2x16xf32>
    %239 = vector.shape_cast %235 : vector<2x16xf32> to vector<1x2x16xf32>
    tpu.vector_store %arg14[%236, %c0_92, %c0_93], %239 {strides = array<i32>} : memref<8x2x16xf32, #tpu.memory_space<vmem>>, vector<1x2x16xf32>,
    %c5_i32 = arith.constant 5 : i32
    %cst_94 = arith.constant dense<0.000000e+00> : vector<2x32xf32>
    %240 = tpu.matmul %217, %3, %cst_94 {dimension_numbers = #tpu.dot_dimension_numbers<[1], [0], [0], [1], [0, 0, 1, 1], [], []>} : vector<2x32xf32>, vector<32x32xf32>, vector<2x32xf32> -> vector<2x32xf32>
    %cst_95 = arith.constant dense<0.000000e+00> : vector<2x32xf32>
    %241 = tpu.matmul %220, %5, %cst_95 {dimension_numbers = #tpu.dot_dimension_numbers<[1], [0], [0], [1], [0, 0, 1, 1], [], []>} : vector<2x32xf32>, vector<32x32xf32>, vector<2x32xf32> -> vector<2x32xf32>
    %cst_96 = arith.constant dense<0.000000e+00> : vector<2x16xf32>
    %242 = tpu.matmul %235, %10, %cst_96 {dimension_numbers = #tpu.dot_dimension_numbers<[1], [0], [0], [1], [0, 0, 1, 1], [], []>} : vector<2x16xf32>, vector<16x16xf32>, vector<2x16xf32> -> vector<2x16xf32>
    %243 = arith.index_cast %c5_i32 : i32 to index
    %c0_97 = arith.constant 0 : index
    %c0_98 = arith.constant 0 : index
    %244 = vector.load %arg1[%243, %c0_97, %c0_98] : memref<8x2x32xf32, #tpu.memory_space<vmem>>, vector<1x2x32xf32>
    %245 = vector.shape_cast %244 : vector<1x2x32xf32> to vector<2x32xf32>
    %246 = arith.addf %245, %240 : vector<2x32xf32>
    %cst_99 = arith.constant dense<0.000000e+00> : vector<2x32xf32>
    %247 = tpu.matmul %246, %4, %cst_99 {dimension_numbers = #tpu.dot_dimension_numbers<[1], [0], [0], [1], [0, 0, 1, 1], [], []>} : vector<2x32xf32>, vector<32x32xf32>, vector<2x32xf32> -> vector<2x32xf32>
    %248 = arith.addf %247, %241 : vector<2x32xf32>
    %249 = vector.broadcast %6 : vector<1x32xf32> to vector<2x32xf32>
    %250 = arith.addf %248, %249 : vector<2x32xf32>
    %251 = arith.negf %250 : vector<2x32xf32>
    %252 = math.exp %251 : vector<2x32xf32>
    %cst_100 = arith.constant 1.000000e+00 : f32
    %253 = vector.broadcast %cst_100 : f32 to vector<2x32xf32>
    %254 = arith.addf %253, %252 : vector<2x32xf32>
    %255 = arith.divf %253, %254 : vector<2x32xf32>
    %256 = arith.subf %246, %220 : vector<2x32xf32>
    %257 = arith.mulf %256, %255 : vector<2x32xf32>
    %258 = arith.addf %220, %257 : vector<2x32xf32>
    %cst_101 = arith.constant 5.000000e-01 : f32
    %259 = vector.broadcast %cst_101 : f32 to vector<2x32xf32>
    %260 = arith.cmpf ogt, %258, %259 : vector<2x32xf32>
    %261 = arith.extui %260 : vector<2x32xi1> to vector<2x32xi32>
    %262 = arith.sitofp %261 : vector<2x32xi32> to vector<2x32xf32>
    %cst_102 = arith.constant 1.000000e+00 : f32
    %263 = vector.broadcast %cst_102 : f32 to vector<2x32xf32>
    %264 = arith.subf %263, %262 : vector<2x32xf32>
    %265 = arith.mulf %264, %258 : vector<2x32xf32>
    %cst_103 = arith.constant dense<0.000000e+00> : vector<2x16xf32>
    %266 = tpu.matmul %262, %7, %cst_103 {dimension_numbers = #tpu.dot_dimension_numbers<[1], [0], [0], [1], [0, 0, 1, 1], [], []>} : vector<2x32xf32>, vector<32x16xf32>, vector<2x16xf32> -> vector<2x16xf32>
    %267 = vector.broadcast %8 : vector<1x16xf32> to vector<2x16xf32>
    %268 = arith.addf %266, %267 : vector<2x16xf32>
    %cst_104 = arith.constant dense<0.000000e+00> : vector<2x16xf32>
    %269 = tpu.matmul %268, %9, %cst_104 {dimension_numbers = #tpu.dot_dimension_numbers<[1], [0], [0], [1], [0, 0, 1, 1], [], []>} : vector<2x16xf32>, vector<16x16xf32>, vector<2x16xf32> -> vector<2x16xf32>
    %270 = arith.addf %269, %242 : vector<2x16xf32>
    %271 = vector.broadcast %11 : vector<1x16xf32> to vector<2x16xf32>
    %272 = arith.addf %270, %271 : vector<2x16xf32>
    %273 = arith.negf %272 : vector<2x16xf32>
    %274 = math.exp %273 : vector<2x16xf32>
    %cst_105 = arith.constant 1.000000e+00 : f32
    %275 = vector.broadcast %cst_105 : f32 to vector<2x16xf32>
    %276 = arith.addf %275, %274 : vector<2x16xf32>
    %277 = arith.divf %275, %276 : vector<2x16xf32>
    %278 = arith.subf %268, %235 : vector<2x16xf32>
    %279 = arith.mulf %278, %277 : vector<2x16xf32>
    %280 = arith.addf %235, %279 : vector<2x16xf32>
    %281 = arith.index_cast %c5_i32 : i32 to index
    %c0_106 = arith.constant 0 : index
    %c0_107 = arith.constant 0 : index
    %282 = vector.load %arg14[%281, %c0_106, %c0_107] : memref<8x2x16xf32, #tpu.memory_space<vmem>>, vector<1x2x16xf32>
    %283 = vector.shape_cast %282 : vector<1x2x16xf32> to vector<2x16xf32>
    %284 = vector.shape_cast %280 : vector<2x16xf32> to vector<1x2x16xf32>
    tpu.vector_store %arg14[%281, %c0_106, %c0_107], %284 {strides = array<i32>} : memref<8x2x16xf32, #tpu.memory_space<vmem>>, vector<1x2x16xf32>,
    %c6_i32 = arith.constant 6 : i32
    %cst_108 = arith.constant dense<0.000000e+00> : vector<2x32xf32>
    %285 = tpu.matmul %262, %3, %cst_108 {dimension_numbers = #tpu.dot_dimension_numbers<[1], [0], [0], [1], [0, 0, 1, 1], [], []>} : vector<2x32xf32>, vector<32x32xf32>, vector<2x32xf32> -> vector<2x32xf32>
    %cst_109 = arith.constant dense<0.000000e+00> : vector<2x32xf32>
    %286 = tpu.matmul %265, %5, %cst_109 {dimension_numbers = #tpu.dot_dimension_numbers<[1], [0], [0], [1], [0, 0, 1, 1], [], []>} : vector<2x32xf32>, vector<32x32xf32>, vector<2x32xf32> -> vector<2x32xf32>
    %cst_110 = arith.constant dense<0.000000e+00> : vector<2x16xf32>
    %287 = tpu.matmul %280, %10, %cst_110 {dimension_numbers = #tpu.dot_dimension_numbers<[1], [0], [0], [1], [0, 0, 1, 1], [], []>} : vector<2x16xf32>, vector<16x16xf32>, vector<2x16xf32> -> vector<2x16xf32>
    %288 = arith.index_cast %c6_i32 : i32 to index
    %c0_111 = arith.constant 0 : index
    %c0_112 = arith.constant 0 : index
    %289 = vector.load %arg1[%288, %c0_111, %c0_112] : memref<8x2x32xf32, #tpu.memory_space<vmem>>, vector<1x2x32xf32>
    %290 = vector.shape_cast %289 : vector<1x2x32xf32> to vector<2x32xf32>
    %291 = arith.addf %290, %285 : vector<2x32xf32>
    %cst_113 = arith.constant dense<0.000000e+00> : vector<2x32xf32>
    %292 = tpu.matmul %291, %4, %cst_113 {dimension_numbers = #tpu.dot_dimension_numbers<[1], [0], [0], [1], [0, 0, 1, 1], [], []>} : vector<2x32xf32>, vector<32x32xf32>, vector<2x32xf32> -> vector<2x32xf32>
    %293 = arith.addf %292, %286 : vector<2x32xf32>
    %294 = vector.broadcast %6 : vector<1x32xf32> to vector<2x32xf32>
    %295 = arith.addf %293, %294 : vector<2x32xf32>
    %296 = arith.negf %295 : vector<2x32xf32>
    %297 = math.exp %296 : vector<2x32xf32>
    %cst_114 = arith.constant 1.000000e+00 : f32
    %298 = vector.broadcast %cst_114 : f32 to vector<2x32xf32>
    %299 = arith.addf %298, %297 : vector<2x32xf32>
    %300 = arith.divf %298, %299 : vector<2x32xf32>
    %301 = arith.subf %291, %265 : vector<2x32xf32>
    %302 = arith.mulf %301, %300 : vector<2x32xf32>
    %303 = arith.addf %265, %302 : vector<2x32xf32>
    %cst_115 = arith.constant 5.000000e-01 : f32
    %304 = vector.broadcast %cst_115 : f32 to vector<2x32xf32>
    %305 = arith.cmpf ogt, %303, %304 : vector<2x32xf32>
    %306 = arith.extui %305 : vector<2x32xi1> to vector<2x32xi32>
    %307 = arith.sitofp %306 : vector<2x32xi32> to vector<2x32xf32>
    %cst_116 = arith.constant 1.000000e+00 : f32
    %308 = vector.broadcast %cst_116 : f32 to vector<2x32xf32>
    %309 = arith.subf %308, %307 : vector<2x32xf32>
    %310 = arith.mulf %309, %303 : vector<2x32xf32>
    %cst_117 = arith.constant dense<0.000000e+00> : vector<2x16xf32>
    %311 = tpu.matmul %307, %7, %cst_117 {dimension_numbers = #tpu.dot_dimension_numbers<[1], [0], [0], [1], [0, 0, 1, 1], [], []>} : vector<2x32xf32>, vector<32x16xf32>, vector<2x16xf32> -> vector<2x16xf32>
    %312 = vector.broadcast %8 : vector<1x16xf32> to vector<2x16xf32>
    %313 = arith.addf %311, %312 : vector<2x16xf32>
    %cst_118 = arith.constant dense<0.000000e+00> : vector<2x16xf32>
    %314 = tpu.matmul %313, %9, %cst_118 {dimension_numbers = #tpu.dot_dimension_numbers<[1], [0], [0], [1], [0, 0, 1, 1], [], []>} : vector<2x16xf32>, vector<16x16xf32>, vector<2x16xf32> -> vector<2x16xf32>
    %315 = arith.addf %314, %287 : vector<2x16xf32>
    %316 = vector.broadcast %11 : vector<1x16xf32> to vector<2x16xf32>
    %317 = arith.addf %315, %316 : vector<2x16xf32>
    %318 = arith.negf %317 : vector<2x16xf32>
    %319 = math.exp %318 : vector<2x16xf32>
    %cst_119 = arith.constant 1.000000e+00 : f32
    %320 = vector.broadcast %cst_119 : f32 to vector<2x16xf32>
    %321 = arith.addf %320, %319 : vector<2x16xf32>
    %322 = arith.divf %320, %321 : vector<2x16xf32>
    %323 = arith.subf %313, %280 : vector<2x16xf32>
    %324 = arith.mulf %323, %322 : vector<2x16xf32>
    %325 = arith.addf %280, %324 : vector<2x16xf32>
    %326 = arith.index_cast %c6_i32 : i32 to index
    %c0_120 = arith.constant 0 : index
    %c0_121 = arith.constant 0 : index
    %327 = vector.load %arg14[%326, %c0_120, %c0_121] : memref<8x2x16xf32, #tpu.memory_space<vmem>>, vector<1x2x16xf32>
    %328 = vector.shape_cast %327 : vector<1x2x16xf32> to vector<2x16xf32>
    %329 = vector.shape_cast %325 : vector<2x16xf32> to vector<1x2x16xf32>
    tpu.vector_store %arg14[%326, %c0_120, %c0_121], %329 {strides = array<i32>} : memref<8x2x16xf32, #tpu.memory_space<vmem>>, vector<1x2x16xf32>,
    %c7_i32 = arith.constant 7 : i32
    %cst_122 = arith.constant dense<0.000000e+00> : vector<2x32xf32>
    %330 = tpu.matmul %307, %3, %cst_122 {dimension_numbers = #tpu.dot_dimension_numbers<[1], [0], [0], [1], [0, 0, 1, 1], [], []>} : vector<2x32xf32>, vector<32x32xf32>, vector<2x32xf32> -> vector<2x32xf32>
    %cst_123 = arith.constant dense<0.000000e+00> : vector<2x32xf32>
    %331 = tpu.matmul %310, %5, %cst_123 {dimension_numbers = #tpu.dot_dimension_numbers<[1], [0], [0], [1], [0, 0, 1, 1], [], []>} : vector<2x32xf32>, vector<32x32xf32>, vector<2x32xf32> -> vector<2x32xf32>
    %cst_124 = arith.constant dense<0.000000e+00> : vector<2x16xf32>
    %332 = tpu.matmul %325, %10, %cst_124 {dimension_numbers = #tpu.dot_dimension_numbers<[1], [0], [0], [1], [0, 0, 1, 1], [], []>} : vector<2x16xf32>, vector<16x16xf32>, vector<2x16xf32> -> vector<2x16xf32>
    %333 = arith.index_cast %c7_i32 : i32 to index
    %c0_125 = arith.constant 0 : index
    %c0_126 = arith.constant 0 : index
    %334 = vector.load %arg1[%333, %c0_125, %c0_126] : memref<8x2x32xf32, #tpu.memory_space<vmem>>, vector<1x2x32xf32>
    %335 = vector.shape_cast %334 : vector<1x2x32xf32> to vector<2x32xf32>
    %336 = arith.addf %335, %330 : vector<2x32xf32>
    %cst_127 = arith.constant dense<0.000000e+00> : vector<2x32xf32>
    %337 = tpu.matmul %336, %4, %cst_127 {dimension_numbers = #tpu.dot_dimension_numbers<[1], [0], [0], [1], [0, 0, 1, 1], [], []>} : vector<2x32xf32>, vector<32x32xf32>, vector<2x32xf32> -> vector<2x32xf32>
    %338 = arith.addf %337, %331 : vector<2x32xf32>
    %339 = vector.broadcast %6 : vector<1x32xf32> to vector<2x32xf32>
    %340 = arith.addf %338, %339 : vector<2x32xf32>
    %341 = arith.negf %340 : vector<2x32xf32>
    %342 = math.exp %341 : vector<2x32xf32>
    %cst_128 = arith.constant 1.000000e+00 : f32
    %343 = vector.broadcast %cst_128 : f32 to vector<2x32xf32>
    %344 = arith.addf %343, %342 : vector<2x32xf32>
    %345 = arith.divf %343, %344 : vector<2x32xf32>
    %346 = arith.subf %336, %310 : vector<2x32xf32>
    %347 = arith.mulf %346, %345 : vector<2x32xf32>
    %348 = arith.addf %310, %347 : vector<2x32xf32>
    %cst_129 = arith.constant 5.000000e-01 : f32
    %349 = vector.broadcast %cst_129 : f32 to vector<2x32xf32>
    %350 = arith.cmpf ogt, %348, %349 : vector<2x32xf32>
    %351 = arith.extui %350 : vector<2x32xi1> to vector<2x32xi32>
    %352 = arith.sitofp %351 : vector<2x32xi32> to vector<2x32xf32>
    %cst_130 = arith.constant 1.000000e+00 : f32
    %353 = vector.broadcast %cst_130 : f32 to vector<2x32xf32>
    %354 = arith.subf %353, %352 : vector<2x32xf32>
    %355 = arith.mulf %354, %348 : vector<2x32xf32>
    %cst_131 = arith.constant dense<0.000000e+00> : vector<2x16xf32>
    %356 = tpu.matmul %352, %7, %cst_131 {dimension_numbers = #tpu.dot_dimension_numbers<[1], [0], [0], [1], [0, 0, 1, 1], [], []>} : vector<2x32xf32>, vector<32x16xf32>, vector<2x16xf32> -> vector<2x16xf32>
    %357 = vector.broadcast %8 : vector<1x16xf32> to vector<2x16xf32>
    %358 = arith.addf %356, %357 : vector<2x16xf32>
    %cst_132 = arith.constant dense<0.000000e+00> : vector<2x16xf32>
    %359 = tpu.matmul %358, %9, %cst_132 {dimension_numbers = #tpu.dot_dimension_numbers<[1], [0], [0], [1], [0, 0, 1, 1], [], []>} : vector<2x16xf32>, vector<16x16xf32>, vector<2x16xf32> -> vector<2x16xf32>
    %360 = arith.addf %359, %332 : vector<2x16xf32>
    %361 = vector.broadcast %11 : vector<1x16xf32> to vector<2x16xf32>
    %362 = arith.addf %360, %361 : vector<2x16xf32>
    %363 = arith.negf %362 : vector<2x16xf32>
    %364 = math.exp %363 : vector<2x16xf32>
    %cst_133 = arith.constant 1.000000e+00 : f32
    %365 = vector.broadcast %cst_133 : f32 to vector<2x16xf32>
    %366 = arith.addf %365, %364 : vector<2x16xf32>
    %367 = arith.divf %365, %366 : vector<2x16xf32>
    %368 = arith.subf %358, %325 : vector<2x16xf32>
    %369 = arith.mulf %368, %367 : vector<2x16xf32>
    %370 = arith.addf %325, %369 : vector<2x16xf32>
    %371 = arith.index_cast %c7_i32 : i32 to index
    %c0_134 = arith.constant 0 : index
    %c0_135 = arith.constant 0 : index
    %372 = vector.load %arg14[%371, %c0_134, %c0_135] : memref<8x2x16xf32, #tpu.memory_space<vmem>>, vector<1x2x16xf32>
    %373 = vector.shape_cast %372 : vector<1x2x16xf32> to vector<2x16xf32>
    %374 = vector.shape_cast %370 : vector<2x16xf32> to vector<1x2x16xf32>
    tpu.vector_store %arg14[%371, %c0_134, %c0_135], %374 {strides = array<i32>} : memref<8x2x16xf32, #tpu.memory_space<vmem>>, vector<1x2x16xf32>,
    %c8_i32 = arith.constant 8 : i32
    %c0_136 = arith.constant 0 : index
    %c0_137 = arith.constant 0 : index
    %375 = vector.load %arg15[%c0_136, %c0_137] : memref<2x32xf32, #tpu.memory_space<vmem>>, vector<2x32xf32>
    tpu.vector_store %arg15[%c0_136, %c0_137], %355 {strides = array<i32>} : memref<2x32xf32, #tpu.memory_space<vmem>>, vector<2x32xf32>,
    %c0_138 = arith.constant 0 : index
    %c0_139 = arith.constant 0 : index
    %376 = vector.load %arg16[%c0_138, %c0_139] : memref<2x32xf32, #tpu.memory_space<vmem>>, vector<2x32xf32>
    tpu.vector_store %arg16[%c0_138, %c0_139], %352 {strides = array<i32>} : memref<2x32xf32, #tpu.memory_space<vmem>>, vector<2x32xf32>,
    %c0_140 = arith.constant 0 : index
    %c0_141 = arith.constant 0 : index
    %377 = vector.load %arg17[%c0_140, %c0_141] : memref<2x16xf32, #tpu.memory_space<vmem>>, vector<2x16xf32>
    tpu.vector_store %arg17[%c0_140, %c0_141], %370 {strides = array<i32>} : memref<2x16xf32, #tpu.memory_space<vmem>>, vector<2x16xf32>,
    %c0_142 = arith.constant 0 : index
    %c0_143 = arith.constant 0 : index
    %c0_144 = arith.constant 0 : index
    %378 = vector.load %arg14[%c0_142, %c0_143, %c0_144] : memref<8x2x16xf32, #tpu.memory_space<vmem>>, vector<8x2x16xf32>
    %cst_145 = arith.constant dense<0xFF800000> : vector<8x2xf32>
    %379 = vector.multi_reduction <maximumf>, %378, %cst_145 [2] : vector<8x2x16xf32> to vector<8x2xf32>
    %380 = vector.shape_cast %379 : vector<8x2xf32> to vector<8x2x1xf32>
    %381 = vector.broadcast %380 : vector<8x2x1xf32> to vector<8x2x16xf32>
    %382 = arith.subf %378, %381 : vector<8x2x16xf32>
    %383 = math.exp %382 : vector<8x2x16xf32>
    %cst_146 = arith.constant dense<0.000000e+00> : vector<8x2xf32>
    %384 = vector.multi_reduction <add>, %383, %cst_146 [2] : vector<8x2x16xf32> to vector<8x2xf32>
    %385 = vector.shape_cast %384 : vector<8x2xf32> to vector<8x2x1xf32>
    %386 = math.log %385 : vector<8x2x1xf32>
    %387 = vector.broadcast %386 : vector<8x2x1xf32> to vector<8x2x16xf32>
    %388 = arith.subf %382, %387 : vector<8x2x16xf32>
    %c0_147 = arith.constant 0 : index
    %c0_148 = arith.constant 0 : index
    %c0_149 = arith.constant 0 : index
    %389 = vector.load %arg14[%c0_147, %c0_148, %c0_149] : memref<8x2x16xf32, #tpu.memory_space<vmem>>, vector<8x2x16xf32>
    tpu.vector_store %arg14[%c0_147, %c0_148, %c0_149], %388 {strides = array<i32>} : memref<8x2x16xf32, #tpu.memory_space<vmem>>, vector<8x2x16xf32>,
    return
  }
  func.func @transform_0(%arg0: i32) -> (i32, i32, i32) {
    %c0_i32 = arith.constant 0 : i32
    %c0_i32_0 = arith.constant 0 : i32
    %c0_i32_1 = arith.constant 0 : i32
    return %arg0, %c0_i32, %c0_i32_0 : i32, i32, i32
  }
  func.func @transform_1(%arg0: i32) -> (i32, i32) {
    %c0_i32 = arith.constant 0 : i32
    %c0_i32_0 = arith.constant 0 : i32
    %c0_i32_1 = arith.constant 0 : i32
    return %c0_i32, %c0_i32_0 : i32, i32
  }
  func.func @transform_2(%arg0: i32) -> (i32, i32) {
    %c0_i32 = arith.constant 0 : i32
    %c0_i32_0 = arith.constant 0 : i32
    %c0_i32_1 = arith.constant 0 : i32
    return %c0_i32, %c0_i32_0 : i32, i32
  }
  func.func @transform_3(%arg0: i32) -> (i32, i32) {
    %c0_i32 = arith.constant 0 : i32
    %c0_i32_0 = arith.constant 0 : i32
    %c0_i32_1 = arith.constant 0 : i32
    return %c0_i32, %c0_i32_0 : i32, i32
  }
  func.func @transform_4(%arg0: i32) -> (i32, i32) {
    %c0_i32 = arith.constant 0 : i32
    %c0_i32_0 = arith.constant 0 : i32
    %c0_i32_1 = arith.constant 0 : i32
    return %c0_i32, %c0_i32_0 : i32, i32
  }
  func.func @transform_5(%arg0: i32) -> (i32, i32) {
    %c0_i32 = arith.constant 0 : i32
    %c0_i32_0 = arith.constant 0 : i32
    %c0_i32_1 = arith.constant 0 : i32
    return %c0_i32, %c0_i32_0 : i32, i32
  }
  func.func @transform_6(%arg0: i32) -> (i32, i32) {
    %c0_i32 = arith.constant 0 : i32
    %c0_i32_0 = arith.constant 0 : i32
    %c0_i32_1 = arith.constant 0 : i32
    return %c0_i32, %c0_i32_0 : i32, i32
  }
  func.func @transform_7(%arg0: i32) -> (i32, i32) {
    %c0_i32 = arith.constant 0 : i32
    %c0_i32_0 = arith.constant 0 : i32
    %c0_i32_1 = arith.constant 0 : i32
    return %c0_i32, %c0_i32_0 : i32, i32
  }
  func.func @transform_8(%arg0: i32) -> (i32, i32) {
    %c0_i32 = arith.constant 0 : i32
    %c0_i32_0 = arith.constant 0 : i32
    %c0_i32_1 = arith.constant 0 : i32
    return %c0_i32, %c0_i32_0 : i32, i32
  }
  func.func @transform_9(%arg0: i32) -> (i32, i32) {
    %c0_i32 = arith.constant 0 : i32
    %c0_i32_0 = arith.constant 0 : i32
    %c0_i32_1 = arith.constant 0 : i32
    return %c0_i32, %c0_i32_0 : i32, i32
  }
  func.func @transform_10(%arg0: i32) -> (i32, i32) {
    %c0_i32 = arith.constant 0 : i32
    %c0_i32_0 = arith.constant 0 : i32
    %c0_i32_1 = arith.constant 0 : i32
    return %c0_i32, %c0_i32_0 : i32, i32
  }
  func.func @transform_11(%arg0: i32) -> (i32, i32) {
    %c0_i32 = arith.constant 0 : i32
    %c0_i32_0 = arith.constant 0 : i32
    %c0_i32_1 = arith.constant 0 : i32
    return %c0_i32, %c0_i32_0 : i32, i32
  }
  func.func @transform_12(%arg0: i32) -> (i32, i32) {
    %c0_i32 = arith.constant 0 : i32
    %c0_i32_0 = arith.constant 0 : i32
    %c0_i32_1 = arith.constant 0 : i32
    return %c0_i32, %c0_i32_0 : i32, i32
  }
  func.func @transform_13(%arg0: i32) -> (i32, i32, i32) {
    %c0_i32 = arith.constant 0 : i32
    %c0_i32_0 = arith.constant 0 : i32
    %c0_i32_1 = arith.constant 0 : i32
    return %arg0, %c0_i32, %c0_i32_0 : i32, i32, i32
  }
  func.func @transform_14(%arg0: i32) -> (i32, i32) {
    %c0_i32 = arith.constant 0 : i32
    %c0_i32_0 = arith.constant 0 : i32
    %c0_i32_1 = arith.constant 0 : i32
    return %c0_i32, %c0_i32_0 : i32, i32
  }
  func.func @transform_15(%arg0: i32) -> (i32, i32) {
    %c0_i32 = arith.constant 0 : i32
    %c0_i32_0 = arith.constant 0 : i32
    %c0_i32_1 = arith.constant 0 : i32
    return %c0_i32, %c0_i32_0 : i32, i32
  }
  func.func @transform_16(%arg0: i32) -> (i32, i32) {
    %c0_i32 = arith.constant 0 : i32
    %c0_i32_0 = arith.constant 0 : i32
    %c0_i32_1 = arith.constant 0 : i32
    return %c0_i32, %c0_i32_0 : i32, i32
  }
}

</mosaic_0001>

<llo_original>
// kernel: tpu_custom_call.1
$region0: #{tpu_custom_call.1}
  #allocation0 [shape = 'u32[]', space=smem, size = 0x4, offset = 0x4, fixed_abs, tag = 'smem constant byte address 0x4 - core index']
  #allocation1 [shape = 'u32[144,128]{1,0:T(1,128)}', space=vmem, size = 0x12000, scoped, tag = 'internal scratch']
  %s0 = inlined_call_operand.hbm [shape: f32[8,2,32], index: 0, kind: input, shape index: {}]
  %s1 = inlined_call_operand.vmem [shape: f32[2,32], index: 1, kind: input, shape index: {}]
  %s2 = inlined_call_operand.hbm [shape: f32[2,32], index: 2, kind: input, shape index: {}]
  %s3 = inlined_call_operand.hbm [shape: f32[2,16], index: 3, kind: input, shape index: {}]
  %s4 = inlined_call_operand.vmem [shape: f32[32,32], index: 4, kind: input, shape index: {}]
  %s5 = inlined_call_operand.vmem [shape: f32[32,32], index: 5, kind: input, shape index: {}]
  %s6 = inlined_call_operand.hbm [shape: f32[32,32], index: 6, kind: input, shape index: {}]
  %s7 = inlined_call_operand.hbm [shape: f32[1,32], index: 7, kind: input, shape index: {}]
  %s8 = inlined_call_operand.vmem [shape: f32[32,16], index: 8, kind: input, shape index: {}]
  %s9 = inlined_call_operand.hbm [shape: f32[1,16], index: 9, kind: input, shape index: {}]
  %s10 = inlined_call_operand.vmem [shape: f32[16,16], index: 10, kind: input, shape index: {}]
  %s11 = inlined_call_operand.hbm [shape: f32[16,16], index: 11, kind: input, shape index: {}]
  %s12 = inlined_call_operand.vmem [shape: f32[1,16], index: 12, kind: input, shape index: {}]
  %s13 = inlined_call_operand.hbm [shape: f32[8,2,16], index: 13, kind: output, shape index: {0}]
  %s14 = inlined_call_operand.hbm [shape: f32[2,32], index: 14, kind: output, shape index: {1}]
  %s15 = inlined_call_operand.hbm [shape: f32[2,32], index: 15, kind: output, shape index: {2}]
  %s16 = inlined_call_operand.hbm [shape: f32[2,16], index: 16, kind: output, shape index: {3}]
  %17 = xla_tuple %s13, %s14, %s15, %s16
  %s18 = sld [smem:[#allocation0]]
  $region118: #{tpu_custom_call.1} parent=0
    _
  %s20 = ssub.s32 1, %s18
  %s21 = scalar_select 0, %s20, %s18
  $region1: #{tpu_custom_call.1} parent=0
    #allocation2 [shape = 'u8[8192]{0}', space=vmem, size = 0x2000, scoped, tag = 'input window, operand 0, single buffered']
    #allocation3 [shape = 's32[1]{0}', space=sflag, size = 0x4, scoped, tag = 'scoped memory for tpu_custom_call.1']
    #allocation4 [shape = 's32[1]{0}', space=sflag, size = 0x4, scoped, tag = 'scoped memory for tpu_custom_call.1']
    #allocation5 [shape = 'u8[1024]{0}', space=vmem, size = 0x400, scoped, tag = 'input window, operand 2, single buffered']
    #allocation6 [shape = 's32[1]{0}', space=sflag, size = 0x4, scoped, tag = 'scoped memory for tpu_custom_call.1']
    #allocation7 [shape = 'u8[1024]{0}', space=vmem, size = 0x400, scoped, tag = 'input window, operand 3, single buffered']
    #allocation8 [shape = 'u8[16384]{0}', space=vmem, size = 0x4000, scoped, tag = 'input window, operand 6, single buffered']
    #allocation9 [shape = 's32[1]{0}', space=sflag, size = 0x4, scoped, tag = 'scoped memory for tpu_custom_call.1']
    #allocation10 [shape = 'u8[512]{0}', space=vmem, size = 0x400, scoped, tag = 'input window, operand 7, single buffered']
    #allocation11 [shape = 'u8[512]{0}', space=vmem, size = 0x400, scoped, tag = 'input window, operand 9, single buffered']
    #allocation12 [shape = 's32[1]{0}', space=sflag, size = 0x4, scoped, tag = 'scoped memory for tpu_custom_call.1']
    #allocation13 [shape = 'u8[8192]{0}', space=vmem, size = 0x2000, scoped, tag = 'input window, operand 11, single buffered']
    #allocation14 [shape = 'u8[8192]{0}', space=vmem, size = 0x2000, scoped, tag = 'output window, operand 0, single buffered']
    #allocation15 [shape = 'u8[1024]{0}', space=vmem, size = 0x400, scoped, tag = 'output window, operand 1, single buffered']
    #allocation16 [shape = 's32[1]{0}', space=sflag, size = 0x4, scoped, tag = 'scoped memory for tpu_custom_call.1']
    #allocation17 [shape = 'u8[1024]{0}', space=vmem, size = 0x400, scoped, tag = 'output window, operand 2, single buffered']
    #allocation18 [shape = 'u8[1024]{0}', space=vmem, size = 0x400, scoped, tag = 'output window, operand 3, single buffered']
    #allocation19 [shape = 's32[1]{0}', space=sflag, size = 0x4, scoped, tag = 'scoped memory for tpu_custom_call.1']
    %22 = vsyncpa [#allocation3], 0
    %23 = vsyncpa [#allocation6], 0
    %24 = vsyncpa [#allocation9], 0
    %25 = vsyncpa [#allocation12], 0
    %26 = vsyncpa [#allocation4], 0
    %27 = vsyncpa [#allocation16], 0
    %28 = vsyncpa [#allocation19], 0
    // Predicated region
    $region2: #{tpu_custom_call.1} parent=1 // pred_check
      _
    $region3: #{tpu_custom_call.1} parent=1 // pred_check_branch
      %30 = sbr.rel (0) target = $region5
    $region4: #{tpu_custom_call.1} parent=1 // pred_region
      %s32 = ssub.s32 256, 256
      %33 = vsyncadd [#allocation3], %s32
      %s34 = sshll.u32 [#allocation2], 4
      %s35 = int_to_ptr.vmem [resolvable:$true] %s34
      %40 = dma.hbm_to_vmem [thread:$0]  %s0, 256, %s35, [#allocation3], 32, 32, 2
    $region5: #{tpu_custom_call.1} parent=1 // pred_fallthru
      _
    // Predicated region
    $region6: #{tpu_custom_call.1} parent=1 // pred_check
      _
    $region7: #{tpu_custom_call.1} parent=1 // pred_check_branch
      %42 = sbr.rel (0) target = $region9
    $region8: #{tpu_custom_call.1} parent=1 // pred_region
      _
    $region9: #{tpu_custom_call.1} parent=1 // pred_fallthru
      _
    // Predicated region
    $region10: #{tpu_custom_call.1} parent=1 // pred_check
      _
    $region11: #{tpu_custom_call.1} parent=1 // pred_check_branch
      %44 = sbr.rel (0) target = $region13
    $region12: #{tpu_custom_call.1} parent=1 // pred_region
      %s46 = ssub.s32 32, 32
      %47 = vsyncadd [#allocation6], %s46
      %s49 = sshll.u32 [#allocation5], 4
      %s50 = int_to_ptr.vmem [resolvable:$true] %s49
      %52 = dma.hbm_to_vmem [thread:$0]  %s2, 32, %s50, [#allocation6]
    $region13: #{tpu_custom_call.1} parent=1 // pred_fallthru
      _
    // Predicated region
    $region14: #{tpu_custom_call.1} parent=1 // pred_check
      _
    $region15: #{tpu_custom_call.1} parent=1 // pred_check_branch
      %54 = sbr.rel (0) target = $region17
    $region16: #{tpu_custom_call.1} parent=1 // pred_region
      %s56 = ssub.s32 32, 32
      %57 = vsyncadd [#allocation6], %s56
      %s59 = sshll.u32 [#allocation7], 4
      %s60 = int_to_ptr.vmem [resolvable:$true] %s59
      %62 = dma.hbm_to_vmem [thread:$0]  %s3, 32, %s60, [#allocation6]
    $region17: #{tpu_custom_call.1} parent=1 // pred_fallthru
      _
    // Predicated region
    $region18: #{tpu_custom_call.1} parent=1 // pred_check
      _
    $region19: #{tpu_custom_call.1} parent=1 // pred_check_branch
      %64 = sbr.rel (0) target = $region21
    $region20: #{tpu_custom_call.1} parent=1 // pred_region
      _
    $region21: #{tpu_custom_call.1} parent=1 // pred_fallthru
      _
    // Predicated region
    $region22: #{tpu_custom_call.1} parent=1 // pred_check
      _
    $region23: #{tpu_custom_call.1} parent=1 // pred_check_branch
      %66 = sbr.rel (0) target = $region25
    $region24: #{tpu_custom_call.1} parent=1 // pred_region
      _
    $region25: #{tpu_custom_call.1} parent=1 // pred_fallthru
      _
    // Predicated region
    $region26: #{tpu_custom_call.1} parent=1 // pred_check
      _
    $region27: #{tpu_custom_call.1} parent=1 // pred_check_branch
      %68 = sbr.rel (0) target = $region29
    $region28: #{tpu_custom_call.1} parent=1 // pred_region
      %s70 = ssub.s32 512, 512
      %71 = vsyncadd [#allocation9], %s70
      %s72 = sshll.u32 [#allocation8], 4
      %s73 = int_to_ptr.vmem [resolvable:$true] %s72
      %78 = dma.hbm_to_vmem [thread:$0]  %s6, 512, %s73, [#allocation9], 128, 128, 8
    $region29: #{tpu_custom_call.1} parent=1 // pred_fallthru
      _
    // Predicated region
    $region30: #{tpu_custom_call.1} parent=1 // pred_check
      _
    $region31: #{tpu_custom_call.1} parent=1 // pred_check_branch
      %80 = sbr.rel (0) target = $region33
    $region32: #{tpu_custom_call.1} parent=1 // pred_region
      %s82 = ssub.s32 16, 16
      %83 = vsyncadd [#allocation9], %s82
      %s85 = sshll.u32 [#allocation10], 4
      %s86 = int_to_ptr.vmem [resolvable:$true] %s85
      %88 = dma.hbm_to_vmem [thread:$0]  %s7, 16, %s86, [#allocation9]
    $region33: #{tpu_custom_call.1} parent=1 // pred_fallthru
      _
    // Predicated region
    $region34: #{tpu_custom_call.1} parent=1 // pred_check
      _
    $region35: #{tpu_custom_call.1} parent=1 // pred_check_branch
      %90 = sbr.rel (0) target = $region37
    $region36: #{tpu_custom_call.1} parent=1 // pred_region
      _
    $region37: #{tpu_custom_call.1} parent=1 // pred_fallthru
      _
    // Predicated region
    $region38: #{tpu_custom_call.1} parent=1 // pred_check
      _
    $region39: #{tpu_custom_call.1} parent=1 // pred_check_branch
      %92 = sbr.rel (0) target = $region41
    $region40: #{tpu_custom_call.1} parent=1 // pred_region
      %s94 = ssub.s32 16, 16
      %95 = vsyncadd [#allocation12], %s94
      %s97 = sshll.u32 [#allocation11], 4
      %s98 = int_to_ptr.vmem [resolvable:$true] %s97
      %100 = dma.hbm_to_vmem [thread:$0]  %s9, 16, %s98, [#allocation12]
    $region41: #{tpu_custom_call.1} parent=1 // pred_fallthru
      _
    // Predicated region
    $region42: #{tpu_custom_call.1} parent=1 // pred_check
      _
    $region43: #{tpu_custom_call.1} parent=1 // pred_check_branch
      %102 = sbr.rel (0) target = $region45
    $region44: #{tpu_custom_call.1} parent=1 // pred_region
      _
    $region45: #{tpu_custom_call.1} parent=1 // pred_fallthru
      _
    // Predicated region
    $region46: #{tpu_custom_call.1} parent=1 // pred_check
      _
    $region47: #{tpu_custom_call.1} parent=1 // pred_check_branch
      %104 = sbr.rel (0) target = $region49
    $region48: #{tpu_custom_call.1} parent=1 // pred_region
      %s106 = ssub.s32 256, 256
      %107 = vsyncadd [#allocation12], %s106
      %s108 = sshll.u32 [#allocation13], 4
      %s109 = int_to_ptr.vmem [resolvable:$true] %s108
      %114 = dma.hbm_to_vmem [thread:$0]  %s11, 256, %s109, [#allocation12], 128, 128, 8
    $region49: #{tpu_custom_call.1} parent=1 // pred_fallthru
      _
    // Predicated region
    $region50: #{tpu_custom_call.1} parent=1 // pred_check
      _
    $region51: #{tpu_custom_call.1} parent=1 // pred_check_branch
      %116 = sbr.rel (0) target = $region53
    $region52: #{tpu_custom_call.1} parent=1 // pred_region
      _
    $region53: #{tpu_custom_call.1} parent=1 // pred_fallthru
      _
    // Predicated region
    $region54: #{tpu_custom_call.1} parent=1 // pred_check
      _
    $region55: #{tpu_custom_call.1} parent=1 // pred_check_branch
      %118 = sbr.rel (0) target = $region57
    $region56: #{tpu_custom_call.1} parent=1 // pred_region
      %119 = dma.done [#allocation3], 256
    $region57: #{tpu_custom_call.1} parent=1 // pred_fallthru
      _
    // Predicated region
    $region58: #{tpu_custom_call.1} parent=1 // pred_check
      _
    $region59: #{tpu_custom_call.1} parent=1 // pred_check_branch
      %121 = sbr.rel (0) target = $region61
    $region60: #{tpu_custom_call.1} parent=1 // pred_region
      %122 = dma.done [#allocation6], 32
    $region61: #{tpu_custom_call.1} parent=1 // pred_fallthru
      _
    // Predicated region
    $region62: #{tpu_custom_call.1} parent=1 // pred_check
      _
    $region63: #{tpu_custom_call.1} parent=1 // pred_check_branch
      %124 = sbr.rel (0) target = $region65
    $region64: #{tpu_custom_call.1} parent=1 // pred_region
      %125 = dma.done [#allocation6], 32
    $region65: #{tpu_custom_call.1} parent=1 // pred_fallthru
      _
    // Predicated region
    $region66: #{tpu_custom_call.1} parent=1 // pred_check
      _
    $region67: #{tpu_custom_call.1} parent=1 // pred_check_branch
      %127 = sbr.rel (0) target = $region69
    $region68: #{tpu_custom_call.1} parent=1 // pred_region
      %128 = dma.done [#allocation9], 512
    $region69: #{tpu_custom_call.1} parent=1 // pred_fallthru
      _
    // Predicated region
    $region70: #{tpu_custom_call.1} parent=1 // pred_check
      _
    $region71: #{tpu_custom_call.1} parent=1 // pred_check_branch
      %130 = sbr.rel (0) target = $region73
    $region72: #{tpu_custom_call.1} parent=1 // pred_region
      %131 = dma.done [#allocation9], 16
    $region73: #{tpu_custom_call.1} parent=1 // pred_fallthru
      _
    // Predicated region
    $region74: #{tpu_custom_call.1} parent=1 // pred_check
      _
    $region75: #{tpu_custom_call.1} parent=1 // pred_check_branch
      %133 = sbr.rel (0) target = $region77
    $region76: #{tpu_custom_call.1} parent=1 // pred_region
      %134 = dma.done [#allocation12], 16
    $region77: #{tpu_custom_call.1} parent=1 // pred_fallthru
      _
    // Predicated region
    $region78: #{tpu_custom_call.1} parent=1 // pred_check
      _
    $region79: #{tpu_custom_call.1} parent=1 // pred_check_branch
      %136 = sbr.rel (0) target = $region81
    $region80: #{tpu_custom_call.1} parent=1 // pred_region
      %137 = dma.done [#allocation12], 256
    $region81: #{tpu_custom_call.1} parent=1 // pred_fallthru
      _
    %p138 = scmp.eq.s32.totalorder 0, 0
    // Predicated region
    $region82: #{tpu_custom_call.1} parent=1 // pred_check
      %p139 = pneg %p138
    $region83: #{tpu_custom_call.1} parent=1 // pred_check_branch
      %141 = sbr.rel (%p139) target = $region85
    $region84: #{tpu_custom_call.1} parent=1 // pred_region
      %v142 = vld [vmem:[%s1] sm:$0x3]
      %vm143 = vcmask 254976
      %144 = vst.msk [vmem:[#allocation15] sm:$0x3] %vm143, %v142
      %v145 = vld [vmem:[#allocation5] sm:$0x3]
      %146 = vst.msk [vmem:[#allocation17] sm:$0x3] %vm143, %v145
      %v147 = vld [vmem:[#allocation7] sm:$0x3]
      %vm148 = vcmask 123904
      %149 = vst.msk [vmem:[#allocation18] sm:$0x3] %vm148, %v147
    $region85: #{tpu_custom_call.1} parent=1 // pred_fallthru
      _
    %v150 = vld [vmem:[%s4] sm:$0xff]
    %v151 = vld [vmem:[%s4 + $0x8] sm:$0xff]
    %v152 = vld [vmem:[%s4 + $0x10] sm:$0xff]
    %v153 = vld [vmem:[%s4 + $0x18] sm:$0xff]
    %v154 = vld [vmem:[%s5] sm:$0xff]
    %v155 = vld [vmem:[%s5 + $0x8] sm:$0xff]
    %v156 = vld [vmem:[%s5 + $0x10] sm:$0xff]
    %v157 = vld [vmem:[%s5 + $0x18] sm:$0xff]
    %v158 = vld [vmem:[#allocation8] sm:$0xff]
    %v159 = vld [vmem:[#allocation8 + $0x8] sm:$0xff]
    %v160 = vld [vmem:[#allocation8 + $0x10] sm:$0xff]
    %v161 = vld [vmem:[#allocation8 + $0x18] sm:$0xff]
    %v162 = vld [vmem:[#allocation10] sm:$0x1]
    %v163 = vld [vmem:[%s8] sm:$0xff]
    %v164 = vld [vmem:[%s8 + $0x8] sm:$0xff]
    %v165 = vld [vmem:[%s8 + $0x10] sm:$0xff]
    %v166 = vld [vmem:[%s8 + $0x18] sm:$0xff]
    %v167 = vld [vmem:[#allocation11] sm:$0x1]
    %v168 = vld [vmem:[%s10] sm:$0xff]
    %v169 = vld [vmem:[%s10 + $0x8] sm:$0xff]
    %v170 = vld [vmem:[#allocation13] sm:$0xff]
    %v171 = vld [vmem:[#allocation13 + $0x8] sm:$0xff]
    %v172 = vld [vmem:[%s12] sm:$0x1]
    %v173 = vld [vmem:[#allocation15] sm:$0x3]
    %v174 = vld [vmem:[#allocation17] sm:$0x3]
    %v175 = vld [vmem:[#allocation18] sm:$0x3]
    %vm176 = vcmask 261120
    %v178 = vsel %vm176, %v174, 0
    %180 = vmatprep.subr.mxu0 0.0
    %181 = vmatpush1.msra.mxu0 %v150
    %182 = vmatprep.subr.mxu0 0.0
    %183 = vmatpush1.msra.mxu0 %v151
    %184 = vmatprep.subr.mxu0 0.0
    %185 = vmatpush1.msra.mxu0 %v152
    %186 = vmatprep.subr.mxu0 0.0
    %187 = vmatpush1.msra.mxu0 %v153
    %188 = vmatprep.subr.mxu0 0.0
    %189 = vmatpush1.msra.mxu0 0.0
    %190 = vmatprep.subr.mxu0 0.0
    %191 = vmatpush1.msra.mxu0 0.0
    %192 = vmatprep.subr.mxu0 0.0
    %193 = vmatpush1.msra.mxu0 0.0
    %194 = vmatprep.subr.mxu0 0.0
    %195 = vmatpush1.msra.mxu0 0.0
    %196 = vmatprep.subr.mxu0 0.0
    %197 = vmatpush1.msra.mxu0 0.0
    %198 = vmatprep.subr.mxu0 0.0
    %199 = vmatpush1.msra.mxu0 0.0
    %200 = vmatprep.subr.mxu0 0.0
    %201 = vmatpush1.msra.mxu0 0.0
    %202 = vmatprep.subr.mxu0 0.0
    %203 = vmatpush1.msra.mxu0 0.0
    %204 = vmatprep.subr.mxu0 0.0
    %205 = vmatpush1.msra.mxu0 0.0
    %206 = vmatprep.subr.mxu0 0.0
    %207 = vmatpush1.msra.mxu0 0.0
    %208 = vmatprep.subr.mxu0 0.0
    %209 = vmatpush1.msra.mxu0 0.0
    %210 = vmatprep.subr.mxu0 0.0
    %211 = vmatpush1.msra.mxu0 0.0
    %212 = vmatprep.subr.mxu0 0.0
    %213 = vmatpush1.msra.mxu0 0.0
    %214 = vmatprep.subr.mxu0 0.0
    %215 = vmatpush1.msra.mxu0 0.0
    %216 = vmatprep.subr.mxu0 0.0
    %217 = vmatpush1.msra.mxu0 0.0
    %218 = vmatprep.subr.mxu0 0.0
    %219 = vmatpush1.msra.mxu0 0.0
    %220 = vmatprep.subr.mxu0 0.0
    %221 = vmatpush1.msra.mxu0 0.0
    %222 = vmatprep.subr.mxu0 0.0
    %223 = vmatpush1.msra.mxu0 0.0
    %224 = vmatprep.subr.mxu0 0.0
    %225 = vmatpush1.msra.mxu0 0.0
    %226 = vmatprep.subr.mxu0 0.0
    %227 = vmatpush1.msra.mxu0 0.0
    %228 = vmatprep.subr.mxu0 0.0
    %229 = vmatpush1.msra.mxu0 0.0
    %230 = vmatprep.subr.mxu0 0.0
    %231 = vmatpush1.msra.mxu0 0.0
    %232 = vmatprep.subr.mxu0 0.0
    %233 = vmatpush1.msra.mxu0 0.0
    %234 = vmatprep.subr.mxu0 0.0
    %235 = vmatpush1.msra.mxu0 0.0
    %236 = vmatprep.subr.mxu0 0.0
    %237 = vmatpush1.msra.mxu0 0.0
    %238 = vmatprep.subr.mxu0 0.0
    %239 = vmatpush1.msra.mxu0 0.0
    %240 = vmatprep.subr.mxu0 0.0
    %241 = vmatpush1.msra.mxu0 0.0
    %242 = vmatprep.subr.mxu0 0.0
    %243 = vmatpush1.msra.mxu0 0.0
    %244 = vmatprep.mubr.f32.mxu0 0.0
    %245 = vmatmul.mubr.f32.gmra.mrb[0].mxu0 %v178
    %v246 = vpop.f32.mrb[0].mxu0
    %v247 = vadd.f32 0.0, %v246
    %v248 = vpop.f32.mrb[0].mxu0
    %249 = vdwg.mxu0
    %v251 = vsel %vm176, %v173, 0
    %253 = vmatprep.subr.mxu0 0.0
    %254 = vmatpush1.msra.mxu0 %v158
    %255 = vmatprep.subr.mxu0 0.0
    %256 = vmatpush1.msra.mxu0 %v159
    %257 = vmatprep.subr.mxu0 0.0
    %258 = vmatpush1.msra.mxu0 %v160
    %259 = vmatprep.subr.mxu0 0.0
    %260 = vmatpush1.msra.mxu0 %v161
    %261 = vmatprep.subr.mxu0 0.0
    %262 = vmatpush1.msra.mxu0 0.0
    %263 = vmatprep.subr.mxu0 0.0
    %264 = vmatpush1.msra.mxu0 0.0
    %265 = vmatprep.subr.mxu0 0.0
    %266 = vmatpush1.msra.mxu0 0.0
    %267 = vmatprep.subr.mxu0 0.0
    %268 = vmatpush1.msra.mxu0 0.0
    %269 = vmatprep.subr.mxu0 0.0
    %270 = vmatpush1.msra.mxu0 0.0
    %271 = vmatprep.subr.mxu0 0.0
    %272 = vmatpush1.msra.mxu0 0.0
    %273 = vmatprep.subr.mxu0 0.0
    %274 = vmatpush1.msra.mxu0 0.0
    %275 = vmatprep.subr.mxu0 0.0
    %276 = vmatpush1.msra.mxu0 0.0
    %277 = vmatprep.subr.mxu0 0.0
    %278 = vmatpush1.msra.mxu0 0.0
    %279 = vmatprep.subr.mxu0 0.0
    %280 = vmatpush1.msra.mxu0 0.0
    %281 = vmatprep.subr.mxu0 0.0
    %282 = vmatpush1.msra.mxu0 0.0
    %283 = vmatprep.subr.mxu0 0.0
    %284 = vmatpush1.msra.mxu0 0.0
    %285 = vmatprep.subr.mxu0 0.0
    %286 = vmatpush1.msra.mxu0 0.0
    %287 = vmatprep.subr.mxu0 0.0
    %288 = vmatpush1.msra.mxu0 0.0
    %289 = vmatprep.subr.mxu0 0.0
    %290 = vmatpush1.msra.mxu0 0.0
    %291 = vmatprep.subr.mxu0 0.0
    %292 = vmatpush1.msra.mxu0 0.0
    %293 = vmatprep.subr.mxu0 0.0
    %294 = vmatpush1.msra.mxu0 0.0
    %295 = vmatprep.subr.mxu0 0.0
    %296 = vmatpush1.msra.mxu0 0.0
    %297 = vmatprep.subr.mxu0 0.0
    %298 = vmatpush1.msra.mxu0 0.0
    %299 = vmatprep.subr.mxu0 0.0
    %300 = vmatpush1.msra.mxu0 0.0
    %301 = vmatprep.subr.mxu0 0.0
    %302 = vmatpush1.msra.mxu0 0.0
    %303 = vmatprep.subr.mxu0 0.0
    %304 = vmatpush1.msra.mxu0 0.0
    %305 = vmatprep.subr.mxu0 0.0
    %306 = vmatpush1.msra.mxu0 0.0
    %307 = vmatprep.subr.mxu0 0.0
    %308 = vmatpush1.msra.mxu0 0.0
    %309 = vmatprep.subr.mxu0 0.0
    %310 = vmatpush1.msra.mxu0 0.0
    %311 = vmatprep.subr.mxu0 0.0
    %312 = vmatpush1.msra.mxu0 0.0
    %313 = vmatprep.subr.mxu0 0.0
    %314 = vmatpush1.msra.mxu0 0.0
    %315 = vmatprep.subr.mxu0 0.0
    %316 = vmatpush1.msra.mxu0 0.0
    %317 = vmatprep.mubr.f32.mxu0 0.0
    %318 = vmatmul.mubr.f32.gmra.mrb[0].mxu0 %v251
    %v319 = vpop.f32.mrb[0].mxu0
    %v320 = vadd.f32 0.0, %v319
    %v321 = vpop.f32.mrb[0].mxu0
    %322 = vdwg.mxu0
    %vm323 = vcmask 130048
    %v325 = vsel %vm323, %v175, 0
    %327 = vmatprep.subr.mxu0 0.0
    %328 = vmatpush1.msra.mxu0 %v170
    %329 = vmatprep.subr.mxu0 0.0
    %330 = vmatpush1.msra.mxu0 %v171
    %331 = vmatprep.subr.mxu0 0.0
    %332 = vmatpush1.msra.mxu0 0.0
    %333 = vmatprep.subr.mxu0 0.0
    %334 = vmatpush1.msra.mxu0 0.0
    %335 = vmatprep.subr.mxu0 0.0
    %336 = vmatpush1.msra.mxu0 0.0
    %337 = vmatprep.subr.mxu0 0.0
    %338 = vmatpush1.msra.mxu0 0.0
    %339 = vmatprep.subr.mxu0 0.0
    %340 = vmatpush1.msra.mxu0 0.0
    %341 = vmatprep.subr.mxu0 0.0
    %342 = vmatpush1.msra.mxu0 0.0
    %343 = vmatprep.subr.mxu0 0.0
    %344 = vmatpush1.msra.mxu0 0.0
    %345 = vmatprep.subr.mxu0 0.0
    %346 = vmatpush1.msra.mxu0 0.0
    %347 = vmatprep.subr.mxu0 0.0
    %348 = vmatpush1.msra.mxu0 0.0
    %349 = vmatprep.subr.mxu0 0.0
    %350 = vmatpush1.msra.mxu0 0.0
    %351 = vmatprep.subr.mxu0 0.0
    %352 = vmatpush1.msra.mxu0 0.0
    %353 = vmatprep.subr.mxu0 0.0
    %354 = vmatpush1.msra.mxu0 0.0
    %355 = vmatprep.subr.mxu0 0.0
    %356 = vmatpush1.msra.mxu0 0.0
    %357 = vmatprep.subr.mxu0 0.0
    %358 = vmatpush1.msra.mxu0 0.0
    %359 = vmatprep.subr.mxu0 0.0
    %360 = vmatpush1.msra.mxu0 0.0
    %361 = vmatprep.subr.mxu0 0.0
    %362 = vmatpush1.msra.mxu0 0.0
    %363 = vmatprep.subr.mxu0 0.0
    %364 = vmatpush1.msra.mxu0 0.0
    %365 = vmatprep.subr.mxu0 0.0
    %366 = vmatpush1.msra.mxu0 0.0
    %367 = vmatprep.subr.mxu0 0.0
    %368 = vmatpush1.msra.mxu0 0.0
    %369 = vmatprep.subr.mxu0 0.0
    %370 = vmatpush1.msra.mxu0 0.0
    %371 = vmatprep.subr.mxu0 0.0
    %372 = vmatpush1.msra.mxu0 0.0
    %373 = vmatprep.subr.mxu0 0.0
    %374 = vmatpush1.msra.mxu0 0.0
    %375 = vmatprep.subr.mxu0 0.0
    %376 = vmatpush1.msra.mxu0 0.0
    %377 = vmatprep.subr.mxu0 0.0
    %378 = vmatpush1.msra.mxu0 0.0
    %379 = vmatprep.subr.mxu0 0.0
    %380 = vmatpush1.msra.mxu0 0.0
    %381 = vmatprep.subr.mxu0 0.0
    %382 = vmatpush1.msra.mxu0 0.0
    %383 = vmatprep.subr.mxu0 0.0
    %384 = vmatpush1.msra.mxu0 0.0
    %385 = vmatprep.subr.mxu0 0.0
    %386 = vmatpush1.msra.mxu0 0.0
    %387 = vmatprep.subr.mxu0 0.0
    %388 = vmatpush1.msra.mxu0 0.0
    %389 = vmatprep.subr.mxu0 0.0
    %390 = vmatpush1.msra.mxu0 0.0
    %391 = vmatprep.mubr.f32.mxu0 0.0
    %392 = vmatmul.mubr.f32.gmra.mrb[0].mxu0 %v325
    %v393 = vpop.f32.mrb[0].mxu0
    %v394 = vadd.f32 0.0, %v393
    %v395 = vpop.f32.mrb[0].mxu0
    %396 = vdwg.mxu0
    %v397 = vld [vmem:[#allocation2] sm:$0x3]
    %v398 = vadd.f32 %v397, %v247
    %v400 = vsel %vm176, %v398, 0
    %402 = vmatprep.subr.mxu0 0.0
    %403 = vmatpush1.msra.mxu0 %v154
    %404 = vmatprep.subr.mxu0 0.0
    %405 = vmatpush1.msra.mxu0 %v155
    %406 = vmatprep.subr.mxu0 0.0
    %407 = vmatpush1.msra.mxu0 %v156
    %408 = vmatprep.subr.mxu0 0.0
    %409 = vmatpush1.msra.mxu0 %v157
    %410 = vmatprep.subr.mxu0 0.0
    %411 = vmatpush1.msra.mxu0 0.0
    %412 = vmatprep.subr.mxu0 0.0
    %413 = vmatpush1.msra.mxu0 0.0
    %414 = vmatprep.subr.mxu0 0.0
    %415 = vmatpush1.msra.mxu0 0.0
    %416 = vmatprep.subr.mxu0 0.0
    %417 = vmatpush1.msra.mxu0 0.0
    %418 = vmatprep.subr.mxu0 0.0
    %419 = vmatpush1.msra.mxu0 0.0
    %420 = vmatprep.subr.mxu0 0.0
    %421 = vmatpush1.msra.mxu0 0.0
    %422 = vmatprep.subr.mxu0 0.0
    %423 = vmatpush1.msra.mxu0 0.0
    %424 = vmatprep.subr.mxu0 0.0
    %425 = vmatpush1.msra.mxu0 0.0
    %426 = vmatprep.subr.mxu0 0.0
    %427 = vmatpush1.msra.mxu0 0.0
    %428 = vmatprep.subr.mxu0 0.0
    %429 = vmatpush1.msra.mxu0 0.0
    %430 = vmatprep.subr.mxu0 0.0
    %431 = vmatpush1.msra.mxu0 0.0
    %432 = vmatprep.subr.mxu0 0.0
    %433 = vmatpush1.msra.mxu0 0.0
    %434 = vmatprep.subr.mxu0 0.0
    %435 = vmatpush1.msra.mxu0 0.0
    %436 = vmatprep.subr.mxu0 0.0
    %437 = vmatpush1.msra.mxu0 0.0
    %438 = vmatprep.subr.mxu0 0.0
    %439 = vmatpush1.msra.mxu0 0.0
    %440 = vmatprep.subr.mxu0 0.0
    %441 = vmatpush1.msra.mxu0 0.0
    %442 = vmatprep.subr.mxu0 0.0
    %443 = vmatpush1.msra.mxu0 0.0
    %444 = vmatprep.subr.mxu0 0.0
    %445 = vmatpush1.msra.mxu0 0.0
    %446 = vmatprep.subr.mxu0 0.0
    %447 = vmatpush1.msra.mxu0 0.0
    %448 = vmatprep.subr.mxu0 0.0
    %449 = vmatpush1.msra.mxu0 0.0
    %450 = vmatprep.subr.mxu0 0.0
    %451 = vmatpush1.msra.mxu0 0.0
    %452 = vmatprep.subr.mxu0 0.0
    %453 = vmatpush1.msra.mxu0 0.0
    %454 = vmatprep.subr.mxu0 0.0
    %455 = vmatpush1.msra.mxu0 0.0
    %456 = vmatprep.subr.mxu0 0.0
    %457 = vmatpush1.msra.mxu0 0.0
    %458 = vmatprep.subr.mxu0 0.0
    %459 = vmatpush1.msra.mxu0 0.0
    %460 = vmatprep.subr.mxu0 0.0
    %461 = vmatpush1.msra.mxu0 0.0
    %462 = vmatprep.subr.mxu0 0.0
    %463 = vmatpush1.msra.mxu0 0.0
    %464 = vmatprep.subr.mxu0 0.0
    %465 = vmatpush1.msra.mxu0 0.0
    %466 = vmatprep.mubr.f32.mxu0 0.0
    %467 = vmatmul.mubr.f32.gmra.mrb[0].mxu0 %v400
    %v468 = vpop.f32.mrb[0].mxu0
    %v469 = vadd.f32 %v320, %v468
    %v470 = vpop.f32.mrb[0].mxu0
    %471 = vdwg.mxu0
    %v473 = vlaneseq
    %v474 = vshrl.u32 %v473, 7
    %v475 = vsub.s32 0, %v474
    %v476 = vrot.slane %v162, %v475
    %v478 = vadd.f32 %v469, %v476
    %v479 = vxor.u32 %v478, 2147483648
    %v480 = vmul.f32 %v479, 1.442695
    %v481 = vpow.pop %v480
    %v482 = vadd.f32 %v481, 1.0
    %v483 = vrcp.pop %v482
    %v484 = vmul.f32 1.0, %v483
    %v485 = vsub.f32 %v398, %v173
    %v486 = vmul.f32 %v485, %v484
    %v487 = vadd.f32 %v173, %v486
    %vm488 = vcmp.gt.f32.partialorder %v487, 0.5
    %v489 = vsel %vm488, 1, 0
    %v490 = vcvt.s32.f32 %v489
    %v491 = vsub.f32 1.0, %v490
    %v492 = vmul.f32 %v491, %v487
    %v494 = vlaneseq
    %v495 = vshrl.u32 %v494, 7
    %v496 = vsub.s32 0, %v495
    %v497 = vrot.slane %v167, %v496
    %v500 = vsel %vm176, %v490, 0
    %502 = vmatprep.subr.mxu0 0.0
    %503 = vmatpush1.msra.mxu0 %v163
    %504 = vmatprep.subr.mxu0 0.0
    %505 = vmatpush1.msra.mxu0 %v164
    %506 = vmatprep.subr.mxu0 0.0
    %507 = vmatpush1.msra.mxu0 %v165
    %508 = vmatprep.subr.mxu0 0.0
    %509 = vmatpush1.msra.mxu0 %v166
    %510 = vmatprep.subr.mxu0 0.0
    %511 = vmatpush1.msra.mxu0 0.0
    %512 = vmatprep.subr.mxu0 0.0
    %513 = vmatpush1.msra.mxu0 0.0
    %514 = vmatprep.subr.mxu0 0.0
    %515 = vmatpush1.msra.mxu0 0.0
    %516 = vmatprep.subr.mxu0 0.0
    %517 = vmatpush1.msra.mxu0 0.0
    %518 = vmatprep.subr.mxu0 0.0
    %519 = vmatpush1.msra.mxu0 0.0
    %520 = vmatprep.subr.mxu0 0.0
    %521 = vmatpush1.msra.mxu0 0.0
    %522 = vmatprep.subr.mxu0 0.0
    %523 = vmatpush1.msra.mxu0 0.0
    %524 = vmatprep.subr.mxu0 0.0
    %525 = vmatpush1.msra.mxu0 0.0
    %526 = vmatprep.subr.mxu0 0.0
    %527 = vmatpush1.msra.mxu0 0.0
    %528 = vmatprep.subr.mxu0 0.0
    %529 = vmatpush1.msra.mxu0 0.0
    %530 = vmatprep.subr.mxu0 0.0
    %531 = vmatpush1.msra.mxu0 0.0
    %532 = vmatprep.subr.mxu0 0.0
    %533 = vmatpush1.msra.mxu0 0.0
    %534 = vmatprep.subr.mxu0 0.0
    %535 = vmatpush1.msra.mxu0 0.0
    %536 = vmatprep.subr.mxu0 0.0
    %537 = vmatpush1.msra.mxu0 0.0
    %538 = vmatprep.subr.mxu0 0.0
    %539 = vmatpush1.msra.mxu0 0.0
    %540 = vmatprep.subr.mxu0 0.0
    %541 = vmatpush1.msra.mxu0 0.0
    %542 = vmatprep.subr.mxu0 0.0
    %543 = vmatpush1.msra.mxu0 0.0
    %544 = vmatprep.subr.mxu0 0.0
    %545 = vmatpush1.msra.mxu0 0.0
    %546 = vmatprep.subr.mxu0 0.0
    %547 = vmatpush1.msra.mxu0 0.0
    %548 = vmatprep.subr.mxu0 0.0
    %549 = vmatpush1.msra.mxu0 0.0
    %550 = vmatprep.subr.mxu0 0.0
    %551 = vmatpush1.msra.mxu0 0.0
    %552 = vmatprep.subr.mxu0 0.0
    %553 = vmatpush1.msra.mxu0 0.0
    %554 = vmatprep.subr.mxu0 0.0
    %555 = vmatpush1.msra.mxu0 0.0
    %556 = vmatprep.subr.mxu0 0.0
    %557 = vmatpush1.msra.mxu0 0.0
    %558 = vmatprep.subr.mxu0 0.0
    %559 = vmatpush1.msra.mxu0 0.0
    %560 = vmatprep.subr.mxu0 0.0
    %561 = vmatpush1.msra.mxu0 0.0
    %562 = vmatprep.subr.mxu0 0.0
    %563 = vmatpush1.msra.mxu0 0.0
    %564 = vmatprep.subr.mxu0 0.0
    %565 = vmatpush1.msra.mxu0 0.0
    %566 = vmatprep.mubr.f32.mxu0 0.0
    %567 = vmatmul.mubr.f32.gmra.mrb[0].mxu0 %v500
    %v568 = vpop.f32.mrb[0].mxu0
    %v569 = vadd.f32 %v497, %v568
    %v570 = vpop.f32.mrb[0].mxu0
    %571 = vdwg.mxu0
    %v573 = vsel %vm323, %v569, 0
    %575 = vmatprep.subr.mxu0 0.0
    %576 = vmatpush1.msra.mxu0 %v168
    %577 = vmatprep.subr.mxu0 0.0
    %578 = vmatpush1.msra.mxu0 %v169
    %579 = vmatprep.subr.mxu0 0.0
    %580 = vmatpush1.msra.mxu0 0.0
    %581 = vmatprep.subr.mxu0 0.0
    %582 = vmatpush1.msra.mxu0 0.0
    %583 = vmatprep.subr.mxu0 0.0
    %584 = vmatpush1.msra.mxu0 0.0
    %585 = vmatprep.subr.mxu0 0.0
    %586 = vmatpush1.msra.mxu0 0.0
    %587 = vmatprep.subr.mxu0 0.0
    %588 = vmatpush1.msra.mxu0 0.0
    %589 = vmatprep.subr.mxu0 0.0
    %590 = vmatpush1.msra.mxu0 0.0
    %591 = vmatprep.subr.mxu0 0.0
    %592 = vmatpush1.msra.mxu0 0.0
    %593 = vmatprep.subr.mxu0 0.0
    %594 = vmatpush1.msra.mxu0 0.0
    %595 = vmatprep.subr.mxu0 0.0
    %596 = vmatpush1.msra.mxu0 0.0
    %597 = vmatprep.subr.mxu0 0.0
    %598 = vmatpush1.msra.mxu0 0.0
    %599 = vmatprep.subr.mxu0 0.0
    %600 = vmatpush1.msra.mxu0 0.0
    %601 = vmatprep.subr.mxu0 0.0
    %602 = vmatpush1.msra.mxu0 0.0
    %603 = vmatprep.subr.mxu0 0.0
    %604 = vmatpush1.msra.mxu0 0.0
    %605 = vmatprep.subr.mxu0 0.0
    %606 = vmatpush1.msra.mxu0 0.0
    %607 = vmatprep.subr.mxu0 0.0
    %608 = vmatpush1.msra.mxu0 0.0
    %609 = vmatprep.subr.mxu0 0.0
    %610 = vmatpush1.msra.mxu0 0.0
    %611 = vmatprep.subr.mxu0 0.0
    %612 = vmatpush1.msra.mxu0 0.0
    %613 = vmatprep.subr.mxu0 0.0
    %614 = vmatpush1.msra.mxu0 0.0
    %615 = vmatprep.subr.mxu0 0.0
    %616 = vmatpush1.msra.mxu0 0.0
    %617 = vmatprep.subr.mxu0 0.0
    %618 = vmatpush1.msra.mxu0 0.0
    %619 = vmatprep.subr.mxu0 0.0
    %620 = vmatpush1.msra.mxu0 0.0
    %621 = vmatprep.subr.mxu0 0.0
    %622 = vmatpush1.msra.mxu0 0.0
    %623 = vmatprep.subr.mxu0 0.0
    %624 = vmatpush1.msra.mxu0 0.0
    %625 = vmatprep.subr.mxu0 0.0
    %626 = vmatpush1.msra.mxu0 0.0
    %627 = vmatprep.subr.mxu0 0.0
    %628 = vmatpush1.msra.mxu0 0.0
    %629 = vmatprep.subr.mxu0 0.0
    %630 = vmatpush1.msra.mxu0 0.0
    %631 = vmatprep.subr.mxu0 0.0
    %632 = vmatpush1.msra.mxu0 0.0
    %633 = vmatprep.subr.mxu0 0.0
    %634 = vmatpush1.msra.mxu0 0.0
    %635 = vmatprep.subr.mxu0 0.0
    %636 = vmatpush1.msra.mxu0 0.0
    %637 = vmatprep.subr.mxu0 0.0
    %638 = vmatpush1.msra.mxu0 0.0
    %639 = vmatprep.mubr.f32.mxu0 0.0
    %640 = vmatmul.mubr.f32.gmra.mrb[0].mxu0 %v573
    %v641 = vpop.f32.mrb[0].mxu0
    %v642 = vadd.f32 %v394, %v641
    %v643 = vpop.f32.mrb[0].mxu0
    %644 = vdwg.mxu0
    %v646 = vlaneseq
    %v647 = vshrl.u32 %v646, 7
    %v648 = vsub.s32 0, %v647
    %v649 = vrot.slane %v172, %v648
    %v651 = vadd.f32 %v642, %v649
    %v652 = vxor.u32 %v651, 2147483648
    %v653 = vmul.f32 %v652, 1.442695
    %v654 = vpow.pop %v653
    %v655 = vadd.f32 %v654, 1.0
    %v656 = vrcp.pop %v655
    %v657 = vmul.f32 1.0, %v656
    %v658 = vsub.f32 %v569, %v175
    %v659 = vmul.f32 %v658, %v657
    %v660 = vadd.f32 %v175, %v659
    %vm661 = vcmask 123904
    %662 = vst.msk [vmem:[#allocation14] sm:$0x3] %vm661, %v660
    %663 = vmatprep.subr.mxu0 0.0
    %664 = vmatpush1.msra.mxu0 %v150
    %665 = vmatprep.subr.mxu0 0.0
    %666 = vmatpush1.msra.mxu0 %v151
    %667 = vmatprep.subr.mxu0 0.0
    %668 = vmatpush1.msra.mxu0 %v152
    %669 = vmatprep.subr.mxu0 0.0
    %670 = vmatpush1.msra.mxu0 %v153
    %671 = vmatprep.subr.mxu0 0.0
    %672 = vmatpush1.msra.mxu0 0.0
    %673 = vmatprep.subr.mxu0 0.0
    %674 = vmatpush1.msra.mxu0 0.0
    %675 = vmatprep.subr.mxu0 0.0
    %676 = vmatpush1.msra.mxu0 0.0
    %677 = vmatprep.subr.mxu0 0.0
    %678 = vmatpush1.msra.mxu0 0.0
    %679 = vmatprep.subr.mxu0 0.0
    %680 = vmatpush1.msra.mxu0 0.0
    %681 = vmatprep.subr.mxu0 0.0
    %682 = vmatpush1.msra.mxu0 0.0
    %683 = vmatprep.subr.mxu0 0.0
    %684 = vmatpush1.msra.mxu0 0.0
    %685 = vmatprep.subr.mxu0 0.0
    %686 = vmatpush1.msra.mxu0 0.0
    %687 = vmatprep.subr.mxu0 0.0
    %688 = vmatpush1.msra.mxu0 0.0
    %689 = vmatprep.subr.mxu0 0.0
    %690 = vmatpush1.msra.mxu0 0.0
    %691 = vmatprep.subr.mxu0 0.0
    %692 = vmatpush1.msra.mxu0 0.0
    %693 = vmatprep.subr.mxu0 0.0
    %694 = vmatpush1.msra.mxu0 0.0
    %695 = vmatprep.subr.mxu0 0.0
    %696 = vmatpush1.msra.mxu0 0.0
    %697 = vmatprep.subr.mxu0 0.0
    %698 = vmatpush1.msra.mxu0 0.0
    %699 = vmatprep.subr.mxu0 0.0
    %700 = vmatpush1.msra.mxu0 0.0
    %701 = vmatprep.subr.mxu0 0.0
    %702 = vmatpush1.msra.mxu0 0.0
    %703 = vmatprep.subr.mxu0 0.0
    %704 = vmatpush1.msra.mxu0 0.0
    %705 = vmatprep.subr.mxu0 0.0
    %706 = vmatpush1.msra.mxu0 0.0
    %707 = vmatprep.subr.mxu0 0.0
    %708 = vmatpush1.msra.mxu0 0.0
    %709 = vmatprep.subr.mxu0 0.0
    %710 = vmatpush1.msra.mxu0 0.0
    %711 = vmatprep.subr.mxu0 0.0
    %712 = vmatpush1.msra.mxu0 0.0
    %713 = vmatprep.subr.mxu0 0.0
    %714 = vmatpush1.msra.mxu0 0.0
    %715 = vmatprep.subr.mxu0 0.0
    %716 = vmatpush1.msra.mxu0 0.0
    %717 = vmatprep.subr.mxu0 0.0
    %718 = vmatpush1.msra.mxu0 0.0
    %719 = vmatprep.subr.mxu0 0.0
    %720 = vmatpush1.msra.mxu0 0.0
    %721 = vmatprep.subr.mxu0 0.0
    %722 = vmatpush1.msra.mxu0 0.0
    %723 = vmatprep.subr.mxu0 0.0
    %724 = vmatpush1.msra.mxu0 0.0
    %725 = vmatprep.subr.mxu0 0.0
    %726 = vmatpush1.msra.mxu0 0.0
    %727 = vmatprep.mubr.f32.mxu0 0.0
    %728 = vmatmul.mubr.f32.gmra.mrb[0].mxu0 %v500
    %v729 = vpop.f32.mrb[0].mxu0
    %v730 = vadd.f32 0.0, %v729
    %v731 = vpop.f32.mrb[0].mxu0
    %732 = vdwg.mxu0
    %v734 = vsel %vm176, %v492, 0
    %736 = vmatprep.subr.mxu0 0.0
    %737 = vmatpush1.msra.mxu0 %v158
    %738 = vmatprep.subr.mxu0 0.0
    %739 = vmatpush1.msra.mxu0 %v159
    %740 = vmatprep.subr.mxu0 0.0
    %741 = vmatpush1.msra.mxu0 %v160
    %742 = vmatprep.subr.mxu0 0.0
    %743 = vmatpush1.msra.mxu0 %v161
    %744 = vmatprep.subr.mxu0 0.0
    %745 = vmatpush1.msra.mxu0 0.0
    %746 = vmatprep.subr.mxu0 0.0
    %747 = vmatpush1.msra.mxu0 0.0
    %748 = vmatprep.subr.mxu0 0.0
    %749 = vmatpush1.msra.mxu0 0.0
    %750 = vmatprep.subr.mxu0 0.0
    %751 = vmatpush1.msra.mxu0 0.0
    %752 = vmatprep.subr.mxu0 0.0
    %753 = vmatpush1.msra.mxu0 0.0
    %754 = vmatprep.subr.mxu0 0.0
    %755 = vmatpush1.msra.mxu0 0.0
    %756 = vmatprep.subr.mxu0 0.0
    %757 = vmatpush1.msra.mxu0 0.0
    %758 = vmatprep.subr.mxu0 0.0
    %759 = vmatpush1.msra.mxu0 0.0
    %760 = vmatprep.subr.mxu0 0.0
    %761 = vmatpush1.msra.mxu0 0.0
    %762 = vmatprep.subr.mxu0 0.0
    %763 = vmatpush1.msra.mxu0 0.0
    %764 = vmatprep.subr.mxu0 0.0
    %765 = vmatpush1.msra.mxu0 0.0
    %766 = vmatprep.subr.mxu0 0.0
    %767 = vmatpush1.msra.mxu0 0.0
    %768 = vmatprep.subr.mxu0 0.0
    %769 = vmatpush1.msra.mxu0 0.0
    %770 = vmatprep.subr.mxu0 0.0
    %771 = vmatpush1.msra.mxu0 0.0
    %772 = vmatprep.subr.mxu0 0.0
    %773 = vmatpush1.msra.mxu0 0.0
    %774 = vmatprep.subr.mxu0 0.0
    %775 = vmatpush1.msra.mxu0 0.0
    %776 = vmatprep.subr.mxu0 0.0
    %777 = vmatpush1.msra.mxu0 0.0
    %778 = vmatprep.subr.mxu0 0.0
    %779 = vmatpush1.msra.mxu0 0.0
    %780 = vmatprep.subr.mxu0 0.0
    %781 = vmatpush1.msra.mxu0 0.0
    %782 = vmatprep.subr.mxu0 0.0
    %783 = vmatpush1.msra.mxu0 0.0
    %784 = vmatprep.subr.mxu0 0.0
    %785 = vmatpush1.msra.mxu0 0.0
    %786 = vmatprep.subr.mxu0 0.0
    %787 = vmatpush1.msra.mxu0 0.0
    %788 = vmatprep.subr.mxu0 0.0
    %789 = vmatpush1.msra.mxu0 0.0
    %790 = vmatprep.subr.mxu0 0.0
    %791 = vmatpush1.msra.mxu0 0.0
    %792 = vmatprep.subr.mxu0 0.0
    %793 = vmatpush1.msra.mxu0 0.0
    %794 = vmatprep.subr.mxu0 0.0
    %795 = vmatpush1.msra.mxu0 0.0
    %796 = vmatprep.subr.mxu0 0.0
    %797 = vmatpush1.msra.mxu0 0.0
    %798 = vmatprep.subr.mxu0 0.0
    %799 = vmatpush1.msra.mxu0 0.0
    %800 = vmatprep.mubr.f32.mxu0 0.0
    %801 = vmatmul.mubr.f32.gmra.mrb[0].mxu0 %v734
    %v802 = vpop.f32.mrb[0].mxu0
    %v803 = vadd.f32 0.0, %v802
    %v804 = vpop.f32.mrb[0].mxu0
    %805 = vdwg.mxu0
    %v807 = vsel %vm323, %v660, 0
    %809 = vmatprep.subr.mxu0 0.0
    %810 = vmatpush1.msra.mxu0 %v170
    %811 = vmatprep.subr.mxu0 0.0
    %812 = vmatpush1.msra.mxu0 %v171
    %813 = vmatprep.subr.mxu0 0.0
    %814 = vmatpush1.msra.mxu0 0.0
    %815 = vmatprep.subr.mxu0 0.0
    %816 = vmatpush1.msra.mxu0 0.0
    %817 = vmatprep.subr.mxu0 0.0
    %818 = vmatpush1.msra.mxu0 0.0
    %819 = vmatprep.subr.mxu0 0.0
    %820 = vmatpush1.msra.mxu0 0.0
    %821 = vmatprep.subr.mxu0 0.0
    %822 = vmatpush1.msra.mxu0 0.0
    %823 = vmatprep.subr.mxu0 0.0
    %824 = vmatpush1.msra.mxu0 0.0
    %825 = vmatprep.subr.mxu0 0.0
    %826 = vmatpush1.msra.mxu0 0.0
    %827 = vmatprep.subr.mxu0 0.0
    %828 = vmatpush1.msra.mxu0 0.0
    %829 = vmatprep.subr.mxu0 0.0
    %830 = vmatpush1.msra.mxu0 0.0
    %831 = vmatprep.subr.mxu0 0.0
    %832 = vmatpush1.msra.mxu0 0.0
    %833 = vmatprep.subr.mxu0 0.0
    %834 = vmatpush1.msra.mxu0 0.0
    %835 = vmatprep.subr.mxu0 0.0
    %836 = vmatpush1.msra.mxu0 0.0
    %837 = vmatprep.subr.mxu0 0.0
    %838 = vmatpush1.msra.mxu0 0.0
    %839 = vmatprep.subr.mxu0 0.0
    %840 = vmatpush1.msra.mxu0 0.0
    %841 = vmatprep.subr.mxu0 0.0
    %842 = vmatpush1.msra.mxu0 0.0
    %843 = vmatprep.subr.mxu0 0.0
    %844 = vmatpush1.msra.mxu0 0.0
    %845 = vmatprep.subr.mxu0 0.0
    %846 = vmatpush1.msra.mxu0 0.0
    %847 = vmatprep.subr.mxu0 0.0
    %848 = vmatpush1.msra.mxu0 0.0
    %849 = vmatprep.subr.mxu0 0.0
    %850 = vmatpush1.msra.mxu0 0.0
    %851 = vmatprep.subr.mxu0 0.0
    %852 = vmatpush1.msra.mxu0 0.0
    %853 = vmatprep.subr.mxu0 0.0
    %854 = vmatpush1.msra.mxu0 0.0
    %855 = vmatprep.subr.mxu0 0.0
    %856 = vmatpush1.msra.mxu0 0.0
    %857 = vmatprep.subr.mxu0 0.0
    %858 = vmatpush1.msra.mxu0 0.0
    %859 = vmatprep.subr.mxu0 0.0
    %860 = vmatpush1.msra.mxu0 0.0
    %861 = vmatprep.subr.mxu0 0.0
    %862 = vmatpush1.msra.mxu0 0.0
    %863 = vmatprep.subr.mxu0 0.0
    %864 = vmatpush1.msra.mxu0 0.0
    %865 = vmatprep.subr.mxu0 0.0
    %866 = vmatpush1.msra.mxu0 0.0
    %867 = vmatprep.subr.mxu0 0.0
    %868 = vmatpush1.msra.mxu0 0.0
    %869 = vmatprep.subr.mxu0 0.0
    %870 = vmatpush1.msra.mxu0 0.0
    %871 = vmatprep.subr.mxu0 0.0
    %872 = vmatpush1.msra.mxu0 0.0
    %873 = vmatprep.mubr.f32.mxu0 0.0
    %874 = vmatmul.mubr.f32.gmra.mrb[0].mxu0 %v807
    %v875 = vpop.f32.mrb[0].mxu0
    %v876 = vadd.f32 0.0, %v875
    %v877 = vpop.f32.mrb[0].mxu0
    %878 = vdwg.mxu0
    %s879 = scalar_lea.vmem [#allocation2], 2
    %v880 = vld [vmem:[%s879] sm:$0x3]
    %v881 = vadd.f32 %v880, %v730
    %v883 = vsel %vm176, %v881, 0
    %885 = vmatprep.subr.mxu0 0.0
    %886 = vmatpush1.msra.mxu0 %v154
    %887 = vmatprep.subr.mxu0 0.0
    %888 = vmatpush1.msra.mxu0 %v155
    %889 = vmatprep.subr.mxu0 0.0
    %890 = vmatpush1.msra.mxu0 %v156
    %891 = vmatprep.subr.mxu0 0.0
    %892 = vmatpush1.msra.mxu0 %v157
    %893 = vmatprep.subr.mxu0 0.0
    %894 = vmatpush1.msra.mxu0 0.0
    %895 = vmatprep.subr.mxu0 0.0
    %896 = vmatpush1.msra.mxu0 0.0
    %897 = vmatprep.subr.mxu0 0.0
    %898 = vmatpush1.msra.mxu0 0.0
    %899 = vmatprep.subr.mxu0 0.0
    %900 = vmatpush1.msra.mxu0 0.0
    %901 = vmatprep.subr.mxu0 0.0
    %902 = vmatpush1.msra.mxu0 0.0
    %903 = vmatprep.subr.mxu0 0.0
    %904 = vmatpush1.msra.mxu0 0.0
    %905 = vmatprep.subr.mxu0 0.0
    %906 = vmatpush1.msra.mxu0 0.0
    %907 = vmatprep.subr.mxu0 0.0
    %908 = vmatpush1.msra.mxu0 0.0
    %909 = vmatprep.subr.mxu0 0.0
    %910 = vmatpush1.msra.mxu0 0.0
    %911 = vmatprep.subr.mxu0 0.0
    %912 = vmatpush1.msra.mxu0 0.0
    %913 = vmatprep.subr.mxu0 0.0
    %914 = vmatpush1.msra.mxu0 0.0
    %915 = vmatprep.subr.mxu0 0.0
    %916 = vmatpush1.msra.mxu0 0.0
    %917 = vmatprep.subr.mxu0 0.0
    %918 = vmatpush1.msra.mxu0 0.0
    %919 = vmatprep.subr.mxu0 0.0
    %920 = vmatpush1.msra.mxu0 0.0
    %921 = vmatprep.subr.mxu0 0.0
    %922 = vmatpush1.msra.mxu0 0.0
    %923 = vmatprep.subr.mxu0 0.0
    %924 = vmatpush1.msra.mxu0 0.0
    %925 = vmatprep.subr.mxu0 0.0
    %926 = vmatpush1.msra.mxu0 0.0
    %927 = vmatprep.subr.mxu0 0.0
    %928 = vmatpush1.msra.mxu0 0.0
    %929 = vmatprep.subr.mxu0 0.0
    %930 = vmatpush1.msra.mxu0 0.0
    %931 = vmatprep.subr.mxu0 0.0
    %932 = vmatpush1.msra.mxu0 0.0
    %933 = vmatprep.subr.mxu0 0.0
    %934 = vmatpush1.msra.mxu0 0.0
    %935 = vmatprep.subr.mxu0 0.0
    %936 = vmatpush1.msra.mxu0 0.0
    %937 = vmatprep.subr.mxu0 0.0
    %938 = vmatpush1.msra.mxu0 0.0
    %939 = vmatprep.subr.mxu0 0.0
    %940 = vmatpush1.msra.mxu0 0.0
    %941 = vmatprep.subr.mxu0 0.0
    %942 = vmatpush1.msra.mxu0 0.0
    %943 = vmatprep.subr.mxu0 0.0
    %944 = vmatpush1.msra.mxu0 0.0
    %945 = vmatprep.subr.mxu0 0.0
    %946 = vmatpush1.msra.mxu0 0.0
    %947 = vmatprep.subr.mxu0 0.0
    %948 = vmatpush1.msra.mxu0 0.0
    %949 = vmatprep.mubr.f32.mxu0 0.0
    %950 = vmatmul.mubr.f32.gmra.mrb[0].mxu0 %v883
    %v951 = vpop.f32.mrb[0].mxu0
    %v952 = vadd.f32 %v803, %v951
    %v953 = vpop.f32.mrb[0].mxu0
    %954 = vdwg.mxu0
    %v955 = vadd.f32 %v952, %v476
    %v956 = vxor.u32 %v955, 2147483648
    %v957 = vmul.f32 %v956, 1.442695
    %v958 = vpow.pop %v957
    %v959 = vadd.f32 %v958, 1.0
    %v960 = vrcp.pop %v959
    %v961 = vmul.f32 1.0, %v960
    %v962 = vsub.f32 %v881, %v492
    %v963 = vmul.f32 %v962, %v961
    %v964 = vadd.f32 %v492, %v963
    %vm965 = vcmp.gt.f32.partialorder %v964, 0.5
    %v966 = vsel %vm965, 1, 0
    %v967 = vcvt.s32.f32 %v966
    %v968 = vsub.f32 1.0, %v967
    %v969 = vmul.f32 %v968, %v964
    %v971 = vsel %vm176, %v967, 0
    %973 = vmatprep.subr.mxu0 0.0
    %974 = vmatpush1.msra.mxu0 %v163
    %975 = vmatprep.subr.mxu0 0.0
    %976 = vmatpush1.msra.mxu0 %v164
    %977 = vmatprep.subr.mxu0 0.0
    %978 = vmatpush1.msra.mxu0 %v165
    %979 = vmatprep.subr.mxu0 0.0
    %980 = vmatpush1.msra.mxu0 %v166
    %981 = vmatprep.subr.mxu0 0.0
    %982 = vmatpush1.msra.mxu0 0.0
    %983 = vmatprep.subr.mxu0 0.0
    %984 = vmatpush1.msra.mxu0 0.0
    %985 = vmatprep.subr.mxu0 0.0
    %986 = vmatpush1.msra.mxu0 0.0
    %987 = vmatprep.subr.mxu0 0.0
    %988 = vmatpush1.msra.mxu0 0.0
    %989 = vmatprep.subr.mxu0 0.0
    %990 = vmatpush1.msra.mxu0 0.0
    %991 = vmatprep.subr.mxu0 0.0
    %992 = vmatpush1.msra.mxu0 0.0
    %993 = vmatprep.subr.mxu0 0.0
    %994 = vmatpush1.msra.mxu0 0.0
    %995 = vmatprep.subr.mxu0 0.0
    %996 = vmatpush1.msra.mxu0 0.0
    %997 = vmatprep.subr.mxu0 0.0
    %998 = vmatpush1.msra.mxu0 0.0
    %999 = vmatprep.subr.mxu0 0.0
    %1000 = vmatpush1.msra.mxu0 0.0
    %1001 = vmatprep.subr.mxu0 0.0
    %1002 = vmatpush1.msra.mxu0 0.0
    %1003 = vmatprep.subr.mxu0 0.0
    %1004 = vmatpush1.msra.mxu0 0.0
    %1005 = vmatprep.subr.mxu0 0.0
    %1006 = vmatpush1.msra.mxu0 0.0
    %1007 = vmatprep.subr.mxu0 0.0
    %1008 = vmatpush1.msra.mxu0 0.0
    %1009 = vmatprep.subr.mxu0 0.0
    %1010 = vmatpush1.msra.mxu0 0.0
    %1011 = vmatprep.subr.mxu0 0.0
    %1012 = vmatpush1.msra.mxu0 0.0
    %1013 = vmatprep.subr.mxu0 0.0
    %1014 = vmatpush1.msra.mxu0 0.0
    %1015 = vmatprep.subr.mxu0 0.0
    %1016 = vmatpush1.msra.mxu0 0.0
    %1017 = vmatprep.subr.mxu0 0.0
    %1018 = vmatpush1.msra.mxu0 0.0
    %1019 = vmatprep.subr.mxu0 0.0
    %1020 = vmatpush1.msra.mxu0 0.0
    %1021 = vmatprep.subr.mxu0 0.0
    %1022 = vmatpush1.msra.mxu0 0.0
    %1023 = vmatprep.subr.mxu0 0.0
    %1024 = vmatpush1.msra.mxu0 0.0
    %1025 = vmatprep.subr.mxu0 0.0
    %1026 = vmatpush1.msra.mxu0 0.0
    %1027 = vmatprep.subr.mxu0 0.0
    %1028 = vmatpush1.msra.mxu0 0.0
    %1029 = vmatprep.subr.mxu0 0.0
    %1030 = vmatpush1.msra.mxu0 0.0
    %1031 = vmatprep.subr.mxu0 0.0
    %1032 = vmatpush1.msra.mxu0 0.0
    %1033 = vmatprep.subr.mxu0 0.0
    %1034 = vmatpush1.msra.mxu0 0.0
    %1035 = vmatprep.subr.mxu0 0.0
    %1036 = vmatpush1.msra.mxu0 0.0
    %1037 = vmatprep.mubr.f32.mxu0 0.0
    %1038 = vmatmul.mubr.f32.gmra.mrb[0].mxu0 %v971
    %v1039 = vpop.f32.mrb[0].mxu0
    %v1040 = vadd.f32 %v497, %v1039
    %v1041 = vpop.f32.mrb[0].mxu0
    %1042 = vdwg.mxu0
    %v1044 = vsel %vm323, %v1040, 0
    %1046 = vmatprep.subr.mxu0 0.0
    %1047 = vmatpush1.msra.mxu0 %v168
    %1048 = vmatprep.subr.mxu0 0.0
    %1049 = vmatpush1.msra.mxu0 %v169
    %1050 = vmatprep.subr.mxu0 0.0
    %1051 = vmatpush1.msra.mxu0 0.0
    %1052 = vmatprep.subr.mxu0 0.0
    %1053 = vmatpush1.msra.mxu0 0.0
    %1054 = vmatprep.subr.mxu0 0.0
    %1055 = vmatpush1.msra.mxu0 0.0
    %1056 = vmatprep.subr.mxu0 0.0
    %1057 = vmatpush1.msra.mxu0 0.0
    %1058 = vmatprep.subr.mxu0 0.0
    %1059 = vmatpush1.msra.mxu0 0.0
    %1060 = vmatprep.subr.mxu0 0.0
    %1061 = vmatpush1.msra.mxu0 0.0
    %1062 = vmatprep.subr.mxu0 0.0
    %1063 = vmatpush1.msra.mxu0 0.0
    %1064 = vmatprep.subr.mxu0 0.0
    %1065 = vmatpush1.msra.mxu0 0.0
    %1066 = vmatprep.subr.mxu0 0.0
    %1067 = vmatpush1.msra.mxu0 0.0
    %1068 = vmatprep.subr.mxu0 0.0
    %1069 = vmatpush1.msra.mxu0 0.0
    %1070 = vmatprep.subr.mxu0 0.0
    %1071 = vmatpush1.msra.mxu0 0.0
    %1072 = vmatprep.subr.mxu0 0.0
    %1073 = vmatpush1.msra.mxu0 0.0
    %1074 = vmatprep.subr.mxu0 0.0
    %1075 = vmatpush1.msra.mxu0 0.0
    %1076 = vmatprep.subr.mxu0 0.0
    %1077 = vmatpush1.msra.mxu0 0.0
    %1078 = vmatprep.subr.mxu0 0.0
    %1079 = vmatpush1.msra.mxu0 0.0
    %1080 = vmatprep.subr.mxu0 0.0
    %1081 = vmatpush1.msra.mxu0 0.0
    %1082 = vmatprep.subr.mxu0 0.0
    %1083 = vmatpush1.msra.mxu0 0.0
    %1084 = vmatprep.subr.mxu0 0.0
    %1085 = vmatpush1.msra.mxu0 0.0
    %1086 = vmatprep.subr.mxu0 0.0
    %1087 = vmatpush1.msra.mxu0 0.0
    %1088 = vmatprep.subr.mxu0 0.0
    %1089 = vmatpush1.msra.mxu0 0.0
    %1090 = vmatprep.subr.mxu0 0.0
    %1091 = vmatpush1.msra.mxu0 0.0
    %1092 = vmatprep.subr.mxu0 0.0
    %1093 = vmatpush1.msra.mxu0 0.0
    %1094 = vmatprep.subr.mxu0 0.0
    %1095 = vmatpush1.msra.mxu0 0.0
    %1096 = vmatprep.subr.mxu0 0.0
    %1097 = vmatpush1.msra.mxu0 0.0
    %1098 = vmatprep.subr.mxu0 0.0
    %1099 = vmatpush1.msra.mxu0 0.0
    %1100 = vmatprep.subr.mxu0 0.0
    %1101 = vmatpush1.msra.mxu0 0.0
    %1102 = vmatprep.subr.mxu0 0.0
    %1103 = vmatpush1.msra.mxu0 0.0
    %1104 = vmatprep.subr.mxu0 0.0
    %1105 = vmatpush1.msra.mxu0 0.0
    %1106 = vmatprep.subr.mxu0 0.0
    %1107 = vmatpush1.msra.mxu0 0.0
    %1108 = vmatprep.subr.mxu0 0.0
    %1109 = vmatpush1.msra.mxu0 0.0
    %1110 = vmatprep.mubr.f32.mxu0 0.0
    %1111 = vmatmul.mubr.f32.gmra.mrb[0].mxu0 %v1044
    %v1112 = vpop.f32.mrb[0].mxu0
    %v1113 = vadd.f32 %v876, %v1112
    %v1114 = vpop.f32.mrb[0].mxu0
    %1115 = vdwg.mxu0
    %v1116 = vadd.f32 %v1113, %v649
    %v1117 = vxor.u32 %v1116, 2147483648
    %v1118 = vmul.f32 %v1117, 1.442695
    %v1119 = vpow.pop %v1118
    %v1120 = vadd.f32 %v1119, 1.0
    %v1121 = vrcp.pop %v1120
    %v1122 = vmul.f32 1.0, %v1121
    %v1123 = vsub.f32 %v1040, %v660
    %v1124 = vmul.f32 %v1123, %v1122
    %v1125 = vadd.f32 %v660, %v1124
    %s1126 = scalar_lea.vmem [#allocation14], 2
    %1127 = vst.msk [vmem:[%s1126] sm:$0x3] %vm661, %v1125
    %1128 = vmatprep.subr.mxu0 0.0
    %1129 = vmatpush1.msra.mxu0 %v150
    %1130 = vmatprep.subr.mxu0 0.0
    %1131 = vmatpush1.msra.mxu0 %v151
    %1132 = vmatprep.subr.mxu0 0.0
    %1133 = vmatpush1.msra.mxu0 %v152
    %1134 = vmatprep.subr.mxu0 0.0
    %1135 = vmatpush1.msra.mxu0 %v153
    %1136 = vmatprep.subr.mxu0 0.0
    %1137 = vmatpush1.msra.mxu0 0.0
    %1138 = vmatprep.subr.mxu0 0.0
    %1139 = vmatpush1.msra.mxu0 0.0
    %1140 = vmatprep.subr.mxu0 0.0
    %1141 = vmatpush1.msra.mxu0 0.0
    %1142 = vmatprep.subr.mxu0 0.0
    %1143 = vmatpush1.msra.mxu0 0.0
    %1144 = vmatprep.subr.mxu0 0.0
    %1145 = vmatpush1.msra.mxu0 0.0
    %1146 = vmatprep.subr.mxu0 0.0
    %1147 = vmatpush1.msra.mxu0 0.0
    %1148 = vmatprep.subr.mxu0 0.0
    %1149 = vmatpush1.msra.mxu0 0.0
    %1150 = vmatprep.subr.mxu0 0.0
    %1151 = vmatpush1.msra.mxu0 0.0
    %1152 = vmatprep.subr.mxu0 0.0
    %1153 = vmatpush1.msra.mxu0 0.0
    %1154 = vmatprep.subr.mxu0 0.0
    %1155 = vmatpush1.msra.mxu0 0.0
    %1156 = vmatprep.subr.mxu0 0.0
    %1157 = vmatpush1.msra.mxu0 0.0
    %1158 = vmatprep.subr.mxu0 0.0
    %1159 = vmatpush1.msra.mxu0 0.0
    %1160 = vmatprep.subr.mxu0 0.0
    %1161 = vmatpush1.msra.mxu0 0.0
    %1162 = vmatprep.subr.mxu0 0.0
    %1163 = vmatpush1.msra.mxu0 0.0
    %1164 = vmatprep.subr.mxu0 0.0
    %1165 = vmatpush1.msra.mxu0 0.0
    %1166 = vmatprep.subr.mxu0 0.0
    %1167 = vmatpush1.msra.mxu0 0.0
    %1168 = vmatprep.subr.mxu0 0.0
    %1169 = vmatpush1.msra.mxu0 0.0
    %1170 = vmatprep.subr.mxu0 0.0
    %1171 = vmatpush1.msra.mxu0 0.0
    %1172 = vmatprep.subr.mxu0 0.0
    %1173 = vmatpush1.msra.mxu0 0.0
    %1174 = vmatprep.subr.mxu0 0.0
    %1175 = vmatpush1.msra.mxu0 0.0
    %1176 = vmatprep.subr.mxu0 0.0
    %1177 = vmatpush1.msra.mxu0 0.0
    %1178 = vmatprep.subr.mxu0 0.0
    %1179 = vmatpush1.msra.mxu0 0.0
    %1180 = vmatprep.subr.mxu0 0.0
    %1181 = vmatpush1.msra.mxu0 0.0
    %1182 = vmatprep.subr.mxu0 0.0
    %1183 = vmatpush1.msra.mxu0 0.0
    %1184 = vmatprep.subr.mxu0 0.0
    %1185 = vmatpush1.msra.mxu0 0.0
    %1186 = vmatprep.subr.mxu0 0.0
    %1187 = vmatpush1.msra.mxu0 0.0
    %1188 = vmatprep.subr.mxu0 0.0
    %1189 = vmatpush1.msra.mxu0 0.0
    %1190 = vmatprep.subr.mxu0 0.0
    %1191 = vmatpush1.msra.mxu0 0.0
    %1192 = vmatprep.mubr.f32.mxu0 0.0
    %1193 = vmatmul.mubr.f32.gmra.mrb[0].mxu0 %v971
    %v1194 = vpop.f32.mrb[0].mxu0
    %v1195 = vadd.f32 0.0, %v1194
    %v1196 = vpop.f32.mrb[0].mxu0
    %1197 = vdwg.mxu0
    %v1199 = vsel %vm176, %v969, 0
    %1201 = vmatprep.subr.mxu0 0.0
    %1202 = vmatpush1.msra.mxu0 %v158
    %1203 = vmatprep.subr.mxu0 0.0
    %1204 = vmatpush1.msra.mxu0 %v159
    %1205 = vmatprep.subr.mxu0 0.0
    %1206 = vmatpush1.msra.mxu0 %v160
    %1207 = vmatprep.subr.mxu0 0.0
    %1208 = vmatpush1.msra.mxu0 %v161
    %1209 = vmatprep.subr.mxu0 0.0
    %1210 = vmatpush1.msra.mxu0 0.0
    %1211 = vmatprep.subr.mxu0 0.0
    %1212 = vmatpush1.msra.mxu0 0.0
    %1213 = vmatprep.subr.mxu0 0.0
    %1214 = vmatpush1.msra.mxu0 0.0
    %1215 = vmatprep.subr.mxu0 0.0
    %1216 = vmatpush1.msra.mxu0 0.0
    %1217 = vmatprep.subr.mxu0 0.0
    %1218 = vmatpush1.msra.mxu0 0.0
    %1219 = vmatprep.subr.mxu0 0.0
    %1220 = vmatpush1.msra.mxu0 0.0
    %1221 = vmatprep.subr.mxu0 0.0
    %1222 = vmatpush1.msra.mxu0 0.0
    %1223 = vmatprep.subr.mxu0 0.0
    %1224 = vmatpush1.msra.mxu0 0.0
    %1225 = vmatprep.subr.mxu0 0.0
    %1226 = vmatpush1.msra.mxu0 0.0
    %1227 = vmatprep.subr.mxu0 0.0
    %1228 = vmatpush1.msra.mxu0 0.0
    %1229 = vmatprep.subr.mxu0 0.0
    %1230 = vmatpush1.msra.mxu0 0.0
    %1231 = vmatprep.subr.mxu0 0.0
    %1232 = vmatpush1.msra.mxu0 0.0
    %1233 = vmatprep.subr.mxu0 0.0
    %1234 = vmatpush1.msra.mxu0 0.0
    %1235 = vmatprep.subr.mxu0 0.0
    %1236 = vmatpush1.msra.mxu0 0.0
    %1237 = vmatprep.subr.mxu0 0.0
    %1238 = vmatpush1.msra.mxu0 0.0
    %1239 = vmatprep.subr.mxu0 0.0
    %1240 = vmatpush1.msra.mxu0 0.0
    %1241 = vmatprep.subr.mxu0 0.0
    %1242 = vmatpush1.msra.mxu0 0.0
    %1243 = vmatprep.subr.mxu0 0.0
    %1244 = vmatpush1.msra.mxu0 0.0
    %1245 = vmatprep.subr.mxu0 0.0
    %1246 = vmatpush1.msra.mxu0 0.0
    %1247 = vmatprep.subr.mxu0 0.0
    %1248 = vmatpush1.msra.mxu0 0.0
    %1249 = vmatprep.subr.mxu0 0.0
    %1250 = vmatpush1.msra.mxu0 0.0
    %1251 = vmatprep.subr.mxu0 0.0
    %1252 = vmatpush1.msra.mxu0 0.0
    %1253 = vmatprep.subr.mxu0 0.0
    %1254 = vmatpush1.msra.mxu0 0.0
    %1255 = vmatprep.subr.mxu0 0.0
    %1256 = vmatpush1.msra.mxu0 0.0
    %1257 = vmatprep.subr.mxu0 0.0
    %1258 = vmatpush1.msra.mxu0 0.0
    %1259 = vmatprep.subr.mxu0 0.0
    %1260 = vmatpush1.msra.mxu0 0.0
    %1261 = vmatprep.subr.mxu0 0.0
    %1262 = vmatpush1.msra.mxu0 0.0
    %1263 = vmatprep.subr.mxu0 0.0
    %1264 = vmatpush1.msra.mxu0 0.0
    %1265 = vmatprep.mubr.f32.mxu0 0.0
    %1266 = vmatmul.mubr.f32.gmra.mrb[0].mxu0 %v1199
    %v1267 = vpop.f32.mrb[0].mxu0
    %v1268 = vadd.f32 0.0, %v1267
    %v1269 = vpop.f32.mrb[0].mxu0
    %1270 = vdwg.mxu0
    %v1272 = vsel %vm323, %v1125, 0
    %1274 = vmatprep.subr.mxu0 0.0
    %1275 = vmatpush1.msra.mxu0 %v170
    %1276 = vmatprep.subr.mxu0 0.0
    %1277 = vmatpush1.msra.mxu0 %v171
    %1278 = vmatprep.subr.mxu0 0.0
    %1279 = vmatpush1.msra.mxu0 0.0
    %1280 = vmatprep.subr.mxu0 0.0
    %1281 = vmatpush1.msra.mxu0 0.0
    %1282 = vmatprep.subr.mxu0 0.0
    %1283 = vmatpush1.msra.mxu0 0.0
    %1284 = vmatprep.subr.mxu0 0.0
    %1285 = vmatpush1.msra.mxu0 0.0
    %1286 = vmatprep.subr.mxu0 0.0
    %1287 = vmatpush1.msra.mxu0 0.0
    %1288 = vmatprep.subr.mxu0 0.0
    %1289 = vmatpush1.msra.mxu0 0.0
    %1290 = vmatprep.subr.mxu0 0.0
    %1291 = vmatpush1.msra.mxu0 0.0
    %1292 = vmatprep.subr.mxu0 0.0
    %1293 = vmatpush1.msra.mxu0 0.0
    %1294 = vmatprep.subr.mxu0 0.0
    %1295 = vmatpush1.msra.mxu0 0.0
    %1296 = vmatprep.subr.mxu0 0.0
    %1297 = vmatpush1.msra.mxu0 0.0
    %1298 = vmatprep.subr.mxu0 0.0
    %1299 = vmatpush1.msra.mxu0 0.0
    %1300 = vmatprep.subr.mxu0 0.0
    %1301 = vmatpush1.msra.mxu0 0.0
    %1302 = vmatprep.subr.mxu0 0.0
    %1303 = vmatpush1.msra.mxu0 0.0
    %1304 = vmatprep.subr.mxu0 0.0
    %1305 = vmatpush1.msra.mxu0 0.0
    %1306 = vmatprep.subr.mxu0 0.0
    %1307 = vmatpush1.msra.mxu0 0.0
    %1308 = vmatprep.subr.mxu0 0.0
    %1309 = vmatpush1.msra.mxu0 0.0
    %1310 = vmatprep.subr.mxu0 0.0
    %1311 = vmatpush1.msra.mxu0 0.0
    %1312 = vmatprep.subr.mxu0 0.0
    %1313 = vmatpush1.msra.mxu0 0.0
    %1314 = vmatprep.subr.mxu0 0.0
    %1315 = vmatpush1.msra.mxu0 0.0
    %1316 = vmatprep.subr.mxu0 0.0
    %1317 = vmatpush1.msra.mxu0 0.0
    %1318 = vmatprep.subr.mxu0 0.0
    %1319 = vmatpush1.msra.mxu0 0.0
    %1320 = vmatprep.subr.mxu0 0.0
    %1321 = vmatpush1.msra.mxu0 0.0
    %1322 = vmatprep.subr.mxu0 0.0
    %1323 = vmatpush1.msra.mxu0 0.0
    %1324 = vmatprep.subr.mxu0 0.0
    %1325 = vmatpush1.msra.mxu0 0.0
    %1326 = vmatprep.subr.mxu0 0.0
    %1327 = vmatpush1.msra.mxu0 0.0
    %1328 = vmatprep.subr.mxu0 0.0
    %1329 = vmatpush1.msra.mxu0 0.0
    %1330 = vmatprep.subr.mxu0 0.0
    %1331 = vmatpush1.msra.mxu0 0.0
    %1332 = vmatprep.subr.mxu0 0.0
    %1333 = vmatpush1.msra.mxu0 0.0
    %1334 = vmatprep.subr.mxu0 0.0
    %1335 = vmatpush1.msra.mxu0 0.0
    %1336 = vmatprep.subr.mxu0 0.0
    %1337 = vmatpush1.msra.mxu0 0.0
    %1338 = vmatprep.mubr.f32.mxu0 0.0
    %1339 = vmatmul.mubr.f32.gmra.mrb[0].mxu0 %v1272
    %v1340 = vpop.f32.mrb[0].mxu0
    %v1341 = vadd.f32 0.0, %v1340
    %v1342 = vpop.f32.mrb[0].mxu0
    %1343 = vdwg.mxu0
    %s1344 = scalar_lea.vmem [#allocation2], 4
    %v1345 = vld [vmem:[%s1344] sm:$0x3]
    %v1346 = vadd.f32 %v1345, %v1195
    %v1348 = vsel %vm176, %v1346, 0
    %1350 = vmatprep.subr.mxu0 0.0
    %1351 = vmatpush1.msra.mxu0 %v154
    %1352 = vmatprep.subr.mxu0 0.0
    %1353 = vmatpush1.msra.mxu0 %v155
    %1354 = vmatprep.subr.mxu0 0.0
    %1355 = vmatpush1.msra.mxu0 %v156
    %1356 = vmatprep.subr.mxu0 0.0
    %1357 = vmatpush1.msra.mxu0 %v157
    %1358 = vmatprep.subr.mxu0 0.0
    %1359 = vmatpush1.msra.mxu0 0.0
    %1360 = vmatprep.subr.mxu0 0.0
    %1361 = vmatpush1.msra.mxu0 0.0
    %1362 = vmatprep.subr.mxu0 0.0
    %1363 = vmatpush1.msra.mxu0 0.0
    %1364 = vmatprep.subr.mxu0 0.0
    %1365 = vmatpush1.msra.mxu0 0.0
    %1366 = vmatprep.subr.mxu0 0.0
    %1367 = vmatpush1.msra.mxu0 0.0
    %1368 = vmatprep.subr.mxu0 0.0
    %1369 = vmatpush1.msra.mxu0 0.0
    %1370 = vmatprep.subr.mxu0 0.0
    %1371 = vmatpush1.msra.mxu0 0.0
    %1372 = vmatprep.subr.mxu0 0.0
    %1373 = vmatpush1.msra.mxu0 0.0
    %1374 = vmatprep.subr.mxu0 0.0
    %1375 = vmatpush1.msra.mxu0 0.0
    %1376 = vmatprep.subr.mxu0 0.0
    %1377 = vmatpush1.msra.mxu0 0.0
    %1378 = vmatprep.subr.mxu0 0.0
    %1379 = vmatpush1.msra.mxu0 0.0
    %1380 = vmatprep.subr.mxu0 0.0
    %1381 = vmatpush1.msra.mxu0 0.0
    %1382 = vmatprep.subr.mxu0 0.0
    %1383 = vmatpush1.msra.mxu0 0.0
    %1384 = vmatprep.subr.mxu0 0.0
    %1385 = vmatpush1.msra.mxu0 0.0
    %1386 = vmatprep.subr.mxu0 0.0
    %1387 = vmatpush1.msra.mxu0 0.0
    %1388 = vmatprep.subr.mxu0 0.0
    %1389 = vmatpush1.msra.mxu0 0.0
    %1390 = vmatprep.subr.mxu0 0.0
    %1391 = vmatpush1.msra.mxu0 0.0
    %1392 = vmatprep.subr.mxu0 0.0
    %1393 = vmatpush1.msra.mxu0 0.0
    %1394 = vmatprep.subr.mxu0 0.0
    %1395 = vmatpush1.msra.mxu0 0.0
    %1396 = vmatprep.subr.mxu0 0.0
    %1397 = vmatpush1.msra.mxu0 0.0
    %1398 = vmatprep.subr.mxu0 0.0
    %1399 = vmatpush1.msra.mxu0 0.0
    %1400 = vmatprep.subr.mxu0 0.0
    %1401 = vmatpush1.msra.mxu0 0.0
    %1402 = vmatprep.subr.mxu0 0.0
    %1403 = vmatpush1.msra.mxu0 0.0
    %1404 = vmatprep.subr.mxu0 0.0
    %1405 = vmatpush1.msra.mxu0 0.0
    %1406 = vmatprep.subr.mxu0 0.0
    %1407 = vmatpush1.msra.mxu0 0.0
    %1408 = vmatprep.subr.mxu0 0.0
    %1409 = vmatpush1.msra.mxu0 0.0
    %1410 = vmatprep.subr.mxu0 0.0
    %1411 = vmatpush1.msra.mxu0 0.0
    %1412 = vmatprep.subr.mxu0 0.0
    %1413 = vmatpush1.msra.mxu0 0.0
    %1414 = vmatprep.mubr.f32.mxu0 0.0
    %1415 = vmatmul.mubr.f32.gmra.mrb[0].mxu0 %v1348
    %v1416 = vpop.f32.mrb[0].mxu0
    %v1417 = vadd.f32 %v1268, %v1416
    %v1418 = vpop.f32.mrb[0].mxu0
    %1419 = vdwg.mxu0
    %v1420 = vadd.f32 %v1417, %v476
    %v1421 = vxor.u32 %v1420, 2147483648
    %v1422 = vmul.f32 %v1421, 1.442695
    %v1423 = vpow.pop %v1422
    %v1424 = vadd.f32 %v1423, 1.0
    %v1425 = vrcp.pop %v1424
    %v1426 = vmul.f32 1.0, %v1425
    %v1427 = vsub.f32 %v1346, %v969
    %v1428 = vmul.f32 %v1427, %v1426
    %v1429 = vadd.f32 %v969, %v1428
    %vm1430 = vcmp.gt.f32.partialorder %v1429, 0.5
    %v1431 = vsel %vm1430, 1, 0
    %v1432 = vcvt.s32.f32 %v1431
    %v1433 = vsub.f32 1.0, %v1432
    %v1434 = vmul.f32 %v1433, %v1429
    %v1436 = vsel %vm176, %v1432, 0
    %1438 = vmatprep.subr.mxu0 0.0
    %1439 = vmatpush1.msra.mxu0 %v163
    %1440 = vmatprep.subr.mxu0 0.0
    %1441 = vmatpush1.msra.mxu0 %v164
    %1442 = vmatprep.subr.mxu0 0.0
    %1443 = vmatpush1.msra.mxu0 %v165
    %1444 = vmatprep.subr.mxu0 0.0
    %1445 = vmatpush1.msra.mxu0 %v166
    %1446 = vmatprep.subr.mxu0 0.0
    %1447 = vmatpush1.msra.mxu0 0.0
    %1448 = vmatprep.subr.mxu0 0.0
    %1449 = vmatpush1.msra.mxu0 0.0
    %1450 = vmatprep.subr.mxu0 0.0
    %1451 = vmatpush1.msra.mxu0 0.0
    %1452 = vmatprep.subr.mxu0 0.0
    %1453 = vmatpush1.msra.mxu0 0.0
    %1454 = vmatprep.subr.mxu0 0.0
    %1455 = vmatpush1.msra.mxu0 0.0
    %1456 = vmatprep.subr.mxu0 0.0
    %1457 = vmatpush1.msra.mxu0 0.0
    %1458 = vmatprep.subr.mxu0 0.0
    %1459 = vmatpush1.msra.mxu0 0.0
    %1460 = vmatprep.subr.mxu0 0.0
    %1461 = vmatpush1.msra.mxu0 0.0
    %1462 = vmatprep.subr.mxu0 0.0
    %1463 = vmatpush1.msra.mxu0 0.0
    %1464 = vmatprep.subr.mxu0 0.0
    %1465 = vmatpush1.msra.mxu0 0.0
    %1466 = vmatprep.subr.mxu0 0.0
    %1467 = vmatpush1.msra.mxu0 0.0
    %1468 = vmatprep.subr.mxu0 0.0
    %1469 = vmatpush1.msra.mxu0 0.0
    %1470 = vmatprep.subr.mxu0 0.0
    %1471 = vmatpush1.msra.mxu0 0.0
    %1472 = vmatprep.subr.mxu0 0.0
    %1473 = vmatpush1.msra.mxu0 0.0
    %1474 = vmatprep.subr.mxu0 0.0
    %1475 = vmatpush1.msra.mxu0 0.0
    %1476 = vmatprep.subr.mxu0 0.0
    %1477 = vmatpush1.msra.mxu0 0.0
    %1478 = vmatprep.subr.mxu0 0.0
    %1479 = vmatpush1.msra.mxu0 0.0
    %1480 = vmatprep.subr.mxu0 0.0
    %1481 = vmatpush1.msra.mxu0 0.0
    %1482 = vmatprep.subr.mxu0 0.0
    %1483 = vmatpush1.msra.mxu0 0.0
    %1484 = vmatprep.subr.mxu0 0.0
    %1485 = vmatpush1.msra.mxu0 0.0
    %1486 = vmatprep.subr.mxu0 0.0
    %1487 = vmatpush1.msra.mxu0 0.0
    %1488 = vmatprep.subr.mxu0 0.0
    %1489 = vmatpush1.msra.mxu0 0.0
    %1490 = vmatprep.subr.mxu0 0.0
    %1491 = vmatpush1.msra.mxu0 0.0
    %1492 = vmatprep.subr.mxu0 0.0
    %1493 = vmatpush1.msra.mxu0 0.0
    %1494 = vmatprep.subr.mxu0 0.0
    %1495 = vmatpush1.msra.mxu0 0.0
    %1496 = vmatprep.subr.mxu0 0.0
    %1497 = vmatpush1.msra.mxu0 0.0
    %1498 = vmatprep.subr.mxu0 0.0
    %1499 = vmatpush1.msra.mxu0 0.0
    %1500 = vmatprep.subr.mxu0 0.0
    %1501 = vmatpush1.msra.mxu0 0.0
    %1502 = vmatprep.mubr.f32.mxu0 0.0
    %1503 = vmatmul.mubr.f32.gmra.mrb[0].mxu0 %v1436
    %v1504 = vpop.f32.mrb[0].mxu0
    %v1505 = vadd.f32 %v497, %v1504
    %v1506 = vpop.f32.mrb[0].mxu0
    %1507 = vdwg.mxu0
    %v1509 = vsel %vm323, %v1505, 0
    %1511 = vmatprep.subr.mxu0 0.0
    %1512 = vmatpush1.msra.mxu0 %v168
    %1513 = vmatprep.subr.mxu0 0.0
    %1514 = vmatpush1.msra.mxu0 %v169
    %1515 = vmatprep.subr.mxu0 0.0
    %1516 = vmatpush1.msra.mxu0 0.0
    %1517 = vmatprep.subr.mxu0 0.0
    %1518 = vmatpush1.msra.mxu0 0.0
    %1519 = vmatprep.subr.mxu0 0.0
    %1520 = vmatpush1.msra.mxu0 0.0
    %1521 = vmatprep.subr.mxu0 0.0
    %1522 = vmatpush1.msra.mxu0 0.0
    %1523 = vmatprep.subr.mxu0 0.0
    %1524 = vmatpush1.msra.mxu0 0.0
    %1525 = vmatprep.subr.mxu0 0.0
    %1526 = vmatpush1.msra.mxu0 0.0
    %1527 = vmatprep.subr.mxu0 0.0
    %1528 = vmatpush1.msra.mxu0 0.0
    %1529 = vmatprep.subr.mxu0 0.0
    %1530 = vmatpush1.msra.mxu0 0.0
    %1531 = vmatprep.subr.mxu0 0.0
    %1532 = vmatpush1.msra.mxu0 0.0
    %1533 = vmatprep.subr.mxu0 0.0
    %1534 = vmatpush1.msra.mxu0 0.0
    %1535 = vmatprep.subr.mxu0 0.0
    %1536 = vmatpush1.msra.mxu0 0.0
    %1537 = vmatprep.subr.mxu0 0.0
    %1538 = vmatpush1.msra.mxu0 0.0
    %1539 = vmatprep.subr.mxu0 0.0
    %1540 = vmatpush1.msra.mxu0 0.0
    %1541 = vmatprep.subr.mxu0 0.0
    %1542 = vmatpush1.msra.mxu0 0.0
    %1543 = vmatprep.subr.mxu0 0.0
    %1544 = vmatpush1.msra.mxu0 0.0
    %1545 = vmatprep.subr.mxu0 0.0
    %1546 = vmatpush1.msra.mxu0 0.0
    %1547 = vmatprep.subr.mxu0 0.0
    %1548 = vmatpush1.msra.mxu0 0.0
    %1549 = vmatprep.subr.mxu0 0.0
    %1550 = vmatpush1.msra.mxu0 0.0
    %1551 = vmatprep.subr.mxu0 0.0
    %1552 = vmatpush1.msra.mxu0 0.0
    %1553 = vmatprep.subr.mxu0 0.0
    %1554 = vmatpush1.msra.mxu0 0.0
    %1555 = vmatprep.subr.mxu0 0.0
    %1556 = vmatpush1.msra.mxu0 0.0
    %1557 = vmatprep.subr.mxu0 0.0
    %1558 = vmatpush1.msra.mxu0 0.0
    %1559 = vmatprep.subr.mxu0 0.0
    %1560 = vmatpush1.msra.mxu0 0.0
    %1561 = vmatprep.subr.mxu0 0.0
    %1562 = vmatpush1.msra.mxu0 0.0
    %1563 = vmatprep.subr.mxu0 0.0
    %1564 = vmatpush1.msra.mxu0 0.0
    %1565 = vmatprep.subr.mxu0 0.0
    %1566 = vmatpush1.msra.mxu0 0.0
    %1567 = vmatprep.subr.mxu0 0.0
    %1568 = vmatpush1.msra.mxu0 0.0
    %1569 = vmatprep.subr.mxu0 0.0
    %1570 = vmatpush1.msra.mxu0 0.0
    %1571 = vmatprep.subr.mxu0 0.0
    %1572 = vmatpush1.msra.mxu0 0.0
    %1573 = vmatprep.subr.mxu0 0.0
    %1574 = vmatpush1.msra.mxu0 0.0
    %1575 = vmatprep.mubr.f32.mxu0 0.0
    %1576 = vmatmul.mubr.f32.gmra.mrb[0].mxu0 %v1509
    %v1577 = vpop.f32.mrb[0].mxu0
    %v1578 = vadd.f32 %v1341, %v1577
    %v1579 = vpop.f32.mrb[0].mxu0
    %1580 = vdwg.mxu0
    %v1581 = vadd.f32 %v1578, %v649
    %v1582 = vxor.u32 %v1581, 2147483648
    %v1583 = vmul.f32 %v1582, 1.442695
    %v1584 = vpow.pop %v1583
    %v1585 = vadd.f32 %v1584, 1.0
    %v1586 = vrcp.pop %v1585
    %v1587 = vmul.f32 1.0, %v1586
    %v1588 = vsub.f32 %v1505, %v1125
    %v1589 = vmul.f32 %v1588, %v1587
    %v1590 = vadd.f32 %v1125, %v1589
    %s1591 = scalar_lea.vmem [#allocation14], 4
    %1592 = vst.msk [vmem:[%s1591] sm:$0x3] %vm661, %v1590
    %1593 = vmatprep.subr.mxu0 0.0
    %1594 = vmatpush1.msra.mxu0 %v150
    %1595 = vmatprep.subr.mxu0 0.0
    %1596 = vmatpush1.msra.mxu0 %v151
    %1597 = vmatprep.subr.mxu0 0.0
    %1598 = vmatpush1.msra.mxu0 %v152
    %1599 = vmatprep.subr.mxu0 0.0
    %1600 = vmatpush1.msra.mxu0 %v153
    %1601 = vmatprep.subr.mxu0 0.0
    %1602 = vmatpush1.msra.mxu0 0.0
    %1603 = vmatprep.subr.mxu0 0.0
    %1604 = vmatpush1.msra.mxu0 0.0
    %1605 = vmatprep.subr.mxu0 0.0
    %1606 = vmatpush1.msra.mxu0 0.0
    %1607 = vmatprep.subr.mxu0 0.0
    %1608 = vmatpush1.msra.mxu0 0.0
    %1609 = vmatprep.subr.mxu0 0.0
    %1610 = vmatpush1.msra.mxu0 0.0
    %1611 = vmatprep.subr.mxu0 0.0
    %1612 = vmatpush1.msra.mxu0 0.0
    %1613 = vmatprep.subr.mxu0 0.0
    %1614 = vmatpush1.msra.mxu0 0.0
    %1615 = vmatprep.subr.mxu0 0.0
    %1616 = vmatpush1.msra.mxu0 0.0
    %1617 = vmatprep.subr.mxu0 0.0
    %1618 = vmatpush1.msra.mxu0 0.0
    %1619 = vmatprep.subr.mxu0 0.0
    %1620 = vmatpush1.msra.mxu0 0.0
    %1621 = vmatprep.subr.mxu0 0.0
    %1622 = vmatpush1.msra.mxu0 0.0
    %1623 = vmatprep.subr.mxu0 0.0
    %1624 = vmatpush1.msra.mxu0 0.0
    %1625 = vmatprep.subr.mxu0 0.0
    %1626 = vmatpush1.msra.mxu0 0.0
    %1627 = vmatprep.subr.mxu0 0.0
    %1628 = vmatpush1.msra.mxu0 0.0
    %1629 = vmatprep.subr.mxu0 0.0
    %1630 = vmatpush1.msra.mxu0 0.0
    %1631 = vmatprep.subr.mxu0 0.0
    %1632 = vmatpush1.msra.mxu0 0.0
    %1633 = vmatprep.subr.mxu0 0.0
    %1634 = vmatpush1.msra.mxu0 0.0
    %1635 = vmatprep.subr.mxu0 0.0
    %1636 = vmatpush1.msra.mxu0 0.0
    %1637 = vmatprep.subr.mxu0 0.0
    %1638 = vmatpush1.msra.mxu0 0.0
    %1639 = vmatprep.subr.mxu0 0.0
    %1640 = vmatpush1.msra.mxu0 0.0
    %1641 = vmatprep.subr.mxu0 0.0
    %1642 = vmatpush1.msra.mxu0 0.0
    %1643 = vmatprep.subr.mxu0 0.0
    %1644 = vmatpush1.msra.mxu0 0.0
    %1645 = vmatprep.subr.mxu0 0.0
    %1646 = vmatpush1.msra.mxu0 0.0
    %1647 = vmatprep.subr.mxu0 0.0
    %1648 = vmatpush1.msra.mxu0 0.0
    %1649 = vmatprep.subr.mxu0 0.0
    %1650 = vmatpush1.msra.mxu0 0.0
    %1651 = vmatprep.subr.mxu0 0.0
    %1652 = vmatpush1.msra.mxu0 0.0
    %1653 = vmatprep.subr.mxu0 0.0
    %1654 = vmatpush1.msra.mxu0 0.0
    %1655 = vmatprep.subr.mxu0 0.0
    %1656 = vmatpush1.msra.mxu0 0.0
    %1657 = vmatprep.mubr.f32.mxu0 0.0
    %1658 = vmatmul.mubr.f32.gmra.mrb[0].mxu0 %v1436
    %v1659 = vpop.f32.mrb[0].mxu0
    %v1660 = vadd.f32 0.0, %v1659
    %v1661 = vpop.f32.mrb[0].mxu0
    %1662 = vdwg.mxu0
    %v1664 = vsel %vm176, %v1434, 0
    %1666 = vmatprep.subr.mxu0 0.0
    %1667 = vmatpush1.msra.mxu0 %v158
    %1668 = vmatprep.subr.mxu0 0.0
    %1669 = vmatpush1.msra.mxu0 %v159
    %1670 = vmatprep.subr.mxu0 0.0
    %1671 = vmatpush1.msra.mxu0 %v160
    %1672 = vmatprep.subr.mxu0 0.0
    %1673 = vmatpush1.msra.mxu0 %v161
    %1674 = vmatprep.subr.mxu0 0.0
    %1675 = vmatpush1.msra.mxu0 0.0
    %1676 = vmatprep.subr.mxu0 0.0
    %1677 = vmatpush1.msra.mxu0 0.0
    %1678 = vmatprep.subr.mxu0 0.0
    %1679 = vmatpush1.msra.mxu0 0.0
    %1680 = vmatprep.subr.mxu0 0.0
    %1681 = vmatpush1.msra.mxu0 0.0
    %1682 = vmatprep.subr.mxu0 0.0
    %1683 = vmatpush1.msra.mxu0 0.0
    %1684 = vmatprep.subr.mxu0 0.0
    %1685 = vmatpush1.msra.mxu0 0.0
    %1686 = vmatprep.subr.mxu0 0.0
    %1687 = vmatpush1.msra.mxu0 0.0
    %1688 = vmatprep.subr.mxu0 0.0
    %1689 = vmatpush1.msra.mxu0 0.0
    %1690 = vmatprep.subr.mxu0 0.0
    %1691 = vmatpush1.msra.mxu0 0.0
    %1692 = vmatprep.subr.mxu0 0.0
    %1693 = vmatpush1.msra.mxu0 0.0
    %1694 = vmatprep.subr.mxu0 0.0
    %1695 = vmatpush1.msra.mxu0 0.0
    %1696 = vmatprep.subr.mxu0 0.0
    %1697 = vmatpush1.msra.mxu0 0.0
    %1698 = vmatprep.subr.mxu0 0.0
    %1699 = vmatpush1.msra.mxu0 0.0
    %1700 = vmatprep.subr.mxu0 0.0
    %1701 = vmatpush1.msra.mxu0 0.0
    %1702 = vmatprep.subr.mxu0 0.0
    %1703 = vmatpush1.msra.mxu0 0.0
    %1704 = vmatprep.subr.mxu0 0.0
    %1705 = vmatpush1.msra.mxu0 0.0
    %1706 = vmatprep.subr.mxu0 0.0
    %1707 = vmatpush1.msra.mxu0 0.0
    %1708 = vmatprep.subr.mxu0 0.0
    %1709 = vmatpush1.msra.mxu0 0.0
    %1710 = vmatprep.subr.mxu0 0.0
    %1711 = vmatpush1.msra.mxu0 0.0
    %1712 = vmatprep.subr.mxu0 0.0
    %1713 = vmatpush1.msra.mxu0 0.0
    %1714 = vmatprep.subr.mxu0 0.0
    %1715 = vmatpush1.msra.mxu0 0.0
    %1716 = vmatprep.subr.mxu0 0.0
    %1717 = vmatpush1.msra.mxu0 0.0
    %1718 = vmatprep.subr.mxu0 0.0
    %1719 = vmatpush1.msra.mxu0 0.0
    %1720 = vmatprep.subr.mxu0 0.0
    %1721 = vmatpush1.msra.mxu0 0.0
    %1722 = vmatprep.subr.mxu0 0.0
    %1723 = vmatpush1.msra.mxu0 0.0
    %1724 = vmatprep.subr.mxu0 0.0
    %1725 = vmatpush1.msra.mxu0 0.0
    %1726 = vmatprep.subr.mxu0 0.0
    %1727 = vmatpush1.msra.mxu0 0.0
    %1728 = vmatprep.subr.mxu0 0.0
    %1729 = vmatpush1.msra.mxu0 0.0
    %1730 = vmatprep.mubr.f32.mxu0 0.0
    %1731 = vmatmul.mubr.f32.gmra.mrb[0].mxu0 %v1664
    %v1732 = vpop.f32.mrb[0].mxu0
    %v1733 = vadd.f32 0.0, %v1732
    %v1734 = vpop.f32.mrb[0].mxu0
    %1735 = vdwg.mxu0
    %v1737 = vsel %vm323, %v1590, 0
    %1739 = vmatprep.subr.mxu0 0.0
    %1740 = vmatpush1.msra.mxu0 %v170
    %1741 = vmatprep.subr.mxu0 0.0
    %1742 = vmatpush1.msra.mxu0 %v171
    %1743 = vmatprep.subr.mxu0 0.0
    %1744 = vmatpush1.msra.mxu0 0.0
    %1745 = vmatprep.subr.mxu0 0.0
    %1746 = vmatpush1.msra.mxu0 0.0
    %1747 = vmatprep.subr.mxu0 0.0
    %1748 = vmatpush1.msra.mxu0 0.0
    %1749 = vmatprep.subr.mxu0 0.0
    %1750 = vmatpush1.msra.mxu0 0.0
    %1751 = vmatprep.subr.mxu0 0.0
    %1752 = vmatpush1.msra.mxu0 0.0
    %1753 = vmatprep.subr.mxu0 0.0
    %1754 = vmatpush1.msra.mxu0 0.0
    %1755 = vmatprep.subr.mxu0 0.0
    %1756 = vmatpush1.msra.mxu0 0.0
    %1757 = vmatprep.subr.mxu0 0.0
    %1758 = vmatpush1.msra.mxu0 0.0
    %1759 = vmatprep.subr.mxu0 0.0
    %1760 = vmatpush1.msra.mxu0 0.0
    %1761 = vmatprep.subr.mxu0 0.0
    %1762 = vmatpush1.msra.mxu0 0.0
    %1763 = vmatprep.subr.mxu0 0.0
    %1764 = vmatpush1.msra.mxu0 0.0
    %1765 = vmatprep.subr.mxu0 0.0
    %1766 = vmatpush1.msra.mxu0 0.0
    %1767 = vmatprep.subr.mxu0 0.0
    %1768 = vmatpush1.msra.mxu0 0.0
    %1769 = vmatprep.subr.mxu0 0.0
    %1770 = vmatpush1.msra.mxu0 0.0
    %1771 = vmatprep.subr.mxu0 0.0
    %1772 = vmatpush1.msra.mxu0 0.0
    %1773 = vmatprep.subr.mxu0 0.0
    %1774 = vmatpush1.msra.mxu0 0.0
    %1775 = vmatprep.subr.mxu0 0.0
    %1776 = vmatpush1.msra.mxu0 0.0
    %1777 = vmatprep.subr.mxu0 0.0
    %1778 = vmatpush1.msra.mxu0 0.0
    %1779 = vmatprep.subr.mxu0 0.0
    %1780 = vmatpush1.msra.mxu0 0.0
    %1781 = vmatprep.subr.mxu0 0.0
    %1782 = vmatpush1.msra.mxu0 0.0
    %1783 = vmatprep.subr.mxu0 0.0
    %1784 = vmatpush1.msra.mxu0 0.0
    %1785 = vmatprep.subr.mxu0 0.0
    %1786 = vmatpush1.msra.mxu0 0.0
    %1787 = vmatprep.subr.mxu0 0.0
    %1788 = vmatpush1.msra.mxu0 0.0
    %1789 = vmatprep.subr.mxu0 0.0
    %1790 = vmatpush1.msra.mxu0 0.0
    %1791 = vmatprep.subr.mxu0 0.0
    %1792 = vmatpush1.msra.mxu0 0.0
    %1793 = vmatprep.subr.mxu0 0.0
    %1794 = vmatpush1.msra.mxu0 0.0
    %1795 = vmatprep.subr.mxu0 0.0
    %1796 = vmatpush1.msra.mxu0 0.0
    %1797 = vmatprep.subr.mxu0 0.0
    %1798 = vmatpush1.msra.mxu0 0.0
    %1799 = vmatprep.subr.mxu0 0.0
    %1800 = vmatpush1.msra.mxu0 0.0
    %1801 = vmatprep.subr.mxu0 0.0
    %1802 = vmatpush1.msra.mxu0 0.0
    %1803 = vmatprep.mubr.f32.mxu0 0.0
    %1804 = vmatmul.mubr.f32.gmra.mrb[0].mxu0 %v1737
    %v1805 = vpop.f32.mrb[0].mxu0
    %v1806 = vadd.f32 0.0, %v1805
    %v1807 = vpop.f32.mrb[0].mxu0
    %1808 = vdwg.mxu0
    %s1809 = scalar_lea.vmem [#allocation2], 6
    %v1810 = vld [vmem:[%s1809] sm:$0x3]
    %v1811 = vadd.f32 %v1810, %v1660
    %v1813 = vsel %vm176, %v1811, 0
    %1815 = vmatprep.subr.mxu0 0.0
    %1816 = vmatpush1.msra.mxu0 %v154
    %1817 = vmatprep.subr.mxu0 0.0
    %1818 = vmatpush1.msra.mxu0 %v155
    %1819 = vmatprep.subr.mxu0 0.0
    %1820 = vmatpush1.msra.mxu0 %v156
    %1821 = vmatprep.subr.mxu0 0.0
    %1822 = vmatpush1.msra.mxu0 %v157
    %1823 = vmatprep.subr.mxu0 0.0
    %1824 = vmatpush1.msra.mxu0 0.0
    %1825 = vmatprep.subr.mxu0 0.0
    %1826 = vmatpush1.msra.mxu0 0.0
    %1827 = vmatprep.subr.mxu0 0.0
    %1828 = vmatpush1.msra.mxu0 0.0
    %1829 = vmatprep.subr.mxu0 0.0
    %1830 = vmatpush1.msra.mxu0 0.0
    %1831 = vmatprep.subr.mxu0 0.0
    %1832 = vmatpush1.msra.mxu0 0.0
    %1833 = vmatprep.subr.mxu0 0.0
    %1834 = vmatpush1.msra.mxu0 0.0
    %1835 = vmatprep.subr.mxu0 0.0
    %1836 = vmatpush1.msra.mxu0 0.0
    %1837 = vmatprep.subr.mxu0 0.0
    %1838 = vmatpush1.msra.mxu0 0.0
    %1839 = vmatprep.subr.mxu0 0.0
    %1840 = vmatpush1.msra.mxu0 0.0
    %1841 = vmatprep.subr.mxu0 0.0
    %1842 = vmatpush1.msra.mxu0 0.0
    %1843 = vmatprep.subr.mxu0 0.0
    %1844 = vmatpush1.msra.mxu0 0.0
    %1845 = vmatprep.subr.mxu0 0.0
    %1846 = vmatpush1.msra.mxu0 0.0
    %1847 = vmatprep.subr.mxu0 0.0
    %1848 = vmatpush1.msra.mxu0 0.0
    %1849 = vmatprep.subr.mxu0 0.0
    %1850 = vmatpush1.msra.mxu0 0.0
    %1851 = vmatprep.subr.mxu0 0.0
    %1852 = vmatpush1.msra.mxu0 0.0
    %1853 = vmatprep.subr.mxu0 0.0
    %1854 = vmatpush1.msra.mxu0 0.0
    %1855 = vmatprep.subr.mxu0 0.0
    %1856 = vmatpush1.msra.mxu0 0.0
    %1857 = vmatprep.subr.mxu0 0.0
    %1858 = vmatpush1.msra.mxu0 0.0
    %1859 = vmatprep.subr.mxu0 0.0
    %1860 = vmatpush1.msra.mxu0 0.0
    %1861 = vmatprep.subr.mxu0 0.0
    %1862 = vmatpush1.msra.mxu0 0.0
    %1863 = vmatprep.subr.mxu0 0.0
    %1864 = vmatpush1.msra.mxu0 0.0
    %1865 = vmatprep.subr.mxu0 0.0
    %1866 = vmatpush1.msra.mxu0 0.0
    %1867 = vmatprep.subr.mxu0 0.0
    %1868 = vmatpush1.msra.mxu0 0.0
    %1869 = vmatprep.subr.mxu0 0.0
    %1870 = vmatpush1.msra.mxu0 0.0
    %1871 = vmatprep.subr.mxu0 0.0
    %1872 = vmatpush1.msra.mxu0 0.0
    %1873 = vmatprep.subr.mxu0 0.0
    %1874 = vmatpush1.msra.mxu0 0.0
    %1875 = vmatprep.subr.mxu0 0.0
    %1876 = vmatpush1.msra.mxu0 0.0
    %1877 = vmatprep.subr.mxu0 0.0
    %1878 = vmatpush1.msra.mxu0 0.0
    %1879 = vmatprep.mubr.f32.mxu0 0.0
    %1880 = vmatmul.mubr.f32.gmra.mrb[0].mxu0 %v1813
    %v1881 = vpop.f32.mrb[0].mxu0
    %v1882 = vadd.f32 %v1733, %v1881
    %v1883 = vpop.f32.mrb[0].mxu0
    %1884 = vdwg.mxu0
    %v1885 = vadd.f32 %v1882, %v476
    %v1886 = vxor.u32 %v1885, 2147483648
    %v1887 = vmul.f32 %v1886, 1.442695
    %v1888 = vpow.pop %v1887
    %v1889 = vadd.f32 %v1888, 1.0
    %v1890 = vrcp.pop %v1889
    %v1891 = vmul.f32 1.0, %v1890
    %v1892 = vsub.f32 %v1811, %v1434
    %v1893 = vmul.f32 %v1892, %v1891
    %v1894 = vadd.f32 %v1434, %v1893
    %vm1895 = vcmp.gt.f32.partialorder %v1894, 0.5
    %v1896 = vsel %vm1895, 1, 0
    %v1897 = vcvt.s32.f32 %v1896
    %v1898 = vsub.f32 1.0, %v1897
    %v1899 = vmul.f32 %v1898, %v1894
    %v1901 = vsel %vm176, %v1897, 0
    %1903 = vmatprep.subr.mxu0 0.0
    %1904 = vmatpush1.msra.mxu0 %v163
    %1905 = vmatprep.subr.mxu0 0.0
    %1906 = vmatpush1.msra.mxu0 %v164
    %1907 = vmatprep.subr.mxu0 0.0
    %1908 = vmatpush1.msra.mxu0 %v165
    %1909 = vmatprep.subr.mxu0 0.0
    %1910 = vmatpush1.msra.mxu0 %v166
    %1911 = vmatprep.subr.mxu0 0.0
    %1912 = vmatpush1.msra.mxu0 0.0
    %1913 = vmatprep.subr.mxu0 0.0
    %1914 = vmatpush1.msra.mxu0 0.0
    %1915 = vmatprep.subr.mxu0 0.0
    %1916 = vmatpush1.msra.mxu0 0.0
    %1917 = vmatprep.subr.mxu0 0.0
    %1918 = vmatpush1.msra.mxu0 0.0
    %1919 = vmatprep.subr.mxu0 0.0
    %1920 = vmatpush1.msra.mxu0 0.0
    %1921 = vmatprep.subr.mxu0 0.0
    %1922 = vmatpush1.msra.mxu0 0.0
    %1923 = vmatprep.subr.mxu0 0.0
    %1924 = vmatpush1.msra.mxu0 0.0
    %1925 = vmatprep.subr.mxu0 0.0
    %1926 = vmatpush1.msra.mxu0 0.0
    %1927 = vmatprep.subr.mxu0 0.0
    %1928 = vmatpush1.msra.mxu0 0.0
    %1929 = vmatprep.subr.mxu0 0.0
    %1930 = vmatpush1.msra.mxu0 0.0
    %1931 = vmatprep.subr.mxu0 0.0
    %1932 = vmatpush1.msra.mxu0 0.0
    %1933 = vmatprep.subr.mxu0 0.0
    %1934 = vmatpush1.msra.mxu0 0.0
    %1935 = vmatprep.subr.mxu0 0.0
    %1936 = vmatpush1.msra.mxu0 0.0
    %1937 = vmatprep.subr.mxu0 0.0
    %1938 = vmatpush1.msra.mxu0 0.0
    %1939 = vmatprep.subr.mxu0 0.0
    %1940 = vmatpush1.msra.mxu0 0.0
    %1941 = vmatprep.subr.mxu0 0.0
    %1942 = vmatpush1.msra.mxu0 0.0
    %1943 = vmatprep.subr.mxu0 0.0
    %1944 = vmatpush1.msra.mxu0 0.0
    %1945 = vmatprep.subr.mxu0 0.0
    %1946 = vmatpush1.msra.mxu0 0.0
    %1947 = vmatprep.subr.mxu0 0.0
    %1948 = vmatpush1.msra.mxu0 0.0
    %1949 = vmatprep.subr.mxu0 0.0
    %1950 = vmatpush1.msra.mxu0 0.0
    %1951 = vmatprep.subr.mxu0 0.0
    %1952 = vmatpush1.msra.mxu0 0.0
    %1953 = vmatprep.subr.mxu0 0.0
    %1954 = vmatpush1.msra.mxu0 0.0
    %1955 = vmatprep.subr.mxu0 0.0
    %1956 = vmatpush1.msra.mxu0 0.0
    %1957 = vmatprep.subr.mxu0 0.0
    %1958 = vmatpush1.msra.mxu0 0.0
    %1959 = vmatprep.subr.mxu0 0.0
    %1960 = vmatpush1.msra.mxu0 0.0
    %1961 = vmatprep.subr.mxu0 0.0
    %1962 = vmatpush1.msra.mxu0 0.0
    %1963 = vmatprep.subr.mxu0 0.0
    %1964 = vmatpush1.msra.mxu0 0.0
    %1965 = vmatprep.subr.mxu0 0.0
    %1966 = vmatpush1.msra.mxu0 0.0
    %1967 = vmatprep.mubr.f32.mxu0 0.0
    %1968 = vmatmul.mubr.f32.gmra.mrb[0].mxu0 %v1901
    %v1969 = vpop.f32.mrb[0].mxu0
    %v1970 = vadd.f32 %v497, %v1969
    %v1971 = vpop.f32.mrb[0].mxu0
    %1972 = vdwg.mxu0
    %v1974 = vsel %vm323, %v1970, 0
    %1976 = vmatprep.subr.mxu0 0.0
    %1977 = vmatpush1.msra.mxu0 %v168
    %1978 = vmatprep.subr.mxu0 0.0
    %1979 = vmatpush1.msra.mxu0 %v169
    %1980 = vmatprep.subr.mxu0 0.0
    %1981 = vmatpush1.msra.mxu0 0.0
    %1982 = vmatprep.subr.mxu0 0.0
    %1983 = vmatpush1.msra.mxu0 0.0
    %1984 = vmatprep.subr.mxu0 0.0
    %1985 = vmatpush1.msra.mxu0 0.0
    %1986 = vmatprep.subr.mxu0 0.0
    %1987 = vmatpush1.msra.mxu0 0.0
    %1988 = vmatprep.subr.mxu0 0.0
    %1989 = vmatpush1.msra.mxu0 0.0
    %1990 = vmatprep.subr.mxu0 0.0
    %1991 = vmatpush1.msra.mxu0 0.0
    %1992 = vmatprep.subr.mxu0 0.0
    %1993 = vmatpush1.msra.mxu0 0.0
    %1994 = vmatprep.subr.mxu0 0.0
    %1995 = vmatpush1.msra.mxu0 0.0
    %1996 = vmatprep.subr.mxu0 0.0
    %1997 = vmatpush1.msra.mxu0 0.0
    %1998 = vmatprep.subr.mxu0 0.0
    %1999 = vmatpush1.msra.mxu0 0.0
    %2000 = vmatprep.subr.mxu0 0.0
    %2001 = vmatpush1.msra.mxu0 0.0
    %2002 = vmatprep.subr.mxu0 0.0
    %2003 = vmatpush1.msra.mxu0 0.0
    %2004 = vmatprep.subr.mxu0 0.0
    %2005 = vmatpush1.msra.mxu0 0.0
    %2006 = vmatprep.subr.mxu0 0.0
    %2007 = vmatpush1.msra.mxu0 0.0
    %2008 = vmatprep.subr.mxu0 0.0
    %2009 = vmatpush1.msra.mxu0 0.0
    %2010 = vmatprep.subr.mxu0 0.0
    %2011 = vmatpush1.msra.mxu0 0.0
    %2012 = vmatprep.subr.mxu0 0.0
    %2013 = vmatpush1.msra.mxu0 0.0
    %2014 = vmatprep.subr.mxu0 0.0
    %2015 = vmatpush1.msra.mxu0 0.0
    %2016 = vmatprep.subr.mxu0 0.0
    %2017 = vmatpush1.msra.mxu0 0.0
    %2018 = vmatprep.subr.mxu0 0.0
    %2019 = vmatpush1.msra.mxu0 0.0
    %2020 = vmatprep.subr.mxu0 0.0
    %2021 = vmatpush1.msra.mxu0 0.0
    %2022 = vmatprep.subr.mxu0 0.0
    %2023 = vmatpush1.msra.mxu0 0.0
    %2024 = vmatprep.subr.mxu0 0.0
    %2025 = vmatpush1.msra.mxu0 0.0
    %2026 = vmatprep.subr.mxu0 0.0
    %2027 = vmatpush1.msra.mxu0 0.0
    %2028 = vmatprep.subr.mxu0 0.0
    %2029 = vmatpush1.msra.mxu0 0.0
    %2030 = vmatprep.subr.mxu0 0.0
    %2031 = vmatpush1.msra.mxu0 0.0
    %2032 = vmatprep.subr.mxu0 0.0
    %2033 = vmatpush1.msra.mxu0 0.0
    %2034 = vmatprep.subr.mxu0 0.0
    %2035 = vmatpush1.msra.mxu0 0.0
    %2036 = vmatprep.subr.mxu0 0.0
    %2037 = vmatpush1.msra.mxu0 0.0
    %2038 = vmatprep.subr.mxu0 0.0
    %2039 = vmatpush1.msra.mxu0 0.0
    %2040 = vmatprep.mubr.f32.mxu0 0.0
    %2041 = vmatmul.mubr.f32.gmra.mrb[0].mxu0 %v1974
    %v2042 = vpop.f32.mrb[0].mxu0
    %v2043 = vadd.f32 %v1806, %v2042
    %v2044 = vpop.f32.mrb[0].mxu0
    %2045 = vdwg.mxu0
    %v2046 = vadd.f32 %v2043, %v649
    %v2047 = vxor.u32 %v2046, 2147483648
    %v2048 = vmul.f32 %v2047, 1.442695
    %v2049 = vpow.pop %v2048
    %v2050 = vadd.f32 %v2049, 1.0
    %v2051 = vrcp.pop %v2050
    %v2052 = vmul.f32 1.0, %v2051
    %v2053 = vsub.f32 %v1970, %v1590
    %v2054 = vmul.f32 %v2053, %v2052
    %v2055 = vadd.f32 %v1590, %v2054
    %s2056 = scalar_lea.vmem [#allocation14], 6
    %2057 = vst.msk [vmem:[%s2056] sm:$0x3] %vm661, %v2055
    %2058 = vmatprep.subr.mxu0 0.0
    %2059 = vmatpush1.msra.mxu0 %v150
    %2060 = vmatprep.subr.mxu0 0.0
    %2061 = vmatpush1.msra.mxu0 %v151
    %2062 = vmatprep.subr.mxu0 0.0
    %2063 = vmatpush1.msra.mxu0 %v152
    %2064 = vmatprep.subr.mxu0 0.0
    %2065 = vmatpush1.msra.mxu0 %v153
    %2066 = vmatprep.subr.mxu0 0.0
    %2067 = vmatpush1.msra.mxu0 0.0
    %2068 = vmatprep.subr.mxu0 0.0
    %2069 = vmatpush1.msra.mxu0 0.0
    %2070 = vmatprep.subr.mxu0 0.0
    %2071 = vmatpush1.msra.mxu0 0.0
    %2072 = vmatprep.subr.mxu0 0.0
    %2073 = vmatpush1.msra.mxu0 0.0
    %2074 = vmatprep.subr.mxu0 0.0
    %2075 = vmatpush1.msra.mxu0 0.0
    %2076 = vmatprep.subr.mxu0 0.0
    %2077 = vmatpush1.msra.mxu0 0.0
    %2078 = vmatprep.subr.mxu0 0.0
    %2079 = vmatpush1.msra.mxu0 0.0
    %2080 = vmatprep.subr.mxu0 0.0
    %2081 = vmatpush1.msra.mxu0 0.0
    %2082 = vmatprep.subr.mxu0 0.0
    %2083 = vmatpush1.msra.mxu0 0.0
    %2084 = vmatprep.subr.mxu0 0.0
    %2085 = vmatpush1.msra.mxu0 0.0
    %2086 = vmatprep.subr.mxu0 0.0
    %2087 = vmatpush1.msra.mxu0 0.0
    %2088 = vmatprep.subr.mxu0 0.0
    %2089 = vmatpush1.msra.mxu0 0.0
    %2090 = vmatprep.subr.mxu0 0.0
    %2091 = vmatpush1.msra.mxu0 0.0
    %2092 = vmatprep.subr.mxu0 0.0
    %2093 = vmatpush1.msra.mxu0 0.0
    %2094 = vmatprep.subr.mxu0 0.0
    %2095 = vmatpush1.msra.mxu0 0.0
    %2096 = vmatprep.subr.mxu0 0.0
    %2097 = vmatpush1.msra.mxu0 0.0
    %2098 = vmatprep.subr.mxu0 0.0
    %2099 = vmatpush1.msra.mxu0 0.0
    %2100 = vmatprep.subr.mxu0 0.0
    %2101 = vmatpush1.msra.mxu0 0.0
    %2102 = vmatprep.subr.mxu0 0.0
    %2103 = vmatpush1.msra.mxu0 0.0
    %2104 = vmatprep.subr.mxu0 0.0
    %2105 = vmatpush1.msra.mxu0 0.0
    %2106 = vmatprep.subr.mxu0 0.0
    %2107 = vmatpush1.msra.mxu0 0.0
    %2108 = vmatprep.subr.mxu0 0.0
    %2109 = vmatpush1.msra.mxu0 0.0
    %2110 = vmatprep.subr.mxu0 0.0
    %2111 = vmatpush1.msra.mxu0 0.0
    %2112 = vmatprep.subr.mxu0 0.0
    %2113 = vmatpush1.msra.mxu0 0.0
    %2114 = vmatprep.subr.mxu0 0.0
    %2115 = vmatpush1.msra.mxu0 0.0
    %2116 = vmatprep.subr.mxu0 0.0
    %2117 = vmatpush1.msra.mxu0 0.0
    %2118 = vmatprep.subr.mxu0 0.0
    %2119 = vmatpush1.msra.mxu0 0.0
    %2120 = vmatprep.subr.mxu0 0.0
    %2121 = vmatpush1.msra.mxu0 0.0
    %2122 = vmatprep.mubr.f32.mxu0 0.0
    %2123 = vmatmul.mubr.f32.gmra.mrb[0].mxu0 %v1901
    %v2124 = vpop.f32.mrb[0].mxu0
    %v2125 = vadd.f32 0.0, %v2124
    %v2126 = vpop.f32.mrb[0].mxu0
    %2127 = vdwg.mxu0
    %v2129 = vsel %vm176, %v1899, 0
    %2131 = vmatprep.subr.mxu0 0.0
    %2132 = vmatpush1.msra.mxu0 %v158
    %2133 = vmatprep.subr.mxu0 0.0
    %2134 = vmatpush1.msra.mxu0 %v159
    %2135 = vmatprep.subr.mxu0 0.0
    %2136 = vmatpush1.msra.mxu0 %v160
    %2137 = vmatprep.subr.mxu0 0.0
    %2138 = vmatpush1.msra.mxu0 %v161
    %2139 = vmatprep.subr.mxu0 0.0
    %2140 = vmatpush1.msra.mxu0 0.0
    %2141 = vmatprep.subr.mxu0 0.0
    %2142 = vmatpush1.msra.mxu0 0.0
    %2143 = vmatprep.subr.mxu0 0.0
    %2144 = vmatpush1.msra.mxu0 0.0
    %2145 = vmatprep.subr.mxu0 0.0
    %2146 = vmatpush1.msra.mxu0 0.0
    %2147 = vmatprep.subr.mxu0 0.0
    %2148 = vmatpush1.msra.mxu0 0.0
    %2149 = vmatprep.subr.mxu0 0.0
    %2150 = vmatpush1.msra.mxu0 0.0
    %2151 = vmatprep.subr.mxu0 0.0
    %2152 = vmatpush1.msra.mxu0 0.0
    %2153 = vmatprep.subr.mxu0 0.0
    %2154 = vmatpush1.msra.mxu0 0.0
    %2155 = vmatprep.subr.mxu0 0.0
    %2156 = vmatpush1.msra.mxu0 0.0
    %2157 = vmatprep.subr.mxu0 0.0
    %2158 = vmatpush1.msra.mxu0 0.0
    %2159 = vmatprep.subr.mxu0 0.0
    %2160 = vmatpush1.msra.mxu0 0.0
    %2161 = vmatprep.subr.mxu0 0.0
    %2162 = vmatpush1.msra.mxu0 0.0
    %2163 = vmatprep.subr.mxu0 0.0
    %2164 = vmatpush1.msra.mxu0 0.0
    %2165 = vmatprep.subr.mxu0 0.0
    %2166 = vmatpush1.msra.mxu0 0.0
    %2167 = vmatprep.subr.mxu0 0.0
    %2168 = vmatpush1.msra.mxu0 0.0
    %2169 = vmatprep.subr.mxu0 0.0
    %2170 = vmatpush1.msra.mxu0 0.0
    %2171 = vmatprep.subr.mxu0 0.0
    %2172 = vmatpush1.msra.mxu0 0.0
    %2173 = vmatprep.subr.mxu0 0.0
    %2174 = vmatpush1.msra.mxu0 0.0
    %2175 = vmatprep.subr.mxu0 0.0
    %2176 = vmatpush1.msra.mxu0 0.0
    %2177 = vmatprep.subr.mxu0 0.0
    %2178 = vmatpush1.msra.mxu0 0.0
    %2179 = vmatprep.subr.mxu0 0.0
    %2180 = vmatpush1.msra.mxu0 0.0
    %2181 = vmatprep.subr.mxu0 0.0
    %2182 = vmatpush1.msra.mxu0 0.0
    %2183 = vmatprep.subr.mxu0 0.0
    %2184 = vmatpush1.msra.mxu0 0.0
    %2185 = vmatprep.subr.mxu0 0.0
    %2186 = vmatpush1.msra.mxu0 0.0
    %2187 = vmatprep.subr.mxu0 0.0
    %2188 = vmatpush1.msra.mxu0 0.0
    %2189 = vmatprep.subr.mxu0 0.0
    %2190 = vmatpush1.msra.mxu0 0.0
    %2191 = vmatprep.subr.mxu0 0.0
    %2192 = vmatpush1.msra.mxu0 0.0
    %2193 = vmatprep.subr.mxu0 0.0
    %2194 = vmatpush1.msra.mxu0 0.0
    %2195 = vmatprep.mubr.f32.mxu0 0.0
    %2196 = vmatmul.mubr.f32.gmra.mrb[0].mxu0 %v2129
    %v2197 = vpop.f32.mrb[0].mxu0
    %v2198 = vadd.f32 0.0, %v2197
    %v2199 = vpop.f32.mrb[0].mxu0
    %2200 = vdwg.mxu0
    %v2202 = vsel %vm323, %v2055, 0
    %2204 = vmatprep.subr.mxu0 0.0
    %2205 = vmatpush1.msra.mxu0 %v170
    %2206 = vmatprep.subr.mxu0 0.0
    %2207 = vmatpush1.msra.mxu0 %v171
    %2208 = vmatprep.subr.mxu0 0.0
    %2209 = vmatpush1.msra.mxu0 0.0
    %2210 = vmatprep.subr.mxu0 0.0
    %2211 = vmatpush1.msra.mxu0 0.0
    %2212 = vmatprep.subr.mxu0 0.0
    %2213 = vmatpush1.msra.mxu0 0.0
    %2214 = vmatprep.subr.mxu0 0.0
    %2215 = vmatpush1.msra.mxu0 0.0
    %2216 = vmatprep.subr.mxu0 0.0
    %2217 = vmatpush1.msra.mxu0 0.0
    %2218 = vmatprep.subr.mxu0 0.0
    %2219 = vmatpush1.msra.mxu0 0.0
    %2220 = vmatprep.subr.mxu0 0.0
    %2221 = vmatpush1.msra.mxu0 0.0
    %2222 = vmatprep.subr.mxu0 0.0
    %2223 = vmatpush1.msra.mxu0 0.0
    %2224 = vmatprep.subr.mxu0 0.0
    %2225 = vmatpush1.msra.mxu0 0.0
    %2226 = vmatprep.subr.mxu0 0.0
    %2227 = vmatpush1.msra.mxu0 0.0
    %2228 = vmatprep.subr.mxu0 0.0
    %2229 = vmatpush1.msra.mxu0 0.0
    %2230 = vmatprep.subr.mxu0 0.0
    %2231 = vmatpush1.msra.mxu0 0.0
    %2232 = vmatprep.subr.mxu0 0.0
    %2233 = vmatpush1.msra.mxu0 0.0
    %2234 = vmatprep.subr.mxu0 0.0
    %2235 = vmatpush1.msra.mxu0 0.0
    %2236 = vmatprep.subr.mxu0 0.0
    %2237 = vmatpush1.msra.mxu0 0.0
    %2238 = vmatprep.subr.mxu0 0.0
    %2239 = vmatpush1.msra.mxu0 0.0
    %2240 = vmatprep.subr.mxu0 0.0
    %2241 = vmatpush1.msra.mxu0 0.0
    %2242 = vmatprep.subr.mxu0 0.0
    %2243 = vmatpush1.msra.mxu0 0.0
    %2244 = vmatprep.subr.mxu0 0.0
    %2245 = vmatpush1.msra.mxu0 0.0
    %2246 = vmatprep.subr.mxu0 0.0
    %2247 = vmatpush1.msra.mxu0 0.0
    %2248 = vmatprep.subr.mxu0 0.0
    %2249 = vmatpush1.msra.mxu0 0.0
    %2250 = vmatprep.subr.mxu0 0.0
    %2251 = vmatpush1.msra.mxu0 0.0
    %2252 = vmatprep.subr.mxu0 0.0
    %2253 = vmatpush1.msra.mxu0 0.0
    %2254 = vmatprep.subr.mxu0 0.0
    %2255 = vmatpush1.msra.mxu0 0.0
    %2256 = vmatprep.subr.mxu0 0.0
    %2257 = vmatpush1.msra.mxu0 0.0
    %2258 = vmatprep.subr.mxu0 0.0
    %2259 = vmatpush1.msra.mxu0 0.0
    %2260 = vmatprep.subr.mxu0 0.0
    %2261 = vmatpush1.msra.mxu0 0.0
    %2262 = vmatprep.subr.mxu0 0.0
    %2263 = vmatpush1.msra.mxu0 0.0
    %2264 = vmatprep.subr.mxu0 0.0
    %2265 = vmatpush1.msra.mxu0 0.0
    %2266 = vmatprep.subr.mxu0 0.0
    %2267 = vmatpush1.msra.mxu0 0.0
    %2268 = vmatprep.mubr.f32.mxu0 0.0
    %2269 = vmatmul.mubr.f32.gmra.mrb[0].mxu0 %v2202
    %v2270 = vpop.f32.mrb[0].mxu0
    %v2271 = vadd.f32 0.0, %v2270
    %v2272 = vpop.f32.mrb[0].mxu0
    %2273 = vdwg.mxu0
    %s2274 = scalar_lea.vmem [#allocation2], 8
    %v2275 = vld [vmem:[%s2274] sm:$0x3]
    %v2276 = vadd.f32 %v2275, %v2125
    %v2278 = vsel %vm176, %v2276, 0
    %2280 = vmatprep.subr.mxu0 0.0
    %2281 = vmatpush1.msra.mxu0 %v154
    %2282 = vmatprep.subr.mxu0 0.0
    %2283 = vmatpush1.msra.mxu0 %v155
    %2284 = vmatprep.subr.mxu0 0.0
    %2285 = vmatpush1.msra.mxu0 %v156
    %2286 = vmatprep.subr.mxu0 0.0
    %2287 = vmatpush1.msra.mxu0 %v157
    %2288 = vmatprep.subr.mxu0 0.0
    %2289 = vmatpush1.msra.mxu0 0.0
    %2290 = vmatprep.subr.mxu0 0.0
    %2291 = vmatpush1.msra.mxu0 0.0
    %2292 = vmatprep.subr.mxu0 0.0
    %2293 = vmatpush1.msra.mxu0 0.0
    %2294 = vmatprep.subr.mxu0 0.0
    %2295 = vmatpush1.msra.mxu0 0.0
    %2296 = vmatprep.subr.mxu0 0.0
    %2297 = vmatpush1.msra.mxu0 0.0
    %2298 = vmatprep.subr.mxu0 0.0
    %2299 = vmatpush1.msra.mxu0 0.0
    %2300 = vmatprep.subr.mxu0 0.0
    %2301 = vmatpush1.msra.mxu0 0.0
    %2302 = vmatprep.subr.mxu0 0.0
    %2303 = vmatpush1.msra.mxu0 0.0
    %2304 = vmatprep.subr.mxu0 0.0
    %2305 = vmatpush1.msra.mxu0 0.0
    %2306 = vmatprep.subr.mxu0 0.0
    %2307 = vmatpush1.msra.mxu0 0.0
    %2308 = vmatprep.subr.mxu0 0.0
    %2309 = vmatpush1.msra.mxu0 0.0
    %2310 = vmatprep.subr.mxu0 0.0
    %2311 = vmatpush1.msra.mxu0 0.0
    %2312 = vmatprep.subr.mxu0 0.0
    %2313 = vmatpush1.msra.mxu0 0.0
    %2314 = vmatprep.subr.mxu0 0.0
    %2315 = vmatpush1.msra.mxu0 0.0
    %2316 = vmatprep.subr.mxu0 0.0
    %2317 = vmatpush1.msra.mxu0 0.0
    %2318 = vmatprep.subr.mxu0 0.0
    %2319 = vmatpush1.msra.mxu0 0.0
    %2320 = vmatprep.subr.mxu0 0.0
    %2321 = vmatpush1.msra.mxu0 0.0
    %2322 = vmatprep.subr.mxu0 0.0
    %2323 = vmatpush1.msra.mxu0 0.0
    %2324 = vmatprep.subr.mxu0 0.0
    %2325 = vmatpush1.msra.mxu0 0.0
    %2326 = vmatprep.subr.mxu0 0.0
    %2327 = vmatpush1.msra.mxu0 0.0
    %2328 = vmatprep.subr.mxu0 0.0
    %2329 = vmatpush1.msra.mxu0 0.0
    %2330 = vmatprep.subr.mxu0 0.0
    %2331 = vmatpush1.msra.mxu0 0.0
    %2332 = vmatprep.subr.mxu0 0.0
    %2333 = vmatpush1.msra.mxu0 0.0
    %2334 = vmatprep.subr.mxu0 0.0
    %2335 = vmatpush1.msra.mxu0 0.0
    %2336 = vmatprep.subr.mxu0 0.0
    %2337 = vmatpush1.msra.mxu0 0.0
    %2338 = vmatprep.subr.mxu0 0.0
    %2339 = vmatpush1.msra.mxu0 0.0
    %2340 = vmatprep.subr.mxu0 0.0
    %2341 = vmatpush1.msra.mxu0 0.0
    %2342 = vmatprep.subr.mxu0 0.0
    %2343 = vmatpush1.msra.mxu0 0.0
    %2344 = vmatprep.mubr.f32.mxu0 0.0
    %2345 = vmatmul.mubr.f32.gmra.mrb[0].mxu0 %v2278
    %v2346 = vpop.f32.mrb[0].mxu0
    %v2347 = vadd.f32 %v2198, %v2346
    %v2348 = vpop.f32.mrb[0].mxu0
    %2349 = vdwg.mxu0
    %v2350 = vadd.f32 %v2347, %v476
    %v2351 = vxor.u32 %v2350, 2147483648
    %v2352 = vmul.f32 %v2351, 1.442695
    %v2353 = vpow.pop %v2352
    %v2354 = vadd.f32 %v2353, 1.0
    %v2355 = vrcp.pop %v2354
    %v2356 = vmul.f32 1.0, %v2355
    %v2357 = vsub.f32 %v2276, %v1899
    %v2358 = vmul.f32 %v2357, %v2356
    %v2359 = vadd.f32 %v1899, %v2358
    %vm2360 = vcmp.gt.f32.partialorder %v2359, 0.5
    %v2361 = vsel %vm2360, 1, 0
    %v2362 = vcvt.s32.f32 %v2361
    %v2363 = vsub.f32 1.0, %v2362
    %v2364 = vmul.f32 %v2363, %v2359
    %v2366 = vsel %vm176, %v2362, 0
    %2368 = vmatprep.subr.mxu0 0.0
    %2369 = vmatpush1.msra.mxu0 %v163
    %2370 = vmatprep.subr.mxu0 0.0
    %2371 = vmatpush1.msra.mxu0 %v164
    %2372 = vmatprep.subr.mxu0 0.0
    %2373 = vmatpush1.msra.mxu0 %v165
    %2374 = vmatprep.subr.mxu0 0.0
    %2375 = vmatpush1.msra.mxu0 %v166
    %2376 = vmatprep.subr.mxu0 0.0
    %2377 = vmatpush1.msra.mxu0 0.0
    %2378 = vmatprep.subr.mxu0 0.0
    %2379 = vmatpush1.msra.mxu0 0.0
    %2380 = vmatprep.subr.mxu0 0.0
    %2381 = vmatpush1.msra.mxu0 0.0
    %2382 = vmatprep.subr.mxu0 0.0
    %2383 = vmatpush1.msra.mxu0 0.0
    %2384 = vmatprep.subr.mxu0 0.0
    %2385 = vmatpush1.msra.mxu0 0.0
    %2386 = vmatprep.subr.mxu0 0.0
    %2387 = vmatpush1.msra.mxu0 0.0
    %2388 = vmatprep.subr.mxu0 0.0
    %2389 = vmatpush1.msra.mxu0 0.0
    %2390 = vmatprep.subr.mxu0 0.0
    %2391 = vmatpush1.msra.mxu0 0.0
    %2392 = vmatprep.subr.mxu0 0.0
    %2393 = vmatpush1.msra.mxu0 0.0
    %2394 = vmatprep.subr.mxu0 0.0
    %2395 = vmatpush1.msra.mxu0 0.0
    %2396 = vmatprep.subr.mxu0 0.0
    %2397 = vmatpush1.msra.mxu0 0.0
    %2398 = vmatprep.subr.mxu0 0.0
    %2399 = vmatpush1.msra.mxu0 0.0
    %2400 = vmatprep.subr.mxu0 0.0
    %2401 = vmatpush1.msra.mxu0 0.0
    %2402 = vmatprep.subr.mxu0 0.0
    %2403 = vmatpush1.msra.mxu0 0.0
    %2404 = vmatprep.subr.mxu0 0.0
    %2405 = vmatpush1.msra.mxu0 0.0
    %2406 = vmatprep.subr.mxu0 0.0
    %2407 = vmatpush1.msra.mxu0 0.0
    %2408 = vmatprep.subr.mxu0 0.0
    %2409 = vmatpush1.msra.mxu0 0.0
    %2410 = vmatprep.subr.mxu0 0.0
    %2411 = vmatpush1.msra.mxu0 0.0
    %2412 = vmatprep.subr.mxu0 0.0
    %2413 = vmatpush1.msra.mxu0 0.0
    %2414 = vmatprep.subr.mxu0 0.0
    %2415 = vmatpush1.msra.mxu0 0.0
    %2416 = vmatprep.subr.mxu0 0.0
    %2417 = vmatpush1.msra.mxu0 0.0
    %2418 = vmatprep.subr.mxu0 0.0
    %2419 = vmatpush1.msra.mxu0 0.0
    %2420 = vmatprep.subr.mxu0 0.0
    %2421 = vmatpush1.msra.mxu0 0.0
    %2422 = vmatprep.subr.mxu0 0.0
    %2423 = vmatpush1.msra.mxu0 0.0
    %2424 = vmatprep.subr.mxu0 0.0
    %2425 = vmatpush1.msra.mxu0 0.0
    %2426 = vmatprep.subr.mxu0 0.0
    %2427 = vmatpush1.msra.mxu0 0.0
    %2428 = vmatprep.subr.mxu0 0.0
    %2429 = vmatpush1.msra.mxu0 0.0
    %2430 = vmatprep.subr.mxu0 0.0
    %2431 = vmatpush1.msra.mxu0 0.0
    %2432 = vmatprep.mubr.f32.mxu0 0.0
    %2433 = vmatmul.mubr.f32.gmra.mrb[0].mxu0 %v2366
    %v2434 = vpop.f32.mrb[0].mxu0
    %v2435 = vadd.f32 %v497, %v2434
    %v2436 = vpop.f32.mrb[0].mxu0
    %2437 = vdwg.mxu0
    %v2439 = vsel %vm323, %v2435, 0
    %2441 = vmatprep.subr.mxu0 0.0
    %2442 = vmatpush1.msra.mxu0 %v168
    %2443 = vmatprep.subr.mxu0 0.0
    %2444 = vmatpush1.msra.mxu0 %v169
    %2445 = vmatprep.subr.mxu0 0.0
    %2446 = vmatpush1.msra.mxu0 0.0
    %2447 = vmatprep.subr.mxu0 0.0
    %2448 = vmatpush1.msra.mxu0 0.0
    %2449 = vmatprep.subr.mxu0 0.0
    %2450 = vmatpush1.msra.mxu0 0.0
    %2451 = vmatprep.subr.mxu0 0.0
    %2452 = vmatpush1.msra.mxu0 0.0
    %2453 = vmatprep.subr.mxu0 0.0
    %2454 = vmatpush1.msra.mxu0 0.0
    %2455 = vmatprep.subr.mxu0 0.0
    %2456 = vmatpush1.msra.mxu0 0.0
    %2457 = vmatprep.subr.mxu0 0.0
    %2458 = vmatpush1.msra.mxu0 0.0
    %2459 = vmatprep.subr.mxu0 0.0
    %2460 = vmatpush1.msra.mxu0 0.0
    %2461 = vmatprep.subr.mxu0 0.0
    %2462 = vmatpush1.msra.mxu0 0.0
    %2463 = vmatprep.subr.mxu0 0.0
    %2464 = vmatpush1.msra.mxu0 0.0
    %2465 = vmatprep.subr.mxu0 0.0
    %2466 = vmatpush1.msra.mxu0 0.0
    %2467 = vmatprep.subr.mxu0 0.0
    %2468 = vmatpush1.msra.mxu0 0.0
    %2469 = vmatprep.subr.mxu0 0.0
    %2470 = vmatpush1.msra.mxu0 0.0
    %2471 = vmatprep.subr.mxu0 0.0
    %2472 = vmatpush1.msra.mxu0 0.0
    %2473 = vmatprep.subr.mxu0 0.0
    %2474 = vmatpush1.msra.mxu0 0.0
    %2475 = vmatprep.subr.mxu0 0.0
    %2476 = vmatpush1.msra.mxu0 0.0
    %2477 = vmatprep.subr.mxu0 0.0
    %2478 = vmatpush1.msra.mxu0 0.0
    %2479 = vmatprep.subr.mxu0 0.0
    %2480 = vmatpush1.msra.mxu0 0.0
    %2481 = vmatprep.subr.mxu0 0.0
    %2482 = vmatpush1.msra.mxu0 0.0
    %2483 = vmatprep.subr.mxu0 0.0
    %2484 = vmatpush1.msra.mxu0 0.0
    %2485 = vmatprep.subr.mxu0 0.0
    %2486 = vmatpush1.msra.mxu0 0.0
    %2487 = vmatprep.subr.mxu0 0.0
    %2488 = vmatpush1.msra.mxu0 0.0
    %2489 = vmatprep.subr.mxu0 0.0
    %2490 = vmatpush1.msra.mxu0 0.0
    %2491 = vmatprep.subr.mxu0 0.0
    %2492 = vmatpush1.msra.mxu0 0.0
    %2493 = vmatprep.subr.mxu0 0.0
    %2494 = vmatpush1.msra.mxu0 0.0
    %2495 = vmatprep.subr.mxu0 0.0
    %2496 = vmatpush1.msra.mxu0 0.0
    %2497 = vmatprep.subr.mxu0 0.0
    %2498 = vmatpush1.msra.mxu0 0.0
    %2499 = vmatprep.subr.mxu0 0.0
    %2500 = vmatpush1.msra.mxu0 0.0
    %2501 = vmatprep.subr.mxu0 0.0
    %2502 = vmatpush1.msra.mxu0 0.0
    %2503 = vmatprep.subr.mxu0 0.0
    %2504 = vmatpush1.msra.mxu0 0.0
    %2505 = vmatprep.mubr.f32.mxu0 0.0
    %2506 = vmatmul.mubr.f32.gmra.mrb[0].mxu0 %v2439
    %v2507 = vpop.f32.mrb[0].mxu0
    %v2508 = vadd.f32 %v2271, %v2507
    %v2509 = vpop.f32.mrb[0].mxu0
    %2510 = vdwg.mxu0
    %v2511 = vadd.f32 %v2508, %v649
    %v2512 = vxor.u32 %v2511, 2147483648
    %v2513 = vmul.f32 %v2512, 1.442695
    %v2514 = vpow.pop %v2513
    %v2515 = vadd.f32 %v2514, 1.0
    %v2516 = vrcp.pop %v2515
    %v2517 = vmul.f32 1.0, %v2516
    %v2518 = vsub.f32 %v2435, %v2055
    %v2519 = vmul.f32 %v2518, %v2517
    %v2520 = vadd.f32 %v2055, %v2519
    %s2521 = scalar_lea.vmem [#allocation14], 8
    %2522 = vst.msk [vmem:[%s2521] sm:$0x3] %vm661, %v2520
    %2523 = vmatprep.subr.mxu0 0.0
    %2524 = vmatpush1.msra.mxu0 %v150
    %2525 = vmatprep.subr.mxu0 0.0
    %2526 = vmatpush1.msra.mxu0 %v151
    %2527 = vmatprep.subr.mxu0 0.0
    %2528 = vmatpush1.msra.mxu0 %v152
    %2529 = vmatprep.subr.mxu0 0.0
    %2530 = vmatpush1.msra.mxu0 %v153
    %2531 = vmatprep.subr.mxu0 0.0
    %2532 = vmatpush1.msra.mxu0 0.0
    %2533 = vmatprep.subr.mxu0 0.0
    %2534 = vmatpush1.msra.mxu0 0.0
    %2535 = vmatprep.subr.mxu0 0.0
    %2536 = vmatpush1.msra.mxu0 0.0
    %2537 = vmatprep.subr.mxu0 0.0
    %2538 = vmatpush1.msra.mxu0 0.0
    %2539 = vmatprep.subr.mxu0 0.0
    %2540 = vmatpush1.msra.mxu0 0.0
    %2541 = vmatprep.subr.mxu0 0.0
    %2542 = vmatpush1.msra.mxu0 0.0
    %2543 = vmatprep.subr.mxu0 0.0
    %2544 = vmatpush1.msra.mxu0 0.0
    %2545 = vmatprep.subr.mxu0 0.0
    %2546 = vmatpush1.msra.mxu0 0.0
    %2547 = vmatprep.subr.mxu0 0.0
    %2548 = vmatpush1.msra.mxu0 0.0
    %2549 = vmatprep.subr.mxu0 0.0
    %2550 = vmatpush1.msra.mxu0 0.0
    %2551 = vmatprep.subr.mxu0 0.0
    %2552 = vmatpush1.msra.mxu0 0.0
    %2553 = vmatprep.subr.mxu0 0.0
    %2554 = vmatpush1.msra.mxu0 0.0
    %2555 = vmatprep.subr.mxu0 0.0
    %2556 = vmatpush1.msra.mxu0 0.0
    %2557 = vmatprep.subr.mxu0 0.0
    %2558 = vmatpush1.msra.mxu0 0.0
    %2559 = vmatprep.subr.mxu0 0.0
    %2560 = vmatpush1.msra.mxu0 0.0
    %2561 = vmatprep.subr.mxu0 0.0
    %2562 = vmatpush1.msra.mxu0 0.0
    %2563 = vmatprep.subr.mxu0 0.0
    %2564 = vmatpush1.msra.mxu0 0.0
    %2565 = vmatprep.subr.mxu0 0.0
    %2566 = vmatpush1.msra.mxu0 0.0
    %2567 = vmatprep.subr.mxu0 0.0
    %2568 = vmatpush1.msra.mxu0 0.0
    %2569 = vmatprep.subr.mxu0 0.0
    %2570 = vmatpush1.msra.mxu0 0.0
    %2571 = vmatprep.subr.mxu0 0.0
    %2572 = vmatpush1.msra.mxu0 0.0
    %2573 = vmatprep.subr.mxu0 0.0
    %2574 = vmatpush1.msra.mxu0 0.0
    %2575 = vmatprep.subr.mxu0 0.0
    %2576 = vmatpush1.msra.mxu0 0.0
    %2577 = vmatprep.subr.mxu0 0.0
    %2578 = vmatpush1.msra.mxu0 0.0
    %2579 = vmatprep.subr.mxu0 0.0
    %2580 = vmatpush1.msra.mxu0 0.0
    %2581 = vmatprep.subr.mxu0 0.0
    %2582 = vmatpush1.msra.mxu0 0.0
    %2583 = vmatprep.subr.mxu0 0.0
    %2584 = vmatpush1.msra.mxu0 0.0
    %2585 = vmatprep.subr.mxu0 0.0
    %2586 = vmatpush1.msra.mxu0 0.0
    %2587 = vmatprep.mubr.f32.mxu0 0.0
    %2588 = vmatmul.mubr.f32.gmra.mrb[0].mxu0 %v2366
    %v2589 = vpop.f32.mrb[0].mxu0
    %v2590 = vadd.f32 0.0, %v2589
    %v2591 = vpop.f32.mrb[0].mxu0
    %2592 = vdwg.mxu0
    %v2594 = vsel %vm176, %v2364, 0
    %2596 = vmatprep.subr.mxu0 0.0
    %2597 = vmatpush1.msra.mxu0 %v158
    %2598 = vmatprep.subr.mxu0 0.0
    %2599 = vmatpush1.msra.mxu0 %v159
    %2600 = vmatprep.subr.mxu0 0.0
    %2601 = vmatpush1.msra.mxu0 %v160
    %2602 = vmatprep.subr.mxu0 0.0
    %2603 = vmatpush1.msra.mxu0 %v161
    %2604 = vmatprep.subr.mxu0 0.0
    %2605 = vmatpush1.msra.mxu0 0.0
    %2606 = vmatprep.subr.mxu0 0.0
    %2607 = vmatpush1.msra.mxu0 0.0
    %2608 = vmatprep.subr.mxu0 0.0
    %2609 = vmatpush1.msra.mxu0 0.0
    %2610 = vmatprep.subr.mxu0 0.0
    %2611 = vmatpush1.msra.mxu0 0.0
    %2612 = vmatprep.subr.mxu0 0.0
    %2613 = vmatpush1.msra.mxu0 0.0
    %2614 = vmatprep.subr.mxu0 0.0
    %2615 = vmatpush1.msra.mxu0 0.0
    %2616 = vmatprep.subr.mxu0 0.0
    %2617 = vmatpush1.msra.mxu0 0.0
    %2618 = vmatprep.subr.mxu0 0.0
    %2619 = vmatpush1.msra.mxu0 0.0
    %2620 = vmatprep.subr.mxu0 0.0
    %2621 = vmatpush1.msra.mxu0 0.0
    %2622 = vmatprep.subr.mxu0 0.0
    %2623 = vmatpush1.msra.mxu0 0.0
    %2624 = vmatprep.subr.mxu0 0.0
    %2625 = vmatpush1.msra.mxu0 0.0
    %2626 = vmatprep.subr.mxu0 0.0
    %2627 = vmatpush1.msra.mxu0 0.0
    %2628 = vmatprep.subr.mxu0 0.0
    %2629 = vmatpush1.msra.mxu0 0.0
    %2630 = vmatprep.subr.mxu0 0.0
    %2631 = vmatpush1.msra.mxu0 0.0
    %2632 = vmatprep.subr.mxu0 0.0
    %2633 = vmatpush1.msra.mxu0 0.0
    %2634 = vmatprep.subr.mxu0 0.0
    %2635 = vmatpush1.msra.mxu0 0.0
    %2636 = vmatprep.subr.mxu0 0.0
    %2637 = vmatpush1.msra.mxu0 0.0
    %2638 = vmatprep.subr.mxu0 0.0
    %2639 = vmatpush1.msra.mxu0 0.0
    %2640 = vmatprep.subr.mxu0 0.0
    %2641 = vmatpush1.msra.mxu0 0.0
    %2642 = vmatprep.subr.mxu0 0.0
    %2643 = vmatpush1.msra.mxu0 0.0
    %2644 = vmatprep.subr.mxu0 0.0
    %2645 = vmatpush1.msra.mxu0 0.0
    %2646 = vmatprep.subr.mxu0 0.0
    %2647 = vmatpush1.msra.mxu0 0.0
    %2648 = vmatprep.subr.mxu0 0.0
    %2649 = vmatpush1.msra.mxu0 0.0
    %2650 = vmatprep.subr.mxu0 0.0
    %2651 = vmatpush1.msra.mxu0 0.0
    %2652 = vmatprep.subr.mxu0 0.0
    %2653 = vmatpush1.msra.mxu0 0.0
    %2654 = vmatprep.subr.mxu0 0.0
    %2655 = vmatpush1.msra.mxu0 0.0
    %2656 = vmatprep.subr.mxu0 0.0
    %2657 = vmatpush1.msra.mxu0 0.0
    %2658 = vmatprep.subr.mxu0 0.0
    %2659 = vmatpush1.msra.mxu0 0.0
    %2660 = vmatprep.mubr.f32.mxu0 0.0
    %2661 = vmatmul.mubr.f32.gmra.mrb[0].mxu0 %v2594
    %v2662 = vpop.f32.mrb[0].mxu0
    %v2663 = vadd.f32 0.0, %v2662
    %v2664 = vpop.f32.mrb[0].mxu0
    %2665 = vdwg.mxu0
    %v2667 = vsel %vm323, %v2520, 0
    %2669 = vmatprep.subr.mxu0 0.0
    %2670 = vmatpush1.msra.mxu0 %v170
    %2671 = vmatprep.subr.mxu0 0.0
    %2672 = vmatpush1.msra.mxu0 %v171
    %2673 = vmatprep.subr.mxu0 0.0
    %2674 = vmatpush1.msra.mxu0 0.0
    %2675 = vmatprep.subr.mxu0 0.0
    %2676 = vmatpush1.msra.mxu0 0.0
    %2677 = vmatprep.subr.mxu0 0.0
    %2678 = vmatpush1.msra.mxu0 0.0
    %2679 = vmatprep.subr.mxu0 0.0
    %2680 = vmatpush1.msra.mxu0 0.0
    %2681 = vmatprep.subr.mxu0 0.0
    %2682 = vmatpush1.msra.mxu0 0.0
    %2683 = vmatprep.subr.mxu0 0.0
    %2684 = vmatpush1.msra.mxu0 0.0
    %2685 = vmatprep.subr.mxu0 0.0
    %2686 = vmatpush1.msra.mxu0 0.0
    %2687 = vmatprep.subr.mxu0 0.0
    %2688 = vmatpush1.msra.mxu0 0.0
    %2689 = vmatprep.subr.mxu0 0.0
    %2690 = vmatpush1.msra.mxu0 0.0
    %2691 = vmatprep.subr.mxu0 0.0
    %2692 = vmatpush1.msra.mxu0 0.0
    %2693 = vmatprep.subr.mxu0 0.0
    %2694 = vmatpush1.msra.mxu0 0.0
    %2695 = vmatprep.subr.mxu0 0.0
    %2696 = vmatpush1.msra.mxu0 0.0
    %2697 = vmatprep.subr.mxu0 0.0
    %2698 = vmatpush1.msra.mxu0 0.0
    %2699 = vmatprep.subr.mxu0 0.0
    %2700 = vmatpush1.msra.mxu0 0.0
    %2701 = vmatprep.subr.mxu0 0.0
    %2702 = vmatpush1.msra.mxu0 0.0
    %2703 = vmatprep.subr.mxu0 0.0
    %2704 = vmatpush1.msra.mxu0 0.0
    %2705 = vmatprep.subr.mxu0 0.0
    %2706 = vmatpush1.msra.mxu0 0.0
    %2707 = vmatprep.subr.mxu0 0.0
    %2708 = vmatpush1.msra.mxu0 0.0
    %2709 = vmatprep.subr.mxu0 0.0
    %2710 = vmatpush1.msra.mxu0 0.0
    %2711 = vmatprep.subr.mxu0 0.0
    %2712 = vmatpush1.msra.mxu0 0.0
    %2713 = vmatprep.subr.mxu0 0.0
    %2714 = vmatpush1.msra.mxu0 0.0
    %2715 = vmatprep.subr.mxu0 0.0
    %2716 = vmatpush1.msra.mxu0 0.0
    %2717 = vmatprep.subr.mxu0 0.0
    %2718 = vmatpush1.msra.mxu0 0.0
    %2719 = vmatprep.subr.mxu0 0.0
    %2720 = vmatpush1.msra.mxu0 0.0
    %2721 = vmatprep.subr.mxu0 0.0
    %2722 = vmatpush1.msra.mxu0 0.0
    %2723 = vmatprep.subr.mxu0 0.0
    %2724 = vmatpush1.msra.mxu0 0.0
    %2725 = vmatprep.subr.mxu0 0.0
    %2726 = vmatpush1.msra.mxu0 0.0
    %2727 = vmatprep.subr.mxu0 0.0
    %2728 = vmatpush1.msra.mxu0 0.0
    %2729 = vmatprep.subr.mxu0 0.0
    %2730 = vmatpush1.msra.mxu0 0.0
    %2731 = vmatprep.subr.mxu0 0.0
    %2732 = vmatpush1.msra.mxu0 0.0
    %2733 = vmatprep.mubr.f32.mxu0 0.0
    %2734 = vmatmul.mubr.f32.gmra.mrb[0].mxu0 %v2667
    %v2735 = vpop.f32.mrb[0].mxu0
    %v2736 = vadd.f32 0.0, %v2735
    %v2737 = vpop.f32.mrb[0].mxu0
    %2738 = vdwg.mxu0
    %s2739 = scalar_lea.vmem [#allocation2], 10
    %v2740 = vld [vmem:[%s2739] sm:$0x3]
    %v2741 = vadd.f32 %v2740, %v2590
    %v2743 = vsel %vm176, %v2741, 0
    %2745 = vmatprep.subr.mxu0 0.0
    %2746 = vmatpush1.msra.mxu0 %v154
    %2747 = vmatprep.subr.mxu0 0.0
    %2748 = vmatpush1.msra.mxu0 %v155
    %2749 = vmatprep.subr.mxu0 0.0
    %2750 = vmatpush1.msra.mxu0 %v156
    %2751 = vmatprep.subr.mxu0 0.0
    %2752 = vmatpush1.msra.mxu0 %v157
    %2753 = vmatprep.subr.mxu0 0.0
    %2754 = vmatpush1.msra.mxu0 0.0
    %2755 = vmatprep.subr.mxu0 0.0
    %2756 = vmatpush1.msra.mxu0 0.0
    %2757 = vmatprep.subr.mxu0 0.0
    %2758 = vmatpush1.msra.mxu0 0.0
    %2759 = vmatprep.subr.mxu0 0.0
    %2760 = vmatpush1.msra.mxu0 0.0
    %2761 = vmatprep.subr.mxu0 0.0
    %2762 = vmatpush1.msra.mxu0 0.0
    %2763 = vmatprep.subr.mxu0 0.0
    %2764 = vmatpush1.msra.mxu0 0.0
    %2765 = vmatprep.subr.mxu0 0.0
    %2766 = vmatpush1.msra.mxu0 0.0
    %2767 = vmatprep.subr.mxu0 0.0
    %2768 = vmatpush1.msra.mxu0 0.0
    %2769 = vmatprep.subr.mxu0 0.0
    %2770 = vmatpush1.msra.mxu0 0.0
    %2771 = vmatprep.subr.mxu0 0.0
    %2772 = vmatpush1.msra.mxu0 0.0
    %2773 = vmatprep.subr.mxu0 0.0
    %2774 = vmatpush1.msra.mxu0 0.0
    %2775 = vmatprep.subr.mxu0 0.0
    %2776 = vmatpush1.msra.mxu0 0.0
    %2777 = vmatprep.subr.mxu0 0.0
    %2778 = vmatpush1.msra.mxu0 0.0
    %2779 = vmatprep.subr.mxu0 0.0
    %2780 = vmatpush1.msra.mxu0 0.0
    %2781 = vmatprep.subr.mxu0 0.0
    %2782 = vmatpush1.msra.mxu0 0.0
    %2783 = vmatprep.subr.mxu0 0.0
    %2784 = vmatpush1.msra.mxu0 0.0
    %2785 = vmatprep.subr.mxu0 0.0
    %2786 = vmatpush1.msra.mxu0 0.0
    %2787 = vmatprep.subr.mxu0 0.0
    %2788 = vmatpush1.msra.mxu0 0.0
    %2789 = vmatprep.subr.mxu0 0.0
    %2790 = vmatpush1.msra.mxu0 0.0
    %2791 = vmatprep.subr.mxu0 0.0
    %2792 = vmatpush1.msra.mxu0 0.0
    %2793 = vmatprep.subr.mxu0 0.0
    %2794 = vmatpush1.msra.mxu0 0.0
    %2795 = vmatprep.subr.mxu0 0.0
    %2796 = vmatpush1.msra.mxu0 0.0
    %2797 = vmatprep.subr.mxu0 0.0
    %2798 = vmatpush1.msra.mxu0 0.0
    %2799 = vmatprep.subr.mxu0 0.0
    %2800 = vmatpush1.msra.mxu0 0.0
    %2801 = vmatprep.subr.mxu0 0.0
    %2802 = vmatpush1.msra.mxu0 0.0
    %2803 = vmatprep.subr.mxu0 0.0
    %2804 = vmatpush1.msra.mxu0 0.0
    %2805 = vmatprep.subr.mxu0 0.0
    %2806 = vmatpush1.msra.mxu0 0.0
    %2807 = vmatprep.subr.mxu0 0.0
    %2808 = vmatpush1.msra.mxu0 0.0
    %2809 = vmatprep.mubr.f32.mxu0 0.0
    %2810 = vmatmul.mubr.f32.gmra.mrb[0].mxu0 %v2743
    %v2811 = vpop.f32.mrb[0].mxu0
    %v2812 = vadd.f32 %v2663, %v2811
    %v2813 = vpop.f32.mrb[0].mxu0
    %2814 = vdwg.mxu0
    %v2815 = vadd.f32 %v2812, %v476
    %v2816 = vxor.u32 %v2815, 2147483648
    %v2817 = vmul.f32 %v2816, 1.442695
    %v2818 = vpow.pop %v2817
    %v2819 = vadd.f32 %v2818, 1.0
    %v2820 = vrcp.pop %v2819
    %v2821 = vmul.f32 1.0, %v2820
    %v2822 = vsub.f32 %v2741, %v2364
    %v2823 = vmul.f32 %v2822, %v2821
    %v2824 = vadd.f32 %v2364, %v2823
    %vm2825 = vcmp.gt.f32.partialorder %v2824, 0.5
    %v2826 = vsel %vm2825, 1, 0
    %v2827 = vcvt.s32.f32 %v2826
    %v2828 = vsub.f32 1.0, %v2827
    %v2829 = vmul.f32 %v2828, %v2824
    %v2831 = vsel %vm176, %v2827, 0
    %2833 = vmatprep.subr.mxu0 0.0
    %2834 = vmatpush1.msra.mxu0 %v163
    %2835 = vmatprep.subr.mxu0 0.0
    %2836 = vmatpush1.msra.mxu0 %v164
    %2837 = vmatprep.subr.mxu0 0.0
    %2838 = vmatpush1.msra.mxu0 %v165
    %2839 = vmatprep.subr.mxu0 0.0
    %2840 = vmatpush1.msra.mxu0 %v166
    %2841 = vmatprep.subr.mxu0 0.0
    %2842 = vmatpush1.msra.mxu0 0.0
    %2843 = vmatprep.subr.mxu0 0.0
    %2844 = vmatpush1.msra.mxu0 0.0
    %2845 = vmatprep.subr.mxu0 0.0
    %2846 = vmatpush1.msra.mxu0 0.0
    %2847 = vmatprep.subr.mxu0 0.0
    %2848 = vmatpush1.msra.mxu0 0.0
    %2849 = vmatprep.subr.mxu0 0.0
    %2850 = vmatpush1.msra.mxu0 0.0
    %2851 = vmatprep.subr.mxu0 0.0
    %2852 = vmatpush1.msra.mxu0 0.0
    %2853 = vmatprep.subr.mxu0 0.0
    %2854 = vmatpush1.msra.mxu0 0.0
    %2855 = vmatprep.subr.mxu0 0.0
    %2856 = vmatpush1.msra.mxu0 0.0
    %2857 = vmatprep.subr.mxu0 0.0
    %2858 = vmatpush1.msra.mxu0 0.0
    %2859 = vmatprep.subr.mxu0 0.0
    %2860 = vmatpush1.msra.mxu0 0.0
    %2861 = vmatprep.subr.mxu0 0.0
    %2862 = vmatpush1.msra.mxu0 0.0
    %2863 = vmatprep.subr.mxu0 0.0
    %2864 = vmatpush1.msra.mxu0 0.0
    %2865 = vmatprep.subr.mxu0 0.0
    %2866 = vmatpush1.msra.mxu0 0.0
    %2867 = vmatprep.subr.mxu0 0.0
    %2868 = vmatpush1.msra.mxu0 0.0
    %2869 = vmatprep.subr.mxu0 0.0
    %2870 = vmatpush1.msra.mxu0 0.0
    %2871 = vmatprep.subr.mxu0 0.0
    %2872 = vmatpush1.msra.mxu0 0.0
    %2873 = vmatprep.subr.mxu0 0.0
    %2874 = vmatpush1.msra.mxu0 0.0
    %2875 = vmatprep.subr.mxu0 0.0
    %2876 = vmatpush1.msra.mxu0 0.0
    %2877 = vmatprep.subr.mxu0 0.0
    %2878 = vmatpush1.msra.mxu0 0.0
    %2879 = vmatprep.subr.mxu0 0.0
    %2880 = vmatpush1.msra.mxu0 0.0
    %2881 = vmatprep.subr.mxu0 0.0
    %2882 = vmatpush1.msra.mxu0 0.0
    %2883 = vmatprep.subr.mxu0 0.0
    %2884 = vmatpush1.msra.mxu0 0.0
    %2885 = vmatprep.subr.mxu0 0.0
    %2886 = vmatpush1.msra.mxu0 0.0
    %2887 = vmatprep.subr.mxu0 0.0
    %2888 = vmatpush1.msra.mxu0 0.0
    %2889 = vmatprep.subr.mxu0 0.0
    %2890 = vmatpush1.msra.mxu0 0.0
    %2891 = vmatprep.subr.mxu0 0.0
    %2892 = vmatpush1.msra.mxu0 0.0
    %2893 = vmatprep.subr.mxu0 0.0
    %2894 = vmatpush1.msra.mxu0 0.0
    %2895 = vmatprep.subr.mxu0 0.0
    %2896 = vmatpush1.msra.mxu0 0.0
    %2897 = vmatprep.mubr.f32.mxu0 0.0
    %2898 = vmatmul.mubr.f32.gmra.mrb[0].mxu0 %v2831
    %v2899 = vpop.f32.mrb[0].mxu0
    %v2900 = vadd.f32 %v497, %v2899
    %v2901 = vpop.f32.mrb[0].mxu0
    %2902 = vdwg.mxu0
    %v2904 = vsel %vm323, %v2900, 0
    %2906 = vmatprep.subr.mxu0 0.0
    %2907 = vmatpush1.msra.mxu0 %v168
    %2908 = vmatprep.subr.mxu0 0.0
    %2909 = vmatpush1.msra.mxu0 %v169
    %2910 = vmatprep.subr.mxu0 0.0
    %2911 = vmatpush1.msra.mxu0 0.0
    %2912 = vmatprep.subr.mxu0 0.0
    %2913 = vmatpush1.msra.mxu0 0.0
    %2914 = vmatprep.subr.mxu0 0.0
    %2915 = vmatpush1.msra.mxu0 0.0
    %2916 = vmatprep.subr.mxu0 0.0
    %2917 = vmatpush1.msra.mxu0 0.0
    %2918 = vmatprep.subr.mxu0 0.0
    %2919 = vmatpush1.msra.mxu0 0.0
    %2920 = vmatprep.subr.mxu0 0.0
    %2921 = vmatpush1.msra.mxu0 0.0
    %2922 = vmatprep.subr.mxu0 0.0
    %2923 = vmatpush1.msra.mxu0 0.0
    %2924 = vmatprep.subr.mxu0 0.0
    %2925 = vmatpush1.msra.mxu0 0.0
    %2926 = vmatprep.subr.mxu0 0.0
    %2927 = vmatpush1.msra.mxu0 0.0
    %2928 = vmatprep.subr.mxu0 0.0
    %2929 = vmatpush1.msra.mxu0 0.0
    %2930 = vmatprep.subr.mxu0 0.0
    %2931 = vmatpush1.msra.mxu0 0.0
    %2932 = vmatprep.subr.mxu0 0.0
    %2933 = vmatpush1.msra.mxu0 0.0
    %2934 = vmatprep.subr.mxu0 0.0
    %2935 = vmatpush1.msra.mxu0 0.0
    %2936 = vmatprep.subr.mxu0 0.0
    %2937 = vmatpush1.msra.mxu0 0.0
    %2938 = vmatprep.subr.mxu0 0.0
    %2939 = vmatpush1.msra.mxu0 0.0
    %2940 = vmatprep.subr.mxu0 0.0
    %2941 = vmatpush1.msra.mxu0 0.0
    %2942 = vmatprep.subr.mxu0 0.0
    %2943 = vmatpush1.msra.mxu0 0.0
    %2944 = vmatprep.subr.mxu0 0.0
    %2945 = vmatpush1.msra.mxu0 0.0
    %2946 = vmatprep.subr.mxu0 0.0
    %2947 = vmatpush1.msra.mxu0 0.0
    %2948 = vmatprep.subr.mxu0 0.0
    %2949 = vmatpush1.msra.mxu0 0.0
    %2950 = vmatprep.subr.mxu0 0.0
    %2951 = vmatpush1.msra.mxu0 0.0
    %2952 = vmatprep.subr.mxu0 0.0
    %2953 = vmatpush1.msra.mxu0 0.0
    %2954 = vmatprep.subr.mxu0 0.0
    %2955 = vmatpush1.msra.mxu0 0.0
    %2956 = vmatprep.subr.mxu0 0.0
    %2957 = vmatpush1.msra.mxu0 0.0
    %2958 = vmatprep.subr.mxu0 0.0
    %2959 = vmatpush1.msra.mxu0 0.0
    %2960 = vmatprep.subr.mxu0 0.0
    %2961 = vmatpush1.msra.mxu0 0.0
    %2962 = vmatprep.subr.mxu0 0.0
    %2963 = vmatpush1.msra.mxu0 0.0
    %2964 = vmatprep.subr.mxu0 0.0
    %2965 = vmatpush1.msra.mxu0 0.0
    %2966 = vmatprep.subr.mxu0 0.0
    %2967 = vmatpush1.msra.mxu0 0.0
    %2968 = vmatprep.subr.mxu0 0.0
    %2969 = vmatpush1.msra.mxu0 0.0
    %2970 = vmatprep.mubr.f32.mxu0 0.0
    %2971 = vmatmul.mubr.f32.gmra.mrb[0].mxu0 %v2904
    %v2972 = vpop.f32.mrb[0].mxu0
    %v2973 = vadd.f32 %v2736, %v2972
    %v2974 = vpop.f32.mrb[0].mxu0
    %2975 = vdwg.mxu0
    %v2976 = vadd.f32 %v2973, %v649
    %v2977 = vxor.u32 %v2976, 2147483648
    %v2978 = vmul.f32 %v2977, 1.442695
    %v2979 = vpow.pop %v2978
    %v2980 = vadd.f32 %v2979, 1.0
    %v2981 = vrcp.pop %v2980
    %v2982 = vmul.f32 1.0, %v2981
    %v2983 = vsub.f32 %v2900, %v2520
    %v2984 = vmul.f32 %v2983, %v2982
    %v2985 = vadd.f32 %v2520, %v2984
    %s2986 = scalar_lea.vmem [#allocation14], 10
    %2987 = vst.msk [vmem:[%s2986] sm:$0x3] %vm661, %v2985
    %2988 = vmatprep.subr.mxu0 0.0
    %2989 = vmatpush1.msra.mxu0 %v150
    %2990 = vmatprep.subr.mxu0 0.0
    %2991 = vmatpush1.msra.mxu0 %v151
    %2992 = vmatprep.subr.mxu0 0.0
    %2993 = vmatpush1.msra.mxu0 %v152
    %2994 = vmatprep.subr.mxu0 0.0
    %2995 = vmatpush1.msra.mxu0 %v153
    %2996 = vmatprep.subr.mxu0 0.0
    %2997 = vmatpush1.msra.mxu0 0.0
    %2998 = vmatprep.subr.mxu0 0.0
    %2999 = vmatpush1.msra.mxu0 0.0
    %3000 = vmatprep.subr.mxu0 0.0
    %3001 = vmatpush1.msra.mxu0 0.0
    %3002 = vmatprep.subr.mxu0 0.0
    %3003 = vmatpush1.msra.mxu0 0.0
    %3004 = vmatprep.subr.mxu0 0.0
    %3005 = vmatpush1.msra.mxu0 0.0
    %3006 = vmatprep.subr.mxu0 0.0
    %3007 = vmatpush1.msra.mxu0 0.0
    %3008 = vmatprep.subr.mxu0 0.0
    %3009 = vmatpush1.msra.mxu0 0.0
    %3010 = vmatprep.subr.mxu0 0.0
    %3011 = vmatpush1.msra.mxu0 0.0
    %3012 = vmatprep.subr.mxu0 0.0
    %3013 = vmatpush1.msra.mxu0 0.0
    %3014 = vmatprep.subr.mxu0 0.0
    %3015 = vmatpush1.msra.mxu0 0.0
    %3016 = vmatprep.subr.mxu0 0.0
    %3017 = vmatpush1.msra.mxu0 0.0
    %3018 = vmatprep.subr.mxu0 0.0
    %3019 = vmatpush1.msra.mxu0 0.0
    %3020 = vmatprep.subr.mxu0 0.0
    %3021 = vmatpush1.msra.mxu0 0.0
    %3022 = vmatprep.subr.mxu0 0.0
    %3023 = vmatpush1.msra.mxu0 0.0
    %3024 = vmatprep.subr.mxu0 0.0
    %3025 = vmatpush1.msra.mxu0 0.0
    %3026 = vmatprep.subr.mxu0 0.0
    %3027 = vmatpush1.msra.mxu0 0.0
    %3028 = vmatprep.subr.mxu0 0.0
    %3029 = vmatpush1.msra.mxu0 0.0
    %3030 = vmatprep.subr.mxu0 0.0
    %3031 = vmatpush1.msra.mxu0 0.0
    %3032 = vmatprep.subr.mxu0 0.0
    %3033 = vmatpush1.msra.mxu0 0.0
    %3034 = vmatprep.subr.mxu0 0.0
    %3035 = vmatpush1.msra.mxu0 0.0
    %3036 = vmatprep.subr.mxu0 0.0
    %3037 = vmatpush1.msra.mxu0 0.0
    %3038 = vmatprep.subr.mxu0 0.0
    %3039 = vmatpush1.msra.mxu0 0.0
    %3040 = vmatprep.subr.mxu0 0.0
    %3041 = vmatpush1.msra.mxu0 0.0
    %3042 = vmatprep.subr.mxu0 0.0
    %3043 = vmatpush1.msra.mxu0 0.0
    %3044 = vmatprep.subr.mxu0 0.0
    %3045 = vmatpush1.msra.mxu0 0.0
    %3046 = vmatprep.subr.mxu0 0.0
    %3047 = vmatpush1.msra.mxu0 0.0
    %3048 = vmatprep.subr.mxu0 0.0
    %3049 = vmatpush1.msra.mxu0 0.0
    %3050 = vmatprep.subr.mxu0 0.0
    %3051 = vmatpush1.msra.mxu0 0.0
    %3052 = vmatprep.mubr.f32.mxu0 0.0
    %3053 = vmatmul.mubr.f32.gmra.mrb[0].mxu0 %v2831
    %v3054 = vpop.f32.mrb[0].mxu0
    %v3055 = vadd.f32 0.0, %v3054
    %v3056 = vpop.f32.mrb[0].mxu0
    %3057 = vdwg.mxu0
    %v3059 = vsel %vm176, %v2829, 0
    %3061 = vmatprep.subr.mxu0 0.0
    %3062 = vmatpush1.msra.mxu0 %v158
    %3063 = vmatprep.subr.mxu0 0.0
    %3064 = vmatpush1.msra.mxu0 %v159
    %3065 = vmatprep.subr.mxu0 0.0
    %3066 = vmatpush1.msra.mxu0 %v160
    %3067 = vmatprep.subr.mxu0 0.0
    %3068 = vmatpush1.msra.mxu0 %v161
    %3069 = vmatprep.subr.mxu0 0.0
    %3070 = vmatpush1.msra.mxu0 0.0
    %3071 = vmatprep.subr.mxu0 0.0
    %3072 = vmatpush1.msra.mxu0 0.0
    %3073 = vmatprep.subr.mxu0 0.0
    %3074 = vmatpush1.msra.mxu0 0.0
    %3075 = vmatprep.subr.mxu0 0.0
    %3076 = vmatpush1.msra.mxu0 0.0
    %3077 = vmatprep.subr.mxu0 0.0
    %3078 = vmatpush1.msra.mxu0 0.0
    %3079 = vmatprep.subr.mxu0 0.0
    %3080 = vmatpush1.msra.mxu0 0.0
    %3081 = vmatprep.subr.mxu0 0.0
    %3082 = vmatpush1.msra.mxu0 0.0
    %3083 = vmatprep.subr.mxu0 0.0
    %3084 = vmatpush1.msra.mxu0 0.0
    %3085 = vmatprep.subr.mxu0 0.0
    %3086 = vmatpush1.msra.mxu0 0.0
    %3087 = vmatprep.subr.mxu0 0.0
    %3088 = vmatpush1.msra.mxu0 0.0
    %3089 = vmatprep.subr.mxu0 0.0
    %3090 = vmatpush1.msra.mxu0 0.0
    %3091 = vmatprep.subr.mxu0 0.0
    %3092 = vmatpush1.msra.mxu0 0.0
    %3093 = vmatprep.subr.mxu0 0.0
    %3094 = vmatpush1.msra.mxu0 0.0
    %3095 = vmatprep.subr.mxu0 0.0
    %3096 = vmatpush1.msra.mxu0 0.0
    %3097 = vmatprep.subr.mxu0 0.0
    %3098 = vmatpush1.msra.mxu0 0.0
    %3099 = vmatprep.subr.mxu0 0.0
    %3100 = vmatpush1.msra.mxu0 0.0
    %3101 = vmatprep.subr.mxu0 0.0
    %3102 = vmatpush1.msra.mxu0 0.0
    %3103 = vmatprep.subr.mxu0 0.0
    %3104 = vmatpush1.msra.mxu0 0.0
    %3105 = vmatprep.subr.mxu0 0.0
    %3106 = vmatpush1.msra.mxu0 0.0
    %3107 = vmatprep.subr.mxu0 0.0
    %3108 = vmatpush1.msra.mxu0 0.0
    %3109 = vmatprep.subr.mxu0 0.0
    %3110 = vmatpush1.msra.mxu0 0.0
    %3111 = vmatprep.subr.mxu0 0.0
    %3112 = vmatpush1.msra.mxu0 0.0
    %3113 = vmatprep.subr.mxu0 0.0
    %3114 = vmatpush1.msra.mxu0 0.0
    %3115 = vmatprep.subr.mxu0 0.0
    %3116 = vmatpush1.msra.mxu0 0.0
    %3117 = vmatprep.subr.mxu0 0.0
    %3118 = vmatpush1.msra.mxu0 0.0
    %3119 = vmatprep.subr.mxu0 0.0
    %3120 = vmatpush1.msra.mxu0 0.0
    %3121 = vmatprep.subr.mxu0 0.0
    %3122 = vmatpush1.msra.mxu0 0.0
    %3123 = vmatprep.subr.mxu0 0.0
    %3124 = vmatpush1.msra.mxu0 0.0
    %3125 = vmatprep.mubr.f32.mxu0 0.0
    %3126 = vmatmul.mubr.f32.gmra.mrb[0].mxu0 %v3059
    %v3127 = vpop.f32.mrb[0].mxu0
    %v3128 = vadd.f32 0.0, %v3127
    %v3129 = vpop.f32.mrb[0].mxu0
    %3130 = vdwg.mxu0
    %v3132 = vsel %vm323, %v2985, 0
    %3134 = vmatprep.subr.mxu0 0.0
    %3135 = vmatpush1.msra.mxu0 %v170
    %3136 = vmatprep.subr.mxu0 0.0
    %3137 = vmatpush1.msra.mxu0 %v171
    %3138 = vmatprep.subr.mxu0 0.0
    %3139 = vmatpush1.msra.mxu0 0.0
    %3140 = vmatprep.subr.mxu0 0.0
    %3141 = vmatpush1.msra.mxu0 0.0
    %3142 = vmatprep.subr.mxu0 0.0
    %3143 = vmatpush1.msra.mxu0 0.0
    %3144 = vmatprep.subr.mxu0 0.0
    %3145 = vmatpush1.msra.mxu0 0.0
    %3146 = vmatprep.subr.mxu0 0.0
    %3147 = vmatpush1.msra.mxu0 0.0
    %3148 = vmatprep.subr.mxu0 0.0
    %3149 = vmatpush1.msra.mxu0 0.0
    %3150 = vmatprep.subr.mxu0 0.0
    %3151 = vmatpush1.msra.mxu0 0.0
    %3152 = vmatprep.subr.mxu0 0.0
    %3153 = vmatpush1.msra.mxu0 0.0
    %3154 = vmatprep.subr.mxu0 0.0
    %3155 = vmatpush1.msra.mxu0 0.0
    %3156 = vmatprep.subr.mxu0 0.0
    %3157 = vmatpush1.msra.mxu0 0.0
    %3158 = vmatprep.subr.mxu0 0.0
    %3159 = vmatpush1.msra.mxu0 0.0
    %3160 = vmatprep.subr.mxu0 0.0
    %3161 = vmatpush1.msra.mxu0 0.0
    %3162 = vmatprep.subr.mxu0 0.0
    %3163 = vmatpush1.msra.mxu0 0.0
    %3164 = vmatprep.subr.mxu0 0.0
    %3165 = vmatpush1.msra.mxu0 0.0
    %3166 = vmatprep.subr.mxu0 0.0
    %3167 = vmatpush1.msra.mxu0 0.0
    %3168 = vmatprep.subr.mxu0 0.0
    %3169 = vmatpush1.msra.mxu0 0.0
    %3170 = vmatprep.subr.mxu0 0.0
    %3171 = vmatpush1.msra.mxu0 0.0
    %3172 = vmatprep.subr.mxu0 0.0
    %3173 = vmatpush1.msra.mxu0 0.0
    %3174 = vmatprep.subr.mxu0 0.0
    %3175 = vmatpush1.msra.mxu0 0.0
    %3176 = vmatprep.subr.mxu0 0.0
    %3177 = vmatpush1.msra.mxu0 0.0
    %3178 = vmatprep.subr.mxu0 0.0
    %3179 = vmatpush1.msra.mxu0 0.0
    %3180 = vmatprep.subr.mxu0 0.0
    %3181 = vmatpush1.msra.mxu0 0.0
    %3182 = vmatprep.subr.mxu0 0.0
    %3183 = vmatpush1.msra.mxu0 0.0
    %3184 = vmatprep.subr.mxu0 0.0
    %3185 = vmatpush1.msra.mxu0 0.0
    %3186 = vmatprep.subr.mxu0 0.0
    %3187 = vmatpush1.msra.mxu0 0.0
    %3188 = vmatprep.subr.mxu0 0.0
    %3189 = vmatpush1.msra.mxu0 0.0
    %3190 = vmatprep.subr.mxu0 0.0
    %3191 = vmatpush1.msra.mxu0 0.0
    %3192 = vmatprep.subr.mxu0 0.0
    %3193 = vmatpush1.msra.mxu0 0.0
    %3194 = vmatprep.subr.mxu0 0.0
    %3195 = vmatpush1.msra.mxu0 0.0
    %3196 = vmatprep.subr.mxu0 0.0
    %3197 = vmatpush1.msra.mxu0 0.0
    %3198 = vmatprep.mubr.f32.mxu0 0.0
    %3199 = vmatmul.mubr.f32.gmra.mrb[0].mxu0 %v3132
    %v3200 = vpop.f32.mrb[0].mxu0
    %v3201 = vadd.f32 0.0, %v3200
    %v3202 = vpop.f32.mrb[0].mxu0
    %3203 = vdwg.mxu0
    %s3204 = scalar_lea.vmem [#allocation2], 12
    %v3205 = vld [vmem:[%s3204] sm:$0x3]
    %v3206 = vadd.f32 %v3205, %v3055
    %v3208 = vsel %vm176, %v3206, 0
    %3210 = vmatprep.subr.mxu0 0.0
    %3211 = vmatpush1.msra.mxu0 %v154
    %3212 = vmatprep.subr.mxu0 0.0
    %3213 = vmatpush1.msra.mxu0 %v155
    %3214 = vmatprep.subr.mxu0 0.0
    %3215 = vmatpush1.msra.mxu0 %v156
    %3216 = vmatprep.subr.mxu0 0.0
    %3217 = vmatpush1.msra.mxu0 %v157
    %3218 = vmatprep.subr.mxu0 0.0
    %3219 = vmatpush1.msra.mxu0 0.0
    %3220 = vmatprep.subr.mxu0 0.0
    %3221 = vmatpush1.msra.mxu0 0.0
    %3222 = vmatprep.subr.mxu0 0.0
    %3223 = vmatpush1.msra.mxu0 0.0
    %3224 = vmatprep.subr.mxu0 0.0
    %3225 = vmatpush1.msra.mxu0 0.0
    %3226 = vmatprep.subr.mxu0 0.0
    %3227 = vmatpush1.msra.mxu0 0.0
    %3228 = vmatprep.subr.mxu0 0.0
    %3229 = vmatpush1.msra.mxu0 0.0
    %3230 = vmatprep.subr.mxu0 0.0
    %3231 = vmatpush1.msra.mxu0 0.0
    %3232 = vmatprep.subr.mxu0 0.0
    %3233 = vmatpush1.msra.mxu0 0.0
    %3234 = vmatprep.subr.mxu0 0.0
    %3235 = vmatpush1.msra.mxu0 0.0
    %3236 = vmatprep.subr.mxu0 0.0
    %3237 = vmatpush1.msra.mxu0 0.0
    %3238 = vmatprep.subr.mxu0 0.0
    %3239 = vmatpush1.msra.mxu0 0.0
    %3240 = vmatprep.subr.mxu0 0.0
    %3241 = vmatpush1.msra.mxu0 0.0
    %3242 = vmatprep.subr.mxu0 0.0
    %3243 = vmatpush1.msra.mxu0 0.0
    %3244 = vmatprep.subr.mxu0 0.0
    %3245 = vmatpush1.msra.mxu0 0.0
    %3246 = vmatprep.subr.mxu0 0.0
    %3247 = vmatpush1.msra.mxu0 0.0
    %3248 = vmatprep.subr.mxu0 0.0
    %3249 = vmatpush1.msra.mxu0 0.0
    %3250 = vmatprep.subr.mxu0 0.0
    %3251 = vmatpush1.msra.mxu0 0.0
    %3252 = vmatprep.subr.mxu0 0.0
    %3253 = vmatpush1.msra.mxu0 0.0
    %3254 = vmatprep.subr.mxu0 0.0
    %3255 = vmatpush1.msra.mxu0 0.0
    %3256 = vmatprep.subr.mxu0 0.0
    %3257 = vmatpush1.msra.mxu0 0.0
    %3258 = vmatprep.subr.mxu0 0.0
    %3259 = vmatpush1.msra.mxu0 0.0
    %3260 = vmatprep.subr.mxu0 0.0
    %3261 = vmatpush1.msra.mxu0 0.0
    %3262 = vmatprep.subr.mxu0 0.0
    %3263 = vmatpush1.msra.mxu0 0.0
    %3264 = vmatprep.subr.mxu0 0.0
    %3265 = vmatpush1.msra.mxu0 0.0
    %3266 = vmatprep.subr.mxu0 0.0
    %3267 = vmatpush1.msra.mxu0 0.0
    %3268 = vmatprep.subr.mxu0 0.0
    %3269 = vmatpush1.msra.mxu0 0.0
    %3270 = vmatprep.subr.mxu0 0.0
    %3271 = vmatpush1.msra.mxu0 0.0
    %3272 = vmatprep.subr.mxu0 0.0
    %3273 = vmatpush1.msra.mxu0 0.0
    %3274 = vmatprep.mubr.f32.mxu0 0.0
    %3275 = vmatmul.mubr.f32.gmra.mrb[0].mxu0 %v3208
    %v3276 = vpop.f32.mrb[0].mxu0
    %v3277 = vadd.f32 %v3128, %v3276
    %v3278 = vpop.f32.mrb[0].mxu0
    %3279 = vdwg.mxu0
    %v3280 = vadd.f32 %v3277, %v476
    %v3281 = vxor.u32 %v3280, 2147483648
    %v3282 = vmul.f32 %v3281, 1.442695
    %v3283 = vpow.pop %v3282
    %v3284 = vadd.f32 %v3283, 1.0
    %v3285 = vrcp.pop %v3284
    %v3286 = vmul.f32 1.0, %v3285
    %v3287 = vsub.f32 %v3206, %v2829
    %v3288 = vmul.f32 %v3287, %v3286
    %v3289 = vadd.f32 %v2829, %v3288
    %vm3290 = vcmp.gt.f32.partialorder %v3289, 0.5
    %v3291 = vsel %vm3290, 1, 0
    %v3292 = vcvt.s32.f32 %v3291
    %v3293 = vsub.f32 1.0, %v3292
    %v3294 = vmul.f32 %v3293, %v3289
    %v3296 = vsel %vm176, %v3292, 0
    %3298 = vmatprep.subr.mxu0 0.0
    %3299 = vmatpush1.msra.mxu0 %v163
    %3300 = vmatprep.subr.mxu0 0.0
    %3301 = vmatpush1.msra.mxu0 %v164
    %3302 = vmatprep.subr.mxu0 0.0
    %3303 = vmatpush1.msra.mxu0 %v165
    %3304 = vmatprep.subr.mxu0 0.0
    %3305 = vmatpush1.msra.mxu0 %v166
    %3306 = vmatprep.subr.mxu0 0.0
    %3307 = vmatpush1.msra.mxu0 0.0
    %3308 = vmatprep.subr.mxu0 0.0
    %3309 = vmatpush1.msra.mxu0 0.0
    %3310 = vmatprep.subr.mxu0 0.0
    %3311 = vmatpush1.msra.mxu0 0.0
    %3312 = vmatprep.subr.mxu0 0.0
    %3313 = vmatpush1.msra.mxu0 0.0
    %3314 = vmatprep.subr.mxu0 0.0
    %3315 = vmatpush1.msra.mxu0 0.0
    %3316 = vmatprep.subr.mxu0 0.0
    %3317 = vmatpush1.msra.mxu0 0.0
    %3318 = vmatprep.subr.mxu0 0.0
    %3319 = vmatpush1.msra.mxu0 0.0
    %3320 = vmatprep.subr.mxu0 0.0
    %3321 = vmatpush1.msra.mxu0 0.0
    %3322 = vmatprep.subr.mxu0 0.0
    %3323 = vmatpush1.msra.mxu0 0.0
    %3324 = vmatprep.subr.mxu0 0.0
    %3325 = vmatpush1.msra.mxu0 0.0
    %3326 = vmatprep.subr.mxu0 0.0
    %3327 = vmatpush1.msra.mxu0 0.0
    %3328 = vmatprep.subr.mxu0 0.0
    %3329 = vmatpush1.msra.mxu0 0.0
    %3330 = vmatprep.subr.mxu0 0.0
    %3331 = vmatpush1.msra.mxu0 0.0
    %3332 = vmatprep.subr.mxu0 0.0
    %3333 = vmatpush1.msra.mxu0 0.0
    %3334 = vmatprep.subr.mxu0 0.0
    %3335 = vmatpush1.msra.mxu0 0.0
    %3336 = vmatprep.subr.mxu0 0.0
    %3337 = vmatpush1.msra.mxu0 0.0
    %3338 = vmatprep.subr.mxu0 0.0
    %3339 = vmatpush1.msra.mxu0 0.0
    %3340 = vmatprep.subr.mxu0 0.0
    %3341 = vmatpush1.msra.mxu0 0.0
    %3342 = vmatprep.subr.mxu0 0.0
    %3343 = vmatpush1.msra.mxu0 0.0
    %3344 = vmatprep.subr.mxu0 0.0
    %3345 = vmatpush1.msra.mxu0 0.0
    %3346 = vmatprep.subr.mxu0 0.0
    %3347 = vmatpush1.msra.mxu0 0.0
    %3348 = vmatprep.subr.mxu0 0.0
    %3349 = vmatpush1.msra.mxu0 0.0
    %3350 = vmatprep.subr.mxu0 0.0
    %3351 = vmatpush1.msra.mxu0 0.0
    %3352 = vmatprep.subr.mxu0 0.0
    %3353 = vmatpush1.msra.mxu0 0.0
    %3354 = vmatprep.subr.mxu0 0.0
    %3355 = vmatpush1.msra.mxu0 0.0
    %3356 = vmatprep.subr.mxu0 0.0
    %3357 = vmatpush1.msra.mxu0 0.0
    %3358 = vmatprep.subr.mxu0 0.0
    %3359 = vmatpush1.msra.mxu0 0.0
    %3360 = vmatprep.subr.mxu0 0.0
    %3361 = vmatpush1.msra.mxu0 0.0
    %3362 = vmatprep.mubr.f32.mxu0 0.0
    %3363 = vmatmul.mubr.f32.gmra.mrb[0].mxu0 %v3296
    %v3364 = vpop.f32.mrb[0].mxu0
    %v3365 = vadd.f32 %v497, %v3364
    %v3366 = vpop.f32.mrb[0].mxu0
    %3367 = vdwg.mxu0
    %v3369 = vsel %vm323, %v3365, 0
    %3371 = vmatprep.subr.mxu0 0.0
    %3372 = vmatpush1.msra.mxu0 %v168
    %3373 = vmatprep.subr.mxu0 0.0
    %3374 = vmatpush1.msra.mxu0 %v169
    %3375 = vmatprep.subr.mxu0 0.0
    %3376 = vmatpush1.msra.mxu0 0.0
    %3377 = vmatprep.subr.mxu0 0.0
    %3378 = vmatpush1.msra.mxu0 0.0
    %3379 = vmatprep.subr.mxu0 0.0
    %3380 = vmatpush1.msra.mxu0 0.0
    %3381 = vmatprep.subr.mxu0 0.0
    %3382 = vmatpush1.msra.mxu0 0.0
    %3383 = vmatprep.subr.mxu0 0.0
    %3384 = vmatpush1.msra.mxu0 0.0
    %3385 = vmatprep.subr.mxu0 0.0
    %3386 = vmatpush1.msra.mxu0 0.0
    %3387 = vmatprep.subr.mxu0 0.0
    %3388 = vmatpush1.msra.mxu0 0.0
    %3389 = vmatprep.subr.mxu0 0.0
    %3390 = vmatpush1.msra.mxu0 0.0
    %3391 = vmatprep.subr.mxu0 0.0
    %3392 = vmatpush1.msra.mxu0 0.0
    %3393 = vmatprep.subr.mxu0 0.0
    %3394 = vmatpush1.msra.mxu0 0.0
    %3395 = vmatprep.subr.mxu0 0.0
    %3396 = vmatpush1.msra.mxu0 0.0
    %3397 = vmatprep.subr.mxu0 0.0
    %3398 = vmatpush1.msra.mxu0 0.0
    %3399 = vmatprep.subr.mxu0 0.0
    %3400 = vmatpush1.msra.mxu0 0.0
    %3401 = vmatprep.subr.mxu0 0.0
    %3402 = vmatpush1.msra.mxu0 0.0
    %3403 = vmatprep.subr.mxu0 0.0
    %3404 = vmatpush1.msra.mxu0 0.0
    %3405 = vmatprep.subr.mxu0 0.0
    %3406 = vmatpush1.msra.mxu0 0.0
    %3407 = vmatprep.subr.mxu0 0.0
    %3408 = vmatpush1.msra.mxu0 0.0
    %3409 = vmatprep.subr.mxu0 0.0
    %3410 = vmatpush1.msra.mxu0 0.0
    %3411 = vmatprep.subr.mxu0 0.0
    %3412 = vmatpush1.msra.mxu0 0.0
    %3413 = vmatprep.subr.mxu0 0.0
    %3414 = vmatpush1.msra.mxu0 0.0
    %3415 = vmatprep.subr.mxu0 0.0
    %3416 = vmatpush1.msra.mxu0 0.0
    %3417 = vmatprep.subr.mxu0 0.0
    %3418 = vmatpush1.msra.mxu0 0.0
    %3419 = vmatprep.subr.mxu0 0.0
    %3420 = vmatpush1.msra.mxu0 0.0
    %3421 = vmatprep.subr.mxu0 0.0
    %3422 = vmatpush1.msra.mxu0 0.0
    %3423 = vmatprep.subr.mxu0 0.0
    %3424 = vmatpush1.msra.mxu0 0.0
    %3425 = vmatprep.subr.mxu0 0.0
    %3426 = vmatpush1.msra.mxu0 0.0
    %3427 = vmatprep.subr.mxu0 0.0
    %3428 = vmatpush1.msra.mxu0 0.0
    %3429 = vmatprep.subr.mxu0 0.0
    %3430 = vmatpush1.msra.mxu0 0.0
    %3431 = vmatprep.subr.mxu0 0.0
    %3432 = vmatpush1.msra.mxu0 0.0
    %3433 = vmatprep.subr.mxu0 0.0
    %3434 = vmatpush1.msra.mxu0 0.0
    %3435 = vmatprep.mubr.f32.mxu0 0.0
    %3436 = vmatmul.mubr.f32.gmra.mrb[0].mxu0 %v3369
    %v3437 = vpop.f32.mrb[0].mxu0
    %v3438 = vadd.f32 %v3201, %v3437
    %v3439 = vpop.f32.mrb[0].mxu0
    %3440 = vdwg.mxu0
    %v3441 = vadd.f32 %v3438, %v649
    %v3442 = vxor.u32 %v3441, 2147483648
    %v3443 = vmul.f32 %v3442, 1.442695
    %v3444 = vpow.pop %v3443
    %v3445 = vadd.f32 %v3444, 1.0
    %v3446 = vrcp.pop %v3445
    %v3447 = vmul.f32 1.0, %v3446
    %v3448 = vsub.f32 %v3365, %v2985
    %v3449 = vmul.f32 %v3448, %v3447
    %v3450 = vadd.f32 %v2985, %v3449
    %s3451 = scalar_lea.vmem [#allocation14], 12
    %3452 = vst.msk [vmem:[%s3451] sm:$0x3] %vm661, %v3450
    %3453 = vmatprep.subr.mxu0 0.0
    %3454 = vmatpush1.msra.mxu0 %v150
    %3455 = vmatprep.subr.mxu0 0.0
    %3456 = vmatpush1.msra.mxu0 %v151
    %3457 = vmatprep.subr.mxu0 0.0
    %3458 = vmatpush1.msra.mxu0 %v152
    %3459 = vmatprep.subr.mxu0 0.0
    %3460 = vmatpush1.msra.mxu0 %v153
    %3461 = vmatprep.subr.mxu0 0.0
    %3462 = vmatpush1.msra.mxu0 0.0
    %3463 = vmatprep.subr.mxu0 0.0
    %3464 = vmatpush1.msra.mxu0 0.0
    %3465 = vmatprep.subr.mxu0 0.0
    %3466 = vmatpush1.msra.mxu0 0.0
    %3467 = vmatprep.subr.mxu0 0.0
    %3468 = vmatpush1.msra.mxu0 0.0
    %3469 = vmatprep.subr.mxu0 0.0
    %3470 = vmatpush1.msra.mxu0 0.0
    %3471 = vmatprep.subr.mxu0 0.0
    %3472 = vmatpush1.msra.mxu0 0.0
    %3473 = vmatprep.subr.mxu0 0.0
    %3474 = vmatpush1.msra.mxu0 0.0
    %3475 = vmatprep.subr.mxu0 0.0
    %3476 = vmatpush1.msra.mxu0 0.0
    %3477 = vmatprep.subr.mxu0 0.0
    %3478 = vmatpush1.msra.mxu0 0.0
    %3479 = vmatprep.subr.mxu0 0.0
    %3480 = vmatpush1.msra.mxu0 0.0
    %3481 = vmatprep.subr.mxu0 0.0
    %3482 = vmatpush1.msra.mxu0 0.0
    %3483 = vmatprep.subr.mxu0 0.0
    %3484 = vmatpush1.msra.mxu0 0.0
    %3485 = vmatprep.subr.mxu0 0.0
    %3486 = vmatpush1.msra.mxu0 0.0
    %3487 = vmatprep.subr.mxu0 0.0
    %3488 = vmatpush1.msra.mxu0 0.0
    %3489 = vmatprep.subr.mxu0 0.0
    %3490 = vmatpush1.msra.mxu0 0.0
    %3491 = vmatprep.subr.mxu0 0.0
    %3492 = vmatpush1.msra.mxu0 0.0
    %3493 = vmatprep.subr.mxu0 0.0
    %3494 = vmatpush1.msra.mxu0 0.0
    %3495 = vmatprep.subr.mxu0 0.0
    %3496 = vmatpush1.msra.mxu0 0.0
    %3497 = vmatprep.subr.mxu0 0.0
    %3498 = vmatpush1.msra.mxu0 0.0
    %3499 = vmatprep.subr.mxu0 0.0
    %3500 = vmatpush1.msra.mxu0 0.0
    %3501 = vmatprep.subr.mxu0 0.0
    %3502 = vmatpush1.msra.mxu0 0.0
    %3503 = vmatprep.subr.mxu0 0.0
    %3504 = vmatpush1.msra.mxu0 0.0
    %3505 = vmatprep.subr.mxu0 0.0
    %3506 = vmatpush1.msra.mxu0 0.0
    %3507 = vmatprep.subr.mxu0 0.0
    %3508 = vmatpush1.msra.mxu0 0.0
    %3509 = vmatprep.subr.mxu0 0.0
    %3510 = vmatpush1.msra.mxu0 0.0
    %3511 = vmatprep.subr.mxu0 0.0
    %3512 = vmatpush1.msra.mxu0 0.0
    %3513 = vmatprep.subr.mxu0 0.0
    %3514 = vmatpush1.msra.mxu0 0.0
    %3515 = vmatprep.subr.mxu0 0.0
    %3516 = vmatpush1.msra.mxu0 0.0
    %3517 = vmatprep.mubr.f32.mxu0 0.0
    %3518 = vmatmul.mubr.f32.gmra.mrb[0].mxu0 %v3296
    %v3519 = vpop.f32.mrb[0].mxu0
    %v3520 = vadd.f32 0.0, %v3519
    %v3521 = vpop.f32.mrb[0].mxu0
    %3522 = vdwg.mxu0
    %v3524 = vsel %vm176, %v3294, 0
    %3526 = vmatprep.subr.mxu0 0.0
    %3527 = vmatpush1.msra.mxu0 %v158
    %3528 = vmatprep.subr.mxu0 0.0
    %3529 = vmatpush1.msra.mxu0 %v159
    %3530 = vmatprep.subr.mxu0 0.0
    %3531 = vmatpush1.msra.mxu0 %v160
    %3532 = vmatprep.subr.mxu0 0.0
    %3533 = vmatpush1.msra.mxu0 %v161
    %3534 = vmatprep.subr.mxu0 0.0
    %3535 = vmatpush1.msra.mxu0 0.0
    %3536 = vmatprep.subr.mxu0 0.0
    %3537 = vmatpush1.msra.mxu0 0.0
    %3538 = vmatprep.subr.mxu0 0.0
    %3539 = vmatpush1.msra.mxu0 0.0
    %3540 = vmatprep.subr.mxu0 0.0
    %3541 = vmatpush1.msra.mxu0 0.0
    %3542 = vmatprep.subr.mxu0 0.0
    %3543 = vmatpush1.msra.mxu0 0.0
    %3544 = vmatprep.subr.mxu0 0.0
    %3545 = vmatpush1.msra.mxu0 0.0
    %3546 = vmatprep.subr.mxu0 0.0
    %3547 = vmatpush1.msra.mxu0 0.0
    %3548 = vmatprep.subr.mxu0 0.0
    %3549 = vmatpush1.msra.mxu0 0.0
    %3550 = vmatprep.subr.mxu0 0.0
    %3551 = vmatpush1.msra.mxu0 0.0
    %3552 = vmatprep.subr.mxu0 0.0
    %3553 = vmatpush1.msra.mxu0 0.0
    %3554 = vmatprep.subr.mxu0 0.0
    %3555 = vmatpush1.msra.mxu0 0.0
    %3556 = vmatprep.subr.mxu0 0.0
    %3557 = vmatpush1.msra.mxu0 0.0
    %3558 = vmatprep.subr.mxu0 0.0
    %3559 = vmatpush1.msra.mxu0 0.0
    %3560 = vmatprep.subr.mxu0 0.0
    %3561 = vmatpush1.msra.mxu0 0.0
    %3562 = vmatprep.subr.mxu0 0.0
    %3563 = vmatpush1.msra.mxu0 0.0
    %3564 = vmatprep.subr.mxu0 0.0
    %3565 = vmatpush1.msra.mxu0 0.0
    %3566 = vmatprep.subr.mxu0 0.0
    %3567 = vmatpush1.msra.mxu0 0.0
    %3568 = vmatprep.subr.mxu0 0.0
    %3569 = vmatpush1.msra.mxu0 0.0
    %3570 = vmatprep.subr.mxu0 0.0
    %3571 = vmatpush1.msra.mxu0 0.0
    %3572 = vmatprep.subr.mxu0 0.0
    %3573 = vmatpush1.msra.mxu0 0.0
    %3574 = vmatprep.subr.mxu0 0.0
    %3575 = vmatpush1.msra.mxu0 0.0
    %3576 = vmatprep.subr.mxu0 0.0
    %3577 = vmatpush1.msra.mxu0 0.0
    %3578 = vmatprep.subr.mxu0 0.0
    %3579 = vmatpush1.msra.mxu0 0.0
    %3580 = vmatprep.subr.mxu0 0.0
    %3581 = vmatpush1.msra.mxu0 0.0
    %3582 = vmatprep.subr.mxu0 0.0
    %3583 = vmatpush1.msra.mxu0 0.0
    %3584 = vmatprep.subr.mxu0 0.0
    %3585 = vmatpush1.msra.mxu0 0.0
    %3586 = vmatprep.subr.mxu0 0.0
    %3587 = vmatpush1.msra.mxu0 0.0
    %3588 = vmatprep.subr.mxu0 0.0
    %3589 = vmatpush1.msra.mxu0 0.0
    %3590 = vmatprep.mubr.f32.mxu0 0.0
    %3591 = vmatmul.mubr.f32.gmra.mrb[0].mxu0 %v3524
    %v3592 = vpop.f32.mrb[0].mxu0
    %v3593 = vadd.f32 0.0, %v3592
    %v3594 = vpop.f32.mrb[0].mxu0
    %3595 = vdwg.mxu0
    %v3597 = vsel %vm323, %v3450, 0
    %3599 = vmatprep.subr.mxu0 0.0
    %3600 = vmatpush1.msra.mxu0 %v170
    %3601 = vmatprep.subr.mxu0 0.0
    %3602 = vmatpush1.msra.mxu0 %v171
    %3603 = vmatprep.subr.mxu0 0.0
    %3604 = vmatpush1.msra.mxu0 0.0
    %3605 = vmatprep.subr.mxu0 0.0
    %3606 = vmatpush1.msra.mxu0 0.0
    %3607 = vmatprep.subr.mxu0 0.0
    %3608 = vmatpush1.msra.mxu0 0.0
    %3609 = vmatprep.subr.mxu0 0.0
    %3610 = vmatpush1.msra.mxu0 0.0
    %3611 = vmatprep.subr.mxu0 0.0
    %3612 = vmatpush1.msra.mxu0 0.0
    %3613 = vmatprep.subr.mxu0 0.0
    %3614 = vmatpush1.msra.mxu0 0.0
    %3615 = vmatprep.subr.mxu0 0.0
    %3616 = vmatpush1.msra.mxu0 0.0
    %3617 = vmatprep.subr.mxu0 0.0
    %3618 = vmatpush1.msra.mxu0 0.0
    %3619 = vmatprep.subr.mxu0 0.0
    %3620 = vmatpush1.msra.mxu0 0.0
    %3621 = vmatprep.subr.mxu0 0.0
    %3622 = vmatpush1.msra.mxu0 0.0
    %3623 = vmatprep.subr.mxu0 0.0
    %3624 = vmatpush1.msra.mxu0 0.0
    %3625 = vmatprep.subr.mxu0 0.0
    %3626 = vmatpush1.msra.mxu0 0.0
    %3627 = vmatprep.subr.mxu0 0.0
    %3628 = vmatpush1.msra.mxu0 0.0
    %3629 = vmatprep.subr.mxu0 0.0
    %3630 = vmatpush1.msra.mxu0 0.0
    %3631 = vmatprep.subr.mxu0 0.0
    %3632 = vmatpush1.msra.mxu0 0.0
    %3633 = vmatprep.subr.mxu0 0.0
    %3634 = vmatpush1.msra.mxu0 0.0
    %3635 = vmatprep.subr.mxu0 0.0
    %3636 = vmatpush1.msra.mxu0 0.0
    %3637 = vmatprep.subr.mxu0 0.0
    %3638 = vmatpush1.msra.mxu0 0.0
    %3639 = vmatprep.subr.mxu0 0.0
    %3640 = vmatpush1.msra.mxu0 0.0
    %3641 = vmatprep.subr.mxu0 0.0
    %3642 = vmatpush1.msra.mxu0 0.0
    %3643 = vmatprep.subr.mxu0 0.0
    %3644 = vmatpush1.msra.mxu0 0.0
    %3645 = vmatprep.subr.mxu0 0.0
    %3646 = vmatpush1.msra.mxu0 0.0
    %3647 = vmatprep.subr.mxu0 0.0
    %3648 = vmatpush1.msra.mxu0 0.0
    %3649 = vmatprep.subr.mxu0 0.0
    %3650 = vmatpush1.msra.mxu0 0.0
    %3651 = vmatprep.subr.mxu0 0.0
    %3652 = vmatpush1.msra.mxu0 0.0
    %3653 = vmatprep.subr.mxu0 0.0
    %3654 = vmatpush1.msra.mxu0 0.0
    %3655 = vmatprep.subr.mxu0 0.0
    %3656 = vmatpush1.msra.mxu0 0.0
    %3657 = vmatprep.subr.mxu0 0.0
    %3658 = vmatpush1.msra.mxu0 0.0
    %3659 = vmatprep.subr.mxu0 0.0
    %3660 = vmatpush1.msra.mxu0 0.0
    %3661 = vmatprep.subr.mxu0 0.0
    %3662 = vmatpush1.msra.mxu0 0.0
    %3663 = vmatprep.mubr.f32.mxu0 0.0
    %3664 = vmatmul.mubr.f32.gmra.mrb[0].mxu0 %v3597
    %v3665 = vpop.f32.mrb[0].mxu0
    %v3666 = vadd.f32 0.0, %v3665
    %v3667 = vpop.f32.mrb[0].mxu0
    %3668 = vdwg.mxu0
    %s3669 = scalar_lea.vmem [#allocation2], 14
    %v3670 = vld [vmem:[%s3669] sm:$0x3]
    %v3671 = vadd.f32 %v3670, %v3520
    %v3673 = vsel %vm176, %v3671, 0
    %3675 = vmatprep.subr.mxu0 0.0
    %3676 = vmatpush1.msra.mxu0 %v154
    %3677 = vmatprep.subr.mxu0 0.0
    %3678 = vmatpush1.msra.mxu0 %v155
    %3679 = vmatprep.subr.mxu0 0.0
    %3680 = vmatpush1.msra.mxu0 %v156
    %3681 = vmatprep.subr.mxu0 0.0
    %3682 = vmatpush1.msra.mxu0 %v157
    %3683 = vmatprep.subr.mxu0 0.0
    %3684 = vmatpush1.msra.mxu0 0.0
    %3685 = vmatprep.subr.mxu0 0.0
    %3686 = vmatpush1.msra.mxu0 0.0
    %3687 = vmatprep.subr.mxu0 0.0
    %3688 = vmatpush1.msra.mxu0 0.0
    %3689 = vmatprep.subr.mxu0 0.0
    %3690 = vmatpush1.msra.mxu0 0.0
    %3691 = vmatprep.subr.mxu0 0.0
    %3692 = vmatpush1.msra.mxu0 0.0
    %3693 = vmatprep.subr.mxu0 0.0
    %3694 = vmatpush1.msra.mxu0 0.0
    %3695 = vmatprep.subr.mxu0 0.0
    %3696 = vmatpush1.msra.mxu0 0.0
    %3697 = vmatprep.subr.mxu0 0.0
    %3698 = vmatpush1.msra.mxu0 0.0
    %3699 = vmatprep.subr.mxu0 0.0
    %3700 = vmatpush1.msra.mxu0 0.0
    %3701 = vmatprep.subr.mxu0 0.0
    %3702 = vmatpush1.msra.mxu0 0.0
    %3703 = vmatprep.subr.mxu0 0.0
    %3704 = vmatpush1.msra.mxu0 0.0
    %3705 = vmatprep.subr.mxu0 0.0
    %3706 = vmatpush1.msra.mxu0 0.0
    %3707 = vmatprep.subr.mxu0 0.0
    %3708 = vmatpush1.msra.mxu0 0.0
    %3709 = vmatprep.subr.mxu0 0.0
    %3710 = vmatpush1.msra.mxu0 0.0
    %3711 = vmatprep.subr.mxu0 0.0
    %3712 = vmatpush1.msra.mxu0 0.0
    %3713 = vmatprep.subr.mxu0 0.0
    %3714 = vmatpush1.msra.mxu0 0.0
    %3715 = vmatprep.subr.mxu0 0.0
    %3716 = vmatpush1.msra.mxu0 0.0
    %3717 = vmatprep.subr.mxu0 0.0
    %3718 = vmatpush1.msra.mxu0 0.0
    %3719 = vmatprep.subr.mxu0 0.0
    %3720 = vmatpush1.msra.mxu0 0.0
    %3721 = vmatprep.subr.mxu0 0.0
    %3722 = vmatpush1.msra.mxu0 0.0
    %3723 = vmatprep.subr.mxu0 0.0
    %3724 = vmatpush1.msra.mxu0 0.0
    %3725 = vmatprep.subr.mxu0 0.0
    %3726 = vmatpush1.msra.mxu0 0.0
    %3727 = vmatprep.subr.mxu0 0.0
    %3728 = vmatpush1.msra.mxu0 0.0
    %3729 = vmatprep.subr.mxu0 0.0
    %3730 = vmatpush1.msra.mxu0 0.0
    %3731 = vmatprep.subr.mxu0 0.0
    %3732 = vmatpush1.msra.mxu0 0.0
    %3733 = vmatprep.subr.mxu0 0.0
    %3734 = vmatpush1.msra.mxu0 0.0
    %3735 = vmatprep.subr.mxu0 0.0
    %3736 = vmatpush1.msra.mxu0 0.0
    %3737 = vmatprep.subr.mxu0 0.0
    %3738 = vmatpush1.msra.mxu0 0.0
    %3739 = vmatprep.mubr.f32.mxu0 0.0
    %3740 = vmatmul.mubr.f32.gmra.mrb[0].mxu0 %v3673
    %v3741 = vpop.f32.mrb[0].mxu0
    %v3742 = vadd.f32 %v3593, %v3741
    %v3743 = vpop.f32.mrb[0].mxu0
    %3744 = vdwg.mxu0
    %v3745 = vadd.f32 %v3742, %v476
    %v3746 = vxor.u32 %v3745, 2147483648
    %v3747 = vmul.f32 %v3746, 1.442695
    %v3748 = vpow.pop %v3747
    %v3749 = vadd.f32 %v3748, 1.0
    %v3750 = vrcp.pop %v3749
    %v3751 = vmul.f32 1.0, %v3750
    %v3752 = vsub.f32 %v3671, %v3294
    %v3753 = vmul.f32 %v3752, %v3751
    %v3754 = vadd.f32 %v3294, %v3753
    %vm3755 = vcmp.gt.f32.partialorder %v3754, 0.5
    %v3756 = vsel %vm3755, 1, 0
    %v3757 = vcvt.s32.f32 %v3756
    %v3758 = vsub.f32 1.0, %v3757
    %v3759 = vmul.f32 %v3758, %v3754
    %v3761 = vsel %vm176, %v3757, 0
    %3763 = vmatprep.subr.mxu0 0.0
    %3764 = vmatpush1.msra.mxu0 %v163
    %3765 = vmatprep.subr.mxu0 0.0
    %3766 = vmatpush1.msra.mxu0 %v164
    %3767 = vmatprep.subr.mxu0 0.0
    %3768 = vmatpush1.msra.mxu0 %v165
    %3769 = vmatprep.subr.mxu0 0.0
    %3770 = vmatpush1.msra.mxu0 %v166
    %3771 = vmatprep.subr.mxu0 0.0
    %3772 = vmatpush1.msra.mxu0 0.0
    %3773 = vmatprep.subr.mxu0 0.0
    %3774 = vmatpush1.msra.mxu0 0.0
    %3775 = vmatprep.subr.mxu0 0.0
    %3776 = vmatpush1.msra.mxu0 0.0
    %3777 = vmatprep.subr.mxu0 0.0
    %3778 = vmatpush1.msra.mxu0 0.0
    %3779 = vmatprep.subr.mxu0 0.0
    %3780 = vmatpush1.msra.mxu0 0.0
    %3781 = vmatprep.subr.mxu0 0.0
    %3782 = vmatpush1.msra.mxu0 0.0
    %3783 = vmatprep.subr.mxu0 0.0
    %3784 = vmatpush1.msra.mxu0 0.0
    %3785 = vmatprep.subr.mxu0 0.0
    %3786 = vmatpush1.msra.mxu0 0.0
    %3787 = vmatprep.subr.mxu0 0.0
    %3788 = vmatpush1.msra.mxu0 0.0
    %3789 = vmatprep.subr.mxu0 0.0
    %3790 = vmatpush1.msra.mxu0 0.0
    %3791 = vmatprep.subr.mxu0 0.0
    %3792 = vmatpush1.msra.mxu0 0.0
    %3793 = vmatprep.subr.mxu0 0.0
    %3794 = vmatpush1.msra.mxu0 0.0
    %3795 = vmatprep.subr.mxu0 0.0
    %3796 = vmatpush1.msra.mxu0 0.0
    %3797 = vmatprep.subr.mxu0 0.0
    %3798 = vmatpush1.msra.mxu0 0.0
    %3799 = vmatprep.subr.mxu0 0.0
    %3800 = vmatpush1.msra.mxu0 0.0
    %3801 = vmatprep.subr.mxu0 0.0
    %3802 = vmatpush1.msra.mxu0 0.0
    %3803 = vmatprep.subr.mxu0 0.0
    %3804 = vmatpush1.msra.mxu0 0.0
    %3805 = vmatprep.subr.mxu0 0.0
    %3806 = vmatpush1.msra.mxu0 0.0
    %3807 = vmatprep.subr.mxu0 0.0
    %3808 = vmatpush1.msra.mxu0 0.0
    %3809 = vmatprep.subr.mxu0 0.0
    %3810 = vmatpush1.msra.mxu0 0.0
    %3811 = vmatprep.subr.mxu0 0.0
    %3812 = vmatpush1.msra.mxu0 0.0
    %3813 = vmatprep.subr.mxu0 0.0
    %3814 = vmatpush1.msra.mxu0 0.0
    %3815 = vmatprep.subr.mxu0 0.0
    %3816 = vmatpush1.msra.mxu0 0.0
    %3817 = vmatprep.subr.mxu0 0.0
    %3818 = vmatpush1.msra.mxu0 0.0
    %3819 = vmatprep.subr.mxu0 0.0
    %3820 = vmatpush1.msra.mxu0 0.0
    %3821 = vmatprep.subr.mxu0 0.0
    %3822 = vmatpush1.msra.mxu0 0.0
    %3823 = vmatprep.subr.mxu0 0.0
    %3824 = vmatpush1.msra.mxu0 0.0
    %3825 = vmatprep.subr.mxu0 0.0
    %3826 = vmatpush1.msra.mxu0 0.0
    %3827 = vmatprep.mubr.f32.mxu0 0.0
    %3828 = vmatmul.mubr.f32.gmra.mrb[0].mxu0 %v3761
    %v3829 = vpop.f32.mrb[0].mxu0
    %v3830 = vadd.f32 %v497, %v3829
    %v3831 = vpop.f32.mrb[0].mxu0
    %3832 = vdwg.mxu0
    %v3834 = vsel %vm323, %v3830, 0
    %3836 = vmatprep.subr.mxu0 0.0
    %3837 = vmatpush1.msra.mxu0 %v168
    %3838 = vmatprep.subr.mxu0 0.0
    %3839 = vmatpush1.msra.mxu0 %v169
    %3840 = vmatprep.subr.mxu0 0.0
    %3841 = vmatpush1.msra.mxu0 0.0
    %3842 = vmatprep.subr.mxu0 0.0
    %3843 = vmatpush1.msra.mxu0 0.0
    %3844 = vmatprep.subr.mxu0 0.0
    %3845 = vmatpush1.msra.mxu0 0.0
    %3846 = vmatprep.subr.mxu0 0.0
    %3847 = vmatpush1.msra.mxu0 0.0
    %3848 = vmatprep.subr.mxu0 0.0
    %3849 = vmatpush1.msra.mxu0 0.0
    %3850 = vmatprep.subr.mxu0 0.0
    %3851 = vmatpush1.msra.mxu0 0.0
    %3852 = vmatprep.subr.mxu0 0.0
    %3853 = vmatpush1.msra.mxu0 0.0
    %3854 = vmatprep.subr.mxu0 0.0
    %3855 = vmatpush1.msra.mxu0 0.0
    %3856 = vmatprep.subr.mxu0 0.0
    %3857 = vmatpush1.msra.mxu0 0.0
    %3858 = vmatprep.subr.mxu0 0.0
    %3859 = vmatpush1.msra.mxu0 0.0
    %3860 = vmatprep.subr.mxu0 0.0
    %3861 = vmatpush1.msra.mxu0 0.0
    %3862 = vmatprep.subr.mxu0 0.0
    %3863 = vmatpush1.msra.mxu0 0.0
    %3864 = vmatprep.subr.mxu0 0.0
    %3865 = vmatpush1.msra.mxu0 0.0
    %3866 = vmatprep.subr.mxu0 0.0
    %3867 = vmatpush1.msra.mxu0 0.0
    %3868 = vmatprep.subr.mxu0 0.0
    %3869 = vmatpush1.msra.mxu0 0.0
    %3870 = vmatprep.subr.mxu0 0.0
    %3871 = vmatpush1.msra.mxu0 0.0
    %3872 = vmatprep.subr.mxu0 0.0
    %3873 = vmatpush1.msra.mxu0 0.0
    %3874 = vmatprep.subr.mxu0 0.0
    %3875 = vmatpush1.msra.mxu0 0.0
    %3876 = vmatprep.subr.mxu0 0.0
    %3877 = vmatpush1.msra.mxu0 0.0
    %3878 = vmatprep.subr.mxu0 0.0
    %3879 = vmatpush1.msra.mxu0 0.0
    %3880 = vmatprep.subr.mxu0 0.0
    %3881 = vmatpush1.msra.mxu0 0.0
    %3882 = vmatprep.subr.mxu0 0.0
    %3883 = vmatpush1.msra.mxu0 0.0
    %3884 = vmatprep.subr.mxu0 0.0
    %3885 = vmatpush1.msra.mxu0 0.0
    %3886 = vmatprep.subr.mxu0 0.0
    %3887 = vmatpush1.msra.mxu0 0.0
    %3888 = vmatprep.subr.mxu0 0.0
    %3889 = vmatpush1.msra.mxu0 0.0
    %3890 = vmatprep.subr.mxu0 0.0
    %3891 = vmatpush1.msra.mxu0 0.0
    %3892 = vmatprep.subr.mxu0 0.0
    %3893 = vmatpush1.msra.mxu0 0.0
    %3894 = vmatprep.subr.mxu0 0.0
    %3895 = vmatpush1.msra.mxu0 0.0
    %3896 = vmatprep.subr.mxu0 0.0
    %3897 = vmatpush1.msra.mxu0 0.0
    %3898 = vmatprep.subr.mxu0 0.0
    %3899 = vmatpush1.msra.mxu0 0.0
    %3900 = vmatprep.mubr.f32.mxu0 0.0
    %3901 = vmatmul.mubr.f32.gmra.mrb[0].mxu0 %v3834
    %v3902 = vpop.f32.mrb[0].mxu0
    %v3903 = vadd.f32 %v3666, %v3902
    %v3904 = vpop.f32.mrb[0].mxu0
    %3905 = vdwg.mxu0
    %v3906 = vadd.f32 %v3903, %v649
    %v3907 = vxor.u32 %v3906, 2147483648
    %v3908 = vmul.f32 %v3907, 1.442695
    %v3909 = vpow.pop %v3908
    %v3910 = vadd.f32 %v3909, 1.0
    %v3911 = vrcp.pop %v3910
    %v3912 = vmul.f32 1.0, %v3911
    %v3913 = vsub.f32 %v3830, %v3450
    %v3914 = vmul.f32 %v3913, %v3912
    %v3915 = vadd.f32 %v3450, %v3914
    %s3916 = scalar_lea.vmem [#allocation14], 14
    %3917 = vst.msk [vmem:[%s3916] sm:$0x3] %vm661, %v3915
    %vm3918 = vcmask 254976
    %3919 = vst.msk [vmem:[#allocation15] sm:$0x3] %vm3918, %v3759
    %3920 = vst.msk [vmem:[#allocation17] sm:$0x3] %vm3918, %v3757
    %3921 = vst.msk [vmem:[#allocation18] sm:$0x3] %vm661, %v3915
    %v3922 = vld [vmem:[#allocation14] sm:$0x3]
    %v3923 = vld [vmem:[#allocation14 + $0x2] sm:$0x3]
    %v3924 = vld [vmem:[#allocation14 + $0x4] sm:$0x3]
    %v3925 = vld [vmem:[#allocation14 + $0x6] sm:$0x3]
    %v3926 = vld [vmem:[#allocation14 + $0x8] sm:$0x3]
    %v3927 = vld [vmem:[#allocation14 + $0xa] sm:$0x3]
    %v3928 = vld [vmem:[#allocation14 + $0xc] sm:$0x3]
    %v3929 = vld [vmem:[#allocation14 + $0xe] sm:$0x3]
    %v3930 = vsel %vm661, %v3922, -inf
    %3931 = vmax.xlane.f32.xlu0 %v3930
    %v3932 = vpop.xlane.xlu0 %3931
    %v3933 = vsel %vm661, %v3923, -inf
    %3934 = vmax.xlane.f32.xlu0 %v3933
    %v3935 = vpop.xlane.xlu0 %3934
    %v3936 = vsel %vm661, %v3924, -inf
    %3937 = vmax.xlane.f32.xlu0 %v3936
    %v3938 = vpop.xlane.xlu0 %3937
    %v3939 = vsel %vm661, %v3925, -inf
    %3940 = vmax.xlane.f32.xlu0 %v3939
    %v3941 = vpop.xlane.xlu0 %3940
    %v3942 = vsel %vm661, %v3926, -inf
    %3943 = vmax.xlane.f32.xlu0 %v3942
    %v3944 = vpop.xlane.xlu0 %3943
    %v3945 = vsel %vm661, %v3927, -inf
    %3946 = vmax.xlane.f32.xlu0 %v3945
    %v3947 = vpop.xlane.xlu0 %3946
    %v3948 = vsel %vm661, %v3928, -inf
    %3949 = vmax.xlane.f32.xlu0 %v3948
    %v3950 = vpop.xlane.xlu0 %3949
    %v3951 = vsel %vm661, %v3929, -inf
    %3952 = vmax.xlane.f32.xlu0 %v3951
    %v3953 = vpop.xlane.xlu0 %3952
    %v3954 = vsub.f32 %v3922, %v3932
    %v3955 = vsub.f32 %v3923, %v3935
    %v3956 = vsub.f32 %v3924, %v3938
    %v3957 = vsub.f32 %v3925, %v3941
    %v3958 = vsub.f32 %v3926, %v3944
    %v3959 = vsub.f32 %v3927, %v3947
    %v3960 = vsub.f32 %v3928, %v3950
    %v3961 = vsub.f32 %v3929, %v3953
    %v3962 = vmul.f32 %v3954, 1.442695
    %v3963 = vpow.pop %v3962
    %v3964 = vmul.f32 %v3955, 1.442695
    %v3965 = vpow.pop %v3964
    %v3966 = vmul.f32 %v3956, 1.442695
    %v3967 = vpow.pop %v3966
    %v3968 = vmul.f32 %v3957, 1.442695
    %v3969 = vpow.pop %v3968
    %v3970 = vmul.f32 %v3958, 1.442695
    %v3971 = vpow.pop %v3970
    %v3972 = vmul.f32 %v3959, 1.442695
    %v3973 = vpow.pop %v3972
    %v3974 = vmul.f32 %v3960, 1.442695
    %v3975 = vpow.pop %v3974
    %v3976 = vmul.f32 %v3961, 1.442695
    %v3977 = vpow.pop %v3976
    %v3978 = vsel %vm661, %v3963, 0.0
    %3979 = vadd.xlane.f32.xlu0 %v3978
    %v3980 = vpop.xlane.xlu0 %3979
    %v3981 = vsel %vm661, %v3965, 0.0
    %3982 = vadd.xlane.f32.xlu0 %v3981
    %v3983 = vpop.xlane.xlu0 %3982
    %v3984 = vsel %vm661, %v3967, 0.0
    %3985 = vadd.xlane.f32.xlu0 %v3984
    %v3986 = vpop.xlane.xlu0 %3985
    %v3987 = vsel %vm661, %v3969, 0.0
    %3988 = vadd.xlane.f32.xlu0 %v3987
    %v3989 = vpop.xlane.xlu0 %3988
    %v3990 = vsel %vm661, %v3971, 0.0
    %3991 = vadd.xlane.f32.xlu0 %v3990
    %v3992 = vpop.xlane.xlu0 %3991
    %v3993 = vsel %vm661, %v3973, 0.0
    %3994 = vadd.xlane.f32.xlu0 %v3993
    %v3995 = vpop.xlane.xlu0 %3994
    %v3996 = vsel %vm661, %v3975, 0.0
    %3997 = vadd.xlane.f32.xlu0 %v3996
    %v3998 = vpop.xlane.xlu0 %3997
    %v3999 = vsel %vm661, %v3977, 0.0
    %4000 = vadd.xlane.f32.xlu0 %v3999
    %v4001 = vpop.xlane.xlu0 %4000
    %v4002 = vlog2.pop %v3980
    %v4003 = vmul.f32 %v4002, 0.6931472
    %v4004 = vlog2.pop %v3983
    %v4005 = vmul.f32 %v4004, 0.6931472
    %v4006 = vlog2.pop %v3986
    %v4007 = vmul.f32 %v4006, 0.6931472
    %v4008 = vlog2.pop %v3989
    %v4009 = vmul.f32 %v4008, 0.6931472
    %v4010 = vlog2.pop %v3992
    %v4011 = vmul.f32 %v4010, 0.6931472
    %v4012 = vlog2.pop %v3995
    %v4013 = vmul.f32 %v4012, 0.6931472
    %v4014 = vlog2.pop %v3998
    %v4015 = vmul.f32 %v4014, 0.6931472
    %v4016 = vlog2.pop %v4001
    %v4017 = vmul.f32 %v4016, 0.6931472
    %v4018 = vsub.f32 %v3954, %v4003
    %v4019 = vsub.f32 %v3955, %v4005
    %v4020 = vsub.f32 %v3956, %v4007
    %v4021 = vsub.f32 %v3957, %v4009
    %v4022 = vsub.f32 %v3958, %v4011
    %v4023 = vsub.f32 %v3959, %v4013
    %v4024 = vsub.f32 %v3960, %v4015
    %v4025 = vsub.f32 %v3961, %v4017
    %4026 = vst.msk [vmem:[#allocation14] sm:$0x3] %vm661, %v4018
    %4027 = vst.msk [vmem:[#allocation14 + $0x2] sm:$0x3] %vm661, %v4019
    %4028 = vst.msk [vmem:[#allocation14 + $0x4] sm:$0x3] %vm661, %v4020
    %4029 = vst.msk [vmem:[#allocation14 + $0x6] sm:$0x3] %vm661, %v4021
    %4030 = vst.msk [vmem:[#allocation14 + $0x8] sm:$0x3] %vm661, %v4022
    %4031 = vst.msk [vmem:[#allocation14 + $0xa] sm:$0x3] %vm661, %v4023
    %4032 = vst.msk [vmem:[#allocation14 + $0xc] sm:$0x3] %vm661, %v4024
    %4033 = vst.msk [vmem:[#allocation14 + $0xe] sm:$0x3] %vm661, %v4025
    // Predicated region
    $region86: #{tpu_custom_call.1} parent=1 // pred_check
      _
    $region87: #{tpu_custom_call.1} parent=1 // pred_check_branch
      %4035 = sbr.rel (0) target = $region89
    $region88: #{tpu_custom_call.1} parent=1 // pred_region
      %s4037 = ssub.s32 256, 256
      %4038 = vsyncadd [#allocation4], %s4037
      %s4039 = sshll.u32 [#allocation14], 4
      %s4040 = int_to_ptr.vmem [resolvable:$true] %s4039
      %4045 = dma.vmem_to_hbm [thread:$0]  %s4040, 256, %s13, [#allocation4], 32, 32, 2
    $region89: #{tpu_custom_call.1} parent=1 // pred_fallthru
      _
    // Predicated region
    $region90: #{tpu_custom_call.1} parent=1 // pred_check
      _
    $region91: #{tpu_custom_call.1} parent=1 // pred_check_branch
      %4047 = sbr.rel (0) target = $region93
    $region92: #{tpu_custom_call.1} parent=1 // pred_region
      %s4049 = ssub.s32 32, 32
      %4050 = vsyncadd [#allocation16], %s4049
      %s4052 = sshll.u32 [#allocation15], 4
      %s4053 = int_to_ptr.vmem [resolvable:$true] %s4052
      %4055 = dma.vmem_to_hbm [thread:$0]  %s4053, 32, %s14, [#allocation16]
    $region93: #{tpu_custom_call.1} parent=1 // pred_fallthru
      _
    // Predicated region
    $region94: #{tpu_custom_call.1} parent=1 // pred_check
      _
    $region95: #{tpu_custom_call.1} parent=1 // pred_check_branch
      %4057 = sbr.rel (0) target = $region97
    $region96: #{tpu_custom_call.1} parent=1 // pred_region
      %s4059 = ssub.s32 32, 32
      %4060 = vsyncadd [#allocation16], %s4059
      %s4062 = sshll.u32 [#allocation17], 4
      %s4063 = int_to_ptr.vmem [resolvable:$true] %s4062
      %4065 = dma.vmem_to_hbm [thread:$0]  %s4063, 32, %s15, [#allocation16]
    $region97: #{tpu_custom_call.1} parent=1 // pred_fallthru
      _
    // Predicated region
    $region98: #{tpu_custom_call.1} parent=1 // pred_check
      _
    $region99: #{tpu_custom_call.1} parent=1 // pred_check_branch
      %4067 = sbr.rel (0) target = $region101
    $region100: #{tpu_custom_call.1} parent=1 // pred_region
      %s4069 = ssub.s32 32, 32
      %4070 = vsyncadd [#allocation19], %s4069
      %s4072 = sshll.u32 [#allocation18], 4
      %s4073 = int_to_ptr.vmem [resolvable:$true] %s4072
      %4075 = dma.vmem_to_hbm [thread:$0]  %s4073, 32, %s16, [#allocation19]
    $region101: #{tpu_custom_call.1} parent=1 // pred_fallthru
      _
    // Predicated region
    $region102: #{tpu_custom_call.1} parent=1 // pred_check
      _
    $region103: #{tpu_custom_call.1} parent=1 // pred_check_branch
      %4077 = sbr.rel (0) target = $region105
    $region104: #{tpu_custom_call.1} parent=1 // pred_region
      %4078 = dma.done [#allocation4], 256
    $region105: #{tpu_custom_call.1} parent=1 // pred_fallthru
      _
    // Predicated region
    $region106: #{tpu_custom_call.1} parent=1 // pred_check
      _
    $region107: #{tpu_custom_call.1} parent=1 // pred_check_branch
      %4080 = sbr.rel (0) target = $region109
    $region108: #{tpu_custom_call.1} parent=1 // pred_region
      %4081 = dma.done [#allocation16], 32
    $region109: #{tpu_custom_call.1} parent=1 // pred_fallthru
      _
    // Predicated region
    $region110: #{tpu_custom_call.1} parent=1 // pred_check
      _
    $region111: #{tpu_custom_call.1} parent=1 // pred_check_branch
      %4083 = sbr.rel (0) target = $region113
    $region112: #{tpu_custom_call.1} parent=1 // pred_region
      %4084 = dma.done [#allocation16], 32
    $region113: #{tpu_custom_call.1} parent=1 // pred_fallthru
      _
    // Predicated region
    $region114: #{tpu_custom_call.1} parent=1 // pred_check
      _
    $region115: #{tpu_custom_call.1} parent=1 // pred_check_branch
      %4086 = sbr.rel (0) target = $region117
    $region116: #{tpu_custom_call.1} parent=1 // pred_region
      %4087 = dma.done [#allocation19], 32
    $region117: #{tpu_custom_call.1} parent=1 // pred_fallthru
      _
    %4088 = vsyncpa [#allocation3], 1
    %4089 = vsyncpa [#allocation6], 1
    %4090 = vsyncpa [#allocation9], 1
    %4091 = vsyncpa [#allocation12], 1
    %4092 = vsyncpa [#allocation4], 1
    %4093 = vsyncpa [#allocation16], 1
    %4094 = vsyncpa [#allocation19], 1

</llo_original>
